<compile_context>
chip_gen: v5e
topology: v5e:2x2
jax: 0.10.0
libtpu: 0.0.40
codegen_flags: <defaults>
</compile_context>

<pallas_src>
import functools
import math

import jax
import jax.numpy as jnp
import numpy as np
from jax import lax
from jax.experimental import pallas as pl
from jax.experimental.pallas import tpu as pltpu


# ---------------------------------------------------------------------------
# Fused kernel: expand (1x1) -> depthwise 3x3 -> project (1x1) [+ residual]
# ---------------------------------------------------------------------------

def _fused_ir_kernel(*refs, H, W, Wo, TRo, RSUB, stride, wp_al, cchunk,
                     nchunks, has_expand, use_res, oup, oup_pad,
                     compute_dtype, hid_dtype):
    it = iter(refs)
    x_ref = next(it)
    if has_expand:
        w_exp_ref = next(it)
        b_exp_ref = next(it)
    w_dw_ref = next(it)
    b_dw_ref = next(it)
    w_proj_ref = next(it)
    b_proj_ref = next(it)
    o_ref = next(it)
    hid_ref = next(it)
    if stride == 2:
        ev_ref = next(it)
        od_ref = next(it)
    yacc_ref = next(it)

    j = pl.program_id(1)
    r_in = (TRo - 1) * stride + 3                 # padded input rows this tile
    iy0 = j * (TRo * stride)                      # first padded input row
    if (TRo * stride) % 8 == 0:
        iy0 = pl.multiple_of(iy0, 8)

    # Rows of the resident, zero-padded NHWC input needed by this row tile.
    xb = x_ref[0, pl.ds(iy0, r_in), :, :]         # (r_in, wp_al, Cin)

    if has_expand:
        lhs = xb.reshape(r_in * wp_al, xb.shape[-1])
        if compute_dtype is not None:
            lhs = lhs.astype(compute_dtype)
        # Small 2-D spatial-validity mask, broadcast over lanes: the depthwise
        # conv zero-pads the *hidden* tensor, so zero every position that
        # corresponds to spatial padding (expand(0) != 0 in general).
        row = lax.broadcasted_iota(jnp.int32, (r_in, wp_al, 1), 0) + iy0
        col = lax.broadcasted_iota(jnp.int32, (r_in, wp_al, 1), 1)
        valid = (row >= 1) & (row <= H) & (col >= 1) & (col <= W)

    wph = wp_al // 2

    for c in range(nchunks):
        c0 = c * cchunk
        c1 = c0 + cchunk

        # ---- expansion: 1x1 conv (BN scale folded into weights) + ReLU6 ----
        if has_expand:
            h = jnp.dot(lhs, w_exp_ref[:, c0:c1],
                        preferred_element_type=jnp.float32)
            h = jnp.clip(h + b_exp_ref[:, c0:c1], 0.0, 6.0)
            h = h.reshape(r_in, wp_al, cchunk)
            hid_ref[...] = jnp.where(valid, h, 0.0).astype(hid_dtype)
        else:
            # No expansion layer: the hidden tensor is the zero-padded input.
            hid_ref[...] = xb.astype(hid_dtype)

        # stride=2: de-interleave W once (2 strided copies) so the 9 taps read
        # contiguous columns instead of 9 sublane-strided gathers.
        if stride == 2:
            ev_ref[...] = hid_ref[:, pl.ds(0, wph, 2), :]
            od_ref[...] = hid_ref[:, pl.ds(1, wph, 2), :]

        wdw_c = w_dw_ref[:, c0:c1].astype(jnp.float32)   # (9, cchunk), BN-folded
        bdw_c = b_dw_ref[:, c0:c1]
        wpr_c = w_proj_ref[c0:c1, :]

        # ---- depthwise 3x3 + ReLU6, blocked in <=8-row subtiles so the tap
        # accumulator stays in registers; projection K-partial per subtile ----
        for r0 in range(0, TRo, RSUB):
            acc = jnp.zeros((RSUB, Wo, cchunk), jnp.float32)
            for ky in range(3):
                for kx in range(3):
                    if stride == 1:
                        win = hid_ref[pl.ds(r0 + ky, RSUB), pl.ds(kx, Wo), :]
                    else:
                        src = od_ref if kx == 1 else ev_ref
                        cs = 1 if kx == 2 else 0
                        win = src[pl.ds(2 * r0 + ky, RSUB, 2),
                                  pl.ds(cs, Wo), :]
                    k = 3 * ky + kx
                    acc = acc + win * wdw_c[k:k + 1, :]
            acc = jnp.clip(acc + bdw_c, 0.0, 6.0)

            # Projection 1x1 (BN scale folded), accumulated over hidden-channel
            # chunks into the lane-dense f32 scratch.
            plhs = acc.reshape(RSUB * Wo, cchunk)
            if compute_dtype is not None:
                plhs = plhs.astype(compute_dtype)
            part = jnp.dot(plhs, wpr_c, preferred_element_type=jnp.float32)
            rows = pl.ds(r0 * Wo, RSUB * Wo)
            if c == 0:
                yacc_ref[rows, :] = part
            else:
                yacc_ref[rows, :] = yacc_ref[rows, :] + part

    # ---- epilogue: fused residual + projection bias, lane-dense store -------
    if use_res:
        # stride == 1 and inp == oup: residual rows come from the already
        # loaded xb (interior region), added before the bias so the final HBM
        # store stays a single dense write.
        res = xb[1:1 + TRo, 1:1 + Wo, :].astype(jnp.float32)
        res = res.reshape(TRo * Wo, res.shape[-1])
        yacc_ref[:, 0:oup] = yacc_ref[:, 0:oup] + res
    y = yacc_ref[...] + b_proj_ref[...]
    o_ref[...] = y.reshape(1, TRo, Wo, oup_pad).astype(o_ref.dtype)


# ---------------------------------------------------------------------------
# Wrapper: parameter folding / lane padding, tiling, pallas_call
# ---------------------------------------------------------------------------

def _round_up(x, m):
    return (x + m - 1) // m * m


def _pad_last(a, n):
    d = n - a.shape[-1]
    if d == 0:
        return a
    return jnp.pad(a, [(0, 0)] * (a.ndim - 1) + [(0, d)])


def _pad_first(a, n):
    d = n - a.shape[0]
    if d == 0:
        return a
    return jnp.pad(a, [(0, d)] + [(0, 0)] * (a.ndim - 1))


def _row_subtile(tro):
    return max(d for d in range(1, min(tro, 8) + 1) if tro % d == 0)


def _choose_chunk(ch):
    """Hidden-channel chunk (multiple of 128 lanes, <= 512)."""
    if ch <= 512:
        return ch
    for c in (512, 384, 256, 128):
        if ch % c == 0:
            return c
    return math.gcd(ch, 128)


def _vmem_estimate(tro, *, stride, Hp, wp_al, inp, Wo, cchunk, oup_pad,
                   x_bytes, cd_bytes, hid_bytes, w_bytes):
    """Per-grid-step live-VMEM estimate counting all intermediates."""
    r_in = (tro - 1) * stride + 3
    rsub = _row_subtile(tro)
    e = 2 * Hp * wp_al * inp * x_bytes              # resident input (x2 buffers)
    e += 2 * tro * Wo * oup_pad * x_bytes           # output block (x2 buffers)
    e += 2 * w_bytes                                # weight / bias blocks
    e += r_in * wp_al * inp * (4 + cd_bytes)        # xb value + expand lhs
    e += r_in * wp_al * cchunk * (4 + hid_bytes)    # expand result + hid scratch
    if stride == 2:
        e += r_in * wp_al * cchunk * hid_bytes      # even/odd de-interleave
    e += 3 * rsub * Wo * cchunk * 4                 # dw accumulator + windows
    e += rsub * Wo * cchunk * cd_bytes              # projection lhs
    e += 2 * tro * Wo * oup_pad * 4                 # proj accumulator + epilogue
    return e


def _choose_row_tile(Ho, nchunks, est_fn, budget_bytes):
    """Largest divisor of Ho (<=64, bounded unroll) whose live set fits."""
    best = 1
    for d in range(1, min(Ho, 64) + 1):
        if Ho % d:
            continue
        if (d // _row_subtile(d)) * nchunks > 32:    # bound kernel unrolling
            continue
        if est_fn(d) <= budget_bytes:
            best = d
    return best


def inverted_residual(x_nchw, params, *, inp, oup, stride, expand_ratio,
                      compute_dtype=jnp.bfloat16, hidden_dtype=None):
    """Forward pass of the PyTorch InvertedResidual block (eval-mode BN).

    compute_dtype: operand dtype of the two 1x1-conv matmuls (f32 accumulation,
        f32 epilogue).  Default bf16 (MXU-native on v5e/v6e/v7x); pass None for
        an exact f32 path.
    hidden_dtype: dtype of the in-VMEM hidden tensor.  Defaults to
        compute_dtype (or f32 when compute_dtype is None).  On v5e (no bf16
        VPU) pass jnp.float32 explicitly.
    """
    assert stride in (1, 2)
    use_res = (stride == 1) and (inp == oup)
    has_expand = expand_ratio != 1
    hidden = int(round(inp * expand_ratio))

    N, C, H, W = x_nchw.shape
    assert C == inp
    Ho = (H - 1) // stride + 1
    Wo = (W - 1) // stride + 1
    Hp = H + 2
    wp_al = _round_up(W + 2, 8)            # sublane-aligned padded width

    if hidden_dtype is None:
        hidden_dtype = compute_dtype if compute_dtype is not None else jnp.float32
    w_dtype = compute_dtype if compute_dtype is not None else jnp.float32

    # NCHW -> NHWC (channels on the lane axis) + spatial zero pad of the small
    # pre-expansion input (1px top/bottom/left, aligned-to-8 right).
    x = jnp.transpose(x_nchw, (0, 2, 3, 1))
    xp = jnp.pad(x, ((0, 0), (1, 1), (1, wp_al - (W + 1)), (0, 0)))

    # --- fold BN scale into weights, lane-pad, cast matmul weights once ------
    if has_expand:
        ch = _round_up(hidden, 128)        # lane-dense hidden channels (free)
        w_exp = _pad_last(params["w_exp"] * params["s_exp"][None, :], ch)
        w_exp = w_exp.astype(w_dtype)
        b_exp = _pad_last(params["b_exp"], ch).reshape(1, ch)
    else:
        ch = inp                            # hidden tensor is the input itself
    w_dw = _pad_last((params["w_dw"] * params["s_dw"]).reshape(9, hidden), ch)
    w_dw = w_dw.astype(jnp.float32)
    b_dw = _pad_last(params["b_dw"], ch).reshape(1, ch)
    oup_pad = _round_up(oup, 128)          # lane-dense output store
    w_proj = _pad_last(params["w_proj"] * params["s_proj"][None, :], oup_pad)
    w_proj = _pad_first(w_proj, ch).astype(w_dtype)
    b_proj = _pad_last(params["b_proj"], oup_pad).reshape(1, oup_pad)

    # --- tiling / VMEM budget -------------------------------------------------
    cchunk = _choose_chunk(ch)
    nchunks = ch // cchunk
    x_bytes = jnp.dtype(x_nchw.dtype).itemsize
    cd_bytes = jnp.dtype(w_dtype).itemsize
    hid_bytes = jnp.dtype(hidden_dtype).itemsize
    w_bytes = (w_dw.size * 4 + b_dw.size * 4
               + w_proj.size * cd_bytes + b_proj.size * 4)
    if has_expand:
        w_bytes += w_exp.size * cd_bytes + b_exp.size * 4

    est = functools.partial(_vmem_estimate, stride=stride, Hp=Hp, wp_al=wp_al,
                            inp=inp, Wo=Wo, cchunk=cchunk, oup_pad=oup_pad,
                            x_bytes=x_bytes, cd_bytes=cd_bytes,
                            hid_bytes=hid_bytes, w_bytes=w_bytes)
    tro = _choose_row_tile(Ho, nchunks, est, budget_bytes=18 * 1024 * 1024)
    assert Ho % tro == 0
    r_in = (tro - 1) * stride + 3
    rsub = _row_subtile(tro)
    vmem_limit = int(min(60 * 1024 * 1024,
                         max(32 * 1024 * 1024, 1.5 * est(tro))))

    kernel = functools.partial(
        _fused_ir_kernel, H=H, W=W, Wo=Wo, TRo=tro, RSUB=rsub, stride=stride,
        wp_al=wp_al, cchunk=cchunk, nchunks=nchunks, has_expand=has_expand,
        use_res=use_res, oup=oup, oup_pad=oup_pad,
        compute_dtype=compute_dtype, hid_dtype=hidden_dtype)

    def _const(shape):
        nd = len(shape)
        return pl.BlockSpec(shape, lambda n, j, _nd=nd: (0,) * _nd)

    in_specs = [pl.BlockSpec((1, Hp, wp_al, inp), lambda n, j: (n, 0, 0, 0))]
    args = [xp]
    if has_expand:
        in_specs += [_const(w_exp.shape), _const(b_exp.shape)]
        args += [w_exp, b_exp]
    in_specs += [_const(w_dw.shape), _const(b_dw.shape),
                 _const(w_proj.shape), _const(b_proj.shape)]
    args += [w_dw, b_dw, w_proj, b_proj]

    scratch = [pltpu.VMEM((r_in, wp_al, cchunk), hidden_dtype)]
    if stride == 2:
        scratch += [pltpu.VMEM((r_in, wp_al // 2, cchunk), hidden_dtype),
                    pltpu.VMEM((r_in, wp_al // 2, cchunk), hidden_dtype)]
    scratch += [pltpu.VMEM((tro * Wo, oup_pad), jnp.float32)]

    y = pl.pallas_call(
        kernel,
        out_shape=jax.ShapeDtypeStruct((N, Ho, Wo, oup_pad), x_nchw.dtype),
        grid=(N, Ho // tro),
        in_specs=in_specs,
        out_specs=pl.BlockSpec((1, tro, Wo, oup_pad), lambda n, j: (n, j, 0, 0)),
        scratch_shapes=scratch,
        compiler_params=pltpu.CompilerParams(
            dimension_semantics=("parallel", "arbitrary"),
            vmem_limit_bytes=vmem_limit),
    )(*args)

    # Drop output lane padding and go back to NCHW (fused by XLA).
    return jnp.transpose(y[..., :oup], (0, 3, 1, 2))


# ---------------------------------------------------------------------------
# Deterministic synthetic parameters (shapes per the module's __init__)
# ---------------------------------------------------------------------------

def make_params(key, inp, oup, expand_ratio, eps=1e-5):
    hidden = int(round(inp * expand_ratio))
    ks = jax.random.split(key, 6)

    def bn_fold(k, c):
        k1, k2, k3, k4 = jax.random.split(k, 4)
        gamma = jax.random.uniform(k1, (c,), jnp.float32, 0.5, 1.5)
        beta = 0.1 * jax.random.normal(k2, (c,), jnp.float32)
        mean = 0.1 * jax.random.normal(k3, (c,), jnp.float32)
        var = jax.random.uniform(k4, (c,), jnp.float32, 0.5, 1.5)
        scale = gamma / jnp.sqrt(var + eps)
        bias = beta - mean * scale
        return scale, bias

    p = {}
    if expand_ratio != 1:
        # PyTorch conv weight (hidden, inp, 1, 1) -> matmul weight (inp, hidden)
        p["w_exp"] = 0.2 * jax.random.normal(ks[0], (inp, hidden), jnp.float32)
        p["s_exp"], p["b_exp"] = bn_fold(ks[1], hidden)
    # PyTorch depthwise weight (hidden, 1, 3, 3) -> (3, 3, hidden)
    p["w_dw"] = 0.2 * jax.random.normal(ks[2], (3, 3, hidden), jnp.float32)
    p["s_dw"], p["b_dw"] = bn_fold(ks[3], hidden)
    # PyTorch conv weight (oup, hidden, 1, 1) -> (hidden, oup)
    p["w_proj"] = 0.2 * jax.random.normal(ks[4], (hidden, oup), jnp.float32)
    p["s_proj"], p["b_proj"] = bn_fold(ks[5], oup)
    return p


# ---------------------------------------------------------------------------
# Pure-JAX reference (correctness check only)
# ---------------------------------------------------------------------------

def _ref_forward(x_nchw, params, *, inp, oup, stride, expand_ratio):
    hidden = int(round(inp * expand_ratio))
    x = jnp.transpose(x_nchw, (0, 2, 3, 1))
    h = x
    if expand_ratio != 1:
        h = jnp.clip(jnp.einsum("nhwc,cd->nhwd", h, params["w_exp"])
                     * params["s_exp"] + params["b_exp"], 0.0, 6.0)
    dw = lax.conv_general_dilated(
        h, params["w_dw"].reshape(3, 3, 1, hidden),
        window_strides=(stride, stride), padding=((1, 1), (1, 1)),
        dimension_numbers=("NHWC", "HWIO", "NHWC"), feature_group_count=hidden)
    dw = jnp.clip(dw * params["s_dw"] + params["b_dw"], 0.0, 6.0)
    y = jnp.einsum("nhwc,cd->nhwd", dw, params["w_proj"]) \
        * params["s_proj"] + params["b_proj"]
    if stride == 1 and inp == oup:
        y = y + x
    return jnp.transpose(y, (0, 3, 1, 2))


# ---------------------------------------------------------------------------

if __name__ == "__main__":
    configs = [
        dict(inp=16, oup=16, stride=1, expand_ratio=6),   # residual branch
        dict(inp=16, oup=24, stride=2, expand_ratio=6),   # strided, no residual
        dict(inp=16, oup=16, stride=1, expand_ratio=1),   # no expansion conv
    ]
    key = jax.random.PRNGKey(0)
    for cfg in configs:
        key, kx, kp = jax.random.split(key, 3)
        x = jax.random.normal(kx, (2, cfg["inp"], 16, 16), jnp.float32)  # NCHW
        params = make_params(kp, cfg["inp"], cfg["oup"], cfg["expand_ratio"])

        y_ref = _ref_forward(x, params, **cfg)
        ho = (16 - 1) // cfg["stride"] + 1

        # Exact f32 path (tight check of the kernel logic).
        y32 = jax.block_until_ready(
            inverted_residual(x, params, compute_dtype=None, **cfg))
        assert y32.shape == (2, cfg["oup"], ho, ho)
        np.testing.assert_allclose(np.asarray(y32), np.asarray(y_ref),
                                   rtol=1e-4, atol=1e-4)

        # Default fast path: bf16 matmul operands / bf16 hidden, f32 accumulate.
        ybf = jax.block_until_ready(inverted_residual(x, params, **cfg))
        assert ybf.shape == (2, cfg["oup"], ho, ho)
        np.testing.assert_allclose(np.asarray(ybf), np.asarray(y_ref),
                                   rtol=1e-1, atol=1e-1)
    print("KERNEL_OK")
</pallas_src>

<mosaic_0001>
module attributes {stable_mosaic.version = 11 : i64} {
  func.func @_fused_ir_kernel(%arg0: i32, %arg1: i32, %arg2: memref<1x18x24x16xf32, #tpu.memory_space<vmem>>, %arg3: memref<16x128xf32, #tpu.memory_space<vmem>>, %arg4: memref<1x128xf32, #tpu.memory_space<vmem>>, %arg5: memref<9x128xf32, #tpu.memory_space<vmem>>, %arg6: memref<1x128xf32, #tpu.memory_space<vmem>>, %arg7: memref<128x128xf32, #tpu.memory_space<vmem>>, %arg8: memref<1x128xf32, #tpu.memory_space<vmem>>, %arg9: memref<1x16x16x128xf32, #tpu.memory_space<vmem>>, %arg10: memref<18x24x128xf32, #tpu.memory_space<vmem>>, %arg11: memref<256x128xf32, #tpu.memory_space<vmem>>) attributes {dimension_semantics = [#tpu.dimension_semantics<parallel>, #tpu.dimension_semantics<arbitrary>], iteration_bounds = array<i64: 2, 1>, scalar_prefetch = 0 : i64, scratch_operands = 2 : i64, tpu.core_type = #tpu.core_type<tc>, window_params = [{transform_indices = @transform_0, window_bounds = array<i64: 1, 18, 24, 16>}, {pipeline_mode = #tpu.pipeline_mode<synchronous>, transform_indices = @transform_1, window_bounds = array<i64: 16, 128>}, {pipeline_mode = #tpu.pipeline_mode<synchronous>, transform_indices = @transform_2, window_bounds = array<i64: 1, 128>}, {pipeline_mode = #tpu.pipeline_mode<synchronous>, transform_indices = @transform_3, window_bounds = array<i64: 9, 128>}, {pipeline_mode = #tpu.pipeline_mode<synchronous>, transform_indices = @transform_4, window_bounds = array<i64: 1, 128>}, {pipeline_mode = #tpu.pipeline_mode<synchronous>, transform_indices = @transform_5, window_bounds = array<i64: 128, 128>}, {pipeline_mode = #tpu.pipeline_mode<synchronous>, transform_indices = @transform_6, window_bounds = array<i64: 1, 128>}, {transform_indices = @transform_7, window_bounds = array<i64: 1, 16, 16, 128>}]} {
    %c16_i32 = arith.constant 16 : i32
    %0 = arith.muli %arg1, %c16_i32 : i32
    %1 = tpu.assume_multiple %0, 8 : i32
    %c0 = arith.constant 0 : index
    %2 = arith.index_cast %1 : i32 to index
    %c0_0 = arith.constant 0 : index
    %c0_1 = arith.constant 0 : index
    %3 = vector.load %arg2[%c0, %2, %c0_0, %c0_1] : memref<1x18x24x16xf32, #tpu.memory_space<vmem>>, vector<1x18x24x16xf32>
    %4 = vector.shape_cast %3 : vector<1x18x24x16xf32> to vector<18x24x16xf32>
    %5 = vector.shape_cast %4 : vector<18x24x16xf32> to vector<432x16xf32>
    %6 = tpu.iota {dimensions = array<i32: 0>} : vector<18x24x1xi32>
    %7 = vector.broadcast %1 : i32 to vector<18x24x1xi32>
    %8 = arith.addi %6, %7 : vector<18x24x1xi32>
    %9 = tpu.iota {dimensions = array<i32: 1>} : vector<18x24x1xi32>
    %c1_i32 = arith.constant 1 : i32
    %10 = vector.broadcast %c1_i32 : i32 to vector<18x24x1xi32>
    %11 = arith.cmpi sge, %8, %10 : vector<18x24x1xi32>
    %c16_i32_2 = arith.constant 16 : i32
    %12 = vector.broadcast %c16_i32_2 : i32 to vector<18x24x1xi32>
    %13 = arith.cmpi sle, %8, %12 : vector<18x24x1xi32>
    %14 = arith.andi %11, %13 : vector<18x24x1xi1>
    %c1_i32_3 = arith.constant 1 : i32
    %15 = vector.broadcast %c1_i32_3 : i32 to vector<18x24x1xi32>
    %16 = arith.cmpi sge, %9, %15 : vector<18x24x1xi32>
    %17 = arith.andi %14, %16 : vector<18x24x1xi1>
    %c16_i32_4 = arith.constant 16 : i32
    %18 = vector.broadcast %c16_i32_4 : i32 to vector<18x24x1xi32>
    %19 = arith.cmpi sle, %9, %18 : vector<18x24x1xi32>
    %20 = arith.andi %17, %19 : vector<18x24x1xi1>
    %c0_5 = arith.constant 0 : index
    %c0_6 = arith.constant 0 : index
    %21 = vector.load %arg3[%c0_5, %c0_6] : memref<16x128xf32, #tpu.memory_space<vmem>>, vector<16x128xf32>
    %cst = arith.constant dense<0.000000e+00> : vector<432x128xf32>
    %22 = tpu.matmul %5, %21, %cst {dimension_numbers = #tpu.dot_dimension_numbers<[1], [0], [0], [1], [0, 0, 1, 1], [], []>} : vector<432x16xf32>, vector<16x128xf32>, vector<432x128xf32> -> vector<432x128xf32>
    %c0_7 = arith.constant 0 : index
    %c0_8 = arith.constant 0 : index
    %23 = vector.load %arg4[%c0_7, %c0_8] : memref<1x128xf32, #tpu.memory_space<vmem>>, vector<1x128xf32>
    %24 = vector.broadcast %23 : vector<1x128xf32> to vector<432x128xf32>
    %25 = arith.addf %22, %24 : vector<432x128xf32>
    %cst_9 = arith.constant 0.000000e+00 : f32
    %cst_10 = arith.constant 6.000000e+00 : f32
    %26 = vector.broadcast %cst_9 : f32 to vector<432x128xf32>
    %27 = arith.maximumf %26, %25 : vector<432x128xf32>
    %28 = vector.broadcast %cst_10 : f32 to vector<432x128xf32>
    %29 = arith.minimumf %28, %27 : vector<432x128xf32>
    %30 = vector.shape_cast %29 : vector<432x128xf32> to vector<18x24x128xf32>
    %cst_11 = arith.constant 0.000000e+00 : f32
    %31 = vector.shape_cast %20 : vector<18x24x1xi1> to vector<18x24x1xi1>
    %32 = vector.broadcast %31 : vector<18x24x1xi1> to vector<18x24x128xi1>
    %33 = vector.broadcast %cst_11 : f32 to vector<18x24x128xf32>
    %34 = arith.select %32, %30, %33 : vector<18x24x128xi1>, vector<18x24x128xf32>
    %c0_12 = arith.constant 0 : index
    %c0_13 = arith.constant 0 : index
    %c0_14 = arith.constant 0 : index
    %35 = vector.load %arg10[%c0_12, %c0_13, %c0_14] : memref<18x24x128xf32, #tpu.memory_space<vmem>>, vector<18x24x128xf32>
    tpu.vector_store %arg10[%c0_12, %c0_13, %c0_14], %34 {strides = array<i32>} : memref<18x24x128xf32, #tpu.memory_space<vmem>>, vector<18x24x128xf32>,
    %c0_15 = arith.constant 0 : index
    %c0_16 = arith.constant 0 : index
    %36 = vector.load %arg5[%c0_15, %c0_16] : memref<9x128xf32, #tpu.memory_space<vmem>>, vector<9x128xf32>
    %c0_17 = arith.constant 0 : index
    %c0_18 = arith.constant 0 : index
    %37 = vector.load %arg6[%c0_17, %c0_18] : memref<1x128xf32, #tpu.memory_space<vmem>>, vector<1x128xf32>
    %c0_19 = arith.constant 0 : index
    %c0_20 = arith.constant 0 : index
    %38 = vector.load %arg7[%c0_19, %c0_20] : memref<128x128xf32, #tpu.memory_space<vmem>>, vector<128x128xf32>
    %cst_21 = arith.constant 0.000000e+00 : f32
    %39 = vector.broadcast %cst_21 : f32 to vector<8x16x128xf32>
    %c0_22 = arith.constant 0 : index
    %c0_23 = arith.constant 0 : index
    %c0_24 = arith.constant 0 : index
    %40 = vector.load %arg10[%c0_22, %c0_23, %c0_24] : memref<18x24x128xf32, #tpu.memory_space<vmem>>, vector<8x16x128xf32>
    %41 = vector.extract_strided_slice %36 {offsets = [0, 0], sizes = [1, 128], strides = [1, 1]} : vector<9x128xf32> to vector<1x128xf32>
    %42 = vector.shape_cast %41 : vector<1x128xf32> to vector<1x1x128xf32>
    %43 = vector.broadcast %42 : vector<1x1x128xf32> to vector<8x16x128xf32>
    %44 = arith.mulf %40, %43 : vector<8x16x128xf32>
    %45 = arith.addf %39, %44 : vector<8x16x128xf32>
    %c0_25 = arith.constant 0 : index
    %c1 = arith.constant 1 : index
    %c0_26 = arith.constant 0 : index
    %46 = vector.load %arg10[%c0_25, %c1, %c0_26] : memref<18x24x128xf32, #tpu.memory_space<vmem>>, vector<8x16x128xf32>
    %47 = vector.extract_strided_slice %36 {offsets = [1, 0], sizes = [1, 128], strides = [1, 1]} : vector<9x128xf32> to vector<1x128xf32>
    %48 = vector.shape_cast %47 : vector<1x128xf32> to vector<1x1x128xf32>
    %49 = vector.broadcast %48 : vector<1x1x128xf32> to vector<8x16x128xf32>
    %50 = arith.mulf %46, %49 : vector<8x16x128xf32>
    %51 = arith.addf %45, %50 : vector<8x16x128xf32>
    %c0_27 = arith.constant 0 : index
    %c2 = arith.constant 2 : index
    %c0_28 = arith.constant 0 : index
    %52 = vector.load %arg10[%c0_27, %c2, %c0_28] : memref<18x24x128xf32, #tpu.memory_space<vmem>>, vector<8x16x128xf32>
    %53 = vector.extract_strided_slice %36 {offsets = [2, 0], sizes = [1, 128], strides = [1, 1]} : vector<9x128xf32> to vector<1x128xf32>
    %54 = vector.shape_cast %53 : vector<1x128xf32> to vector<1x1x128xf32>
    %55 = vector.broadcast %54 : vector<1x1x128xf32> to vector<8x16x128xf32>
    %56 = arith.mulf %52, %55 : vector<8x16x128xf32>
    %57 = arith.addf %51, %56 : vector<8x16x128xf32>
    %c1_29 = arith.constant 1 : index
    %c0_30 = arith.constant 0 : index
    %c0_31 = arith.constant 0 : index
    %58 = vector.load %arg10[%c1_29, %c0_30, %c0_31] : memref<18x24x128xf32, #tpu.memory_space<vmem>>, vector<8x16x128xf32>
    %59 = vector.extract_strided_slice %36 {offsets = [3, 0], sizes = [1, 128], strides = [1, 1]} : vector<9x128xf32> to vector<1x128xf32>
    %60 = vector.shape_cast %59 : vector<1x128xf32> to vector<1x1x128xf32>
    %61 = vector.broadcast %60 : vector<1x1x128xf32> to vector<8x16x128xf32>
    %62 = arith.mulf %58, %61 : vector<8x16x128xf32>
    %63 = arith.addf %57, %62 : vector<8x16x128xf32>
    %c1_32 = arith.constant 1 : index
    %c1_33 = arith.constant 1 : index
    %c0_34 = arith.constant 0 : index
    %64 = vector.load %arg10[%c1_32, %c1_33, %c0_34] : memref<18x24x128xf32, #tpu.memory_space<vmem>>, vector<8x16x128xf32>
    %65 = vector.extract_strided_slice %36 {offsets = [4, 0], sizes = [1, 128], strides = [1, 1]} : vector<9x128xf32> to vector<1x128xf32>
    %66 = vector.shape_cast %65 : vector<1x128xf32> to vector<1x1x128xf32>
    %67 = vector.broadcast %66 : vector<1x1x128xf32> to vector<8x16x128xf32>
    %68 = arith.mulf %64, %67 : vector<8x16x128xf32>
    %69 = arith.addf %63, %68 : vector<8x16x128xf32>
    %c1_35 = arith.constant 1 : index
    %c2_36 = arith.constant 2 : index
    %c0_37 = arith.constant 0 : index
    %70 = vector.load %arg10[%c1_35, %c2_36, %c0_37] : memref<18x24x128xf32, #tpu.memory_space<vmem>>, vector<8x16x128xf32>
    %71 = vector.extract_strided_slice %36 {offsets = [5, 0], sizes = [1, 128], strides = [1, 1]} : vector<9x128xf32> to vector<1x128xf32>
    %72 = vector.shape_cast %71 : vector<1x128xf32> to vector<1x1x128xf32>
    %73 = vector.broadcast %72 : vector<1x1x128xf32> to vector<8x16x128xf32>
    %74 = arith.mulf %70, %73 : vector<8x16x128xf32>
    %75 = arith.addf %69, %74 : vector<8x16x128xf32>
    %c2_38 = arith.constant 2 : index
    %c0_39 = arith.constant 0 : index
    %c0_40 = arith.constant 0 : index
    %76 = vector.load %arg10[%c2_38, %c0_39, %c0_40] : memref<18x24x128xf32, #tpu.memory_space<vmem>>, vector<8x16x128xf32>
    %77 = vector.extract_strided_slice %36 {offsets = [6, 0], sizes = [1, 128], strides = [1, 1]} : vector<9x128xf32> to vector<1x128xf32>
    %78 = vector.shape_cast %77 : vector<1x128xf32> to vector<1x1x128xf32>
    %79 = vector.broadcast %78 : vector<1x1x128xf32> to vector<8x16x128xf32>
    %80 = arith.mulf %76, %79 : vector<8x16x128xf32>
    %81 = arith.addf %75, %80 : vector<8x16x128xf32>
    %c2_41 = arith.constant 2 : index
    %c1_42 = arith.constant 1 : index
    %c0_43 = arith.constant 0 : index
    %82 = vector.load %arg10[%c2_41, %c1_42, %c0_43] : memref<18x24x128xf32, #tpu.memory_space<vmem>>, vector<8x16x128xf32>
    %83 = vector.extract_strided_slice %36 {offsets = [7, 0], sizes = [1, 128], strides = [1, 1]} : vector<9x128xf32> to vector<1x128xf32>
    %84 = vector.shape_cast %83 : vector<1x128xf32> to vector<1x1x128xf32>
    %85 = vector.broadcast %84 : vector<1x1x128xf32> to vector<8x16x128xf32>
    %86 = arith.mulf %82, %85 : vector<8x16x128xf32>
    %87 = arith.addf %81, %86 : vector<8x16x128xf32>
    %c2_44 = arith.constant 2 : index
    %c2_45 = arith.constant 2 : index
    %c0_46 = arith.constant 0 : index
    %88 = vector.load %arg10[%c2_44, %c2_45, %c0_46] : memref<18x24x128xf32, #tpu.memory_space<vmem>>, vector<8x16x128xf32>
    %89 = vector.extract_strided_slice %36 {offsets = [8, 0], sizes = [1, 128], strides = [1, 1]} : vector<9x128xf32> to vector<1x128xf32>
    %90 = vector.shape_cast %89 : vector<1x128xf32> to vector<1x1x128xf32>
    %91 = vector.broadcast %90 : vector<1x1x128xf32> to vector<8x16x128xf32>
    %92 = arith.mulf %88, %91 : vector<8x16x128xf32>
    %93 = arith.addf %87, %92 : vector<8x16x128xf32>
    %94 = vector.shape_cast %37 : vector<1x128xf32> to vector<1x1x128xf32>
    %95 = vector.broadcast %94 : vector<1x1x128xf32> to vector<8x16x128xf32>
    %96 = arith.addf %93, %95 : vector<8x16x128xf32>
    %cst_47 = arith.constant 0.000000e+00 : f32
    %cst_48 = arith.constant 6.000000e+00 : f32
    %97 = vector.broadcast %cst_47 : f32 to vector<8x16x128xf32>
    %98 = arith.maximumf %97, %96 : vector<8x16x128xf32>
    %99 = vector.broadcast %cst_48 : f32 to vector<8x16x128xf32>
    %100 = arith.minimumf %99, %98 : vector<8x16x128xf32>
    %101 = vector.shape_cast %100 : vector<8x16x128xf32> to vector<128x128xf32>
    %cst_49 = arith.constant dense<0.000000e+00> : vector<128x128xf32>
    %102 = tpu.matmul %101, %38, %cst_49 {dimension_numbers = #tpu.dot_dimension_numbers<[1], [0], [0], [1], [0, 0, 1, 1], [], []>} : vector<128x128xf32>, vector<128x128xf32>, vector<128x128xf32> -> vector<128x128xf32>
    %c0_50 = arith.constant 0 : index
    %c0_51 = arith.constant 0 : index
    %103 = vector.load %arg11[%c0_50, %c0_51] : memref<256x128xf32, #tpu.memory_space<vmem>>, vector<128x128xf32>
    tpu.vector_store %arg11[%c0_50, %c0_51], %102 {strides = array<i32>} : memref<256x128xf32, #tpu.memory_space<vmem>>, vector<128x128xf32>,
    %cst_52 = arith.constant 0.000000e+00 : f32
    %104 = vector.broadcast %cst_52 : f32 to vector<8x16x128xf32>
    %c8 = arith.constant 8 : index
    %c0_53 = arith.constant 0 : index
    %c0_54 = arith.constant 0 : index
    %105 = vector.load %arg10[%c8, %c0_53, %c0_54] : memref<18x24x128xf32, #tpu.memory_space<vmem>>, vector<8x16x128xf32>
    %106 = vector.extract_strided_slice %36 {offsets = [0, 0], sizes = [1, 128], strides = [1, 1]} : vector<9x128xf32> to vector<1x128xf32>
    %107 = vector.shape_cast %106 : vector<1x128xf32> to vector<1x1x128xf32>
    %108 = vector.broadcast %107 : vector<1x1x128xf32> to vector<8x16x128xf32>
    %109 = arith.mulf %105, %108 : vector<8x16x128xf32>
    %110 = arith.addf %104, %109 : vector<8x16x128xf32>
    %c8_55 = arith.constant 8 : index
    %c1_56 = arith.constant 1 : index
    %c0_57 = arith.constant 0 : index
    %111 = vector.load %arg10[%c8_55, %c1_56, %c0_57] : memref<18x24x128xf32, #tpu.memory_space<vmem>>, vector<8x16x128xf32>
    %112 = vector.extract_strided_slice %36 {offsets = [1, 0], sizes = [1, 128], strides = [1, 1]} : vector<9x128xf32> to vector<1x128xf32>
    %113 = vector.shape_cast %112 : vector<1x128xf32> to vector<1x1x128xf32>
    %114 = vector.broadcast %113 : vector<1x1x128xf32> to vector<8x16x128xf32>
    %115 = arith.mulf %111, %114 : vector<8x16x128xf32>
    %116 = arith.addf %110, %115 : vector<8x16x128xf32>
    %c8_58 = arith.constant 8 : index
    %c2_59 = arith.constant 2 : index
    %c0_60 = arith.constant 0 : index
    %117 = vector.load %arg10[%c8_58, %c2_59, %c0_60] : memref<18x24x128xf32, #tpu.memory_space<vmem>>, vector<8x16x128xf32>
    %118 = vector.extract_strided_slice %36 {offsets = [2, 0], sizes = [1, 128], strides = [1, 1]} : vector<9x128xf32> to vector<1x128xf32>
    %119 = vector.shape_cast %118 : vector<1x128xf32> to vector<1x1x128xf32>
    %120 = vector.broadcast %119 : vector<1x1x128xf32> to vector<8x16x128xf32>
    %121 = arith.mulf %117, %120 : vector<8x16x128xf32>
    %122 = arith.addf %116, %121 : vector<8x16x128xf32>
    %c9 = arith.constant 9 : index
    %c0_61 = arith.constant 0 : index
    %c0_62 = arith.constant 0 : index
    %123 = vector.load %arg10[%c9, %c0_61, %c0_62] : memref<18x24x128xf32, #tpu.memory_space<vmem>>, vector<8x16x128xf32>
    %124 = vector.extract_strided_slice %36 {offsets = [3, 0], sizes = [1, 128], strides = [1, 1]} : vector<9x128xf32> to vector<1x128xf32>
    %125 = vector.shape_cast %124 : vector<1x128xf32> to vector<1x1x128xf32>
    %126 = vector.broadcast %125 : vector<1x1x128xf32> to vector<8x16x128xf32>
    %127 = arith.mulf %123, %126 : vector<8x16x128xf32>
    %128 = arith.addf %122, %127 : vector<8x16x128xf32>
    %c9_63 = arith.constant 9 : index
    %c1_64 = arith.constant 1 : index
    %c0_65 = arith.constant 0 : index
    %129 = vector.load %arg10[%c9_63, %c1_64, %c0_65] : memref<18x24x128xf32, #tpu.memory_space<vmem>>, vector<8x16x128xf32>
    %130 = vector.extract_strided_slice %36 {offsets = [4, 0], sizes = [1, 128], strides = [1, 1]} : vector<9x128xf32> to vector<1x128xf32>
    %131 = vector.shape_cast %130 : vector<1x128xf32> to vector<1x1x128xf32>
    %132 = vector.broadcast %131 : vector<1x1x128xf32> to vector<8x16x128xf32>
    %133 = arith.mulf %129, %132 : vector<8x16x128xf32>
    %134 = arith.addf %128, %133 : vector<8x16x128xf32>
    %c9_66 = arith.constant 9 : index
    %c2_67 = arith.constant 2 : index
    %c0_68 = arith.constant 0 : index
    %135 = vector.load %arg10[%c9_66, %c2_67, %c0_68] : memref<18x24x128xf32, #tpu.memory_space<vmem>>, vector<8x16x128xf32>
    %136 = vector.extract_strided_slice %36 {offsets = [5, 0], sizes = [1, 128], strides = [1, 1]} : vector<9x128xf32> to vector<1x128xf32>
    %137 = vector.shape_cast %136 : vector<1x128xf32> to vector<1x1x128xf32>
    %138 = vector.broadcast %137 : vector<1x1x128xf32> to vector<8x16x128xf32>
    %139 = arith.mulf %135, %138 : vector<8x16x128xf32>
    %140 = arith.addf %134, %139 : vector<8x16x128xf32>
    %c10 = arith.constant 10 : index
    %c0_69 = arith.constant 0 : index
    %c0_70 = arith.constant 0 : index
    %141 = vector.load %arg10[%c10, %c0_69, %c0_70] : memref<18x24x128xf32, #tpu.memory_space<vmem>>, vector<8x16x128xf32>
    %142 = vector.extract_strided_slice %36 {offsets = [6, 0], sizes = [1, 128], strides = [1, 1]} : vector<9x128xf32> to vector<1x128xf32>
    %143 = vector.shape_cast %142 : vector<1x128xf32> to vector<1x1x128xf32>
    %144 = vector.broadcast %143 : vector<1x1x128xf32> to vector<8x16x128xf32>
    %145 = arith.mulf %141, %144 : vector<8x16x128xf32>
    %146 = arith.addf %140, %145 : vector<8x16x128xf32>
    %c10_71 = arith.constant 10 : index
    %c1_72 = arith.constant 1 : index
    %c0_73 = arith.constant 0 : index
    %147 = vector.load %arg10[%c10_71, %c1_72, %c0_73] : memref<18x24x128xf32, #tpu.memory_space<vmem>>, vector<8x16x128xf32>
    %148 = vector.extract_strided_slice %36 {offsets = [7, 0], sizes = [1, 128], strides = [1, 1]} : vector<9x128xf32> to vector<1x128xf32>
    %149 = vector.shape_cast %148 : vector<1x128xf32> to vector<1x1x128xf32>
    %150 = vector.broadcast %149 : vector<1x1x128xf32> to vector<8x16x128xf32>
    %151 = arith.mulf %147, %150 : vector<8x16x128xf32>
    %152 = arith.addf %146, %151 : vector<8x16x128xf32>
    %c10_74 = arith.constant 10 : index
    %c2_75 = arith.constant 2 : index
    %c0_76 = arith.constant 0 : index
    %153 = vector.load %arg10[%c10_74, %c2_75, %c0_76] : memref<18x24x128xf32, #tpu.memory_space<vmem>>, vector<8x16x128xf32>
    %154 = vector.extract_strided_slice %36 {offsets = [8, 0], sizes = [1, 128], strides = [1, 1]} : vector<9x128xf32> to vector<1x128xf32>
    %155 = vector.shape_cast %154 : vector<1x128xf32> to vector<1x1x128xf32>
    %156 = vector.broadcast %155 : vector<1x1x128xf32> to vector<8x16x128xf32>
    %157 = arith.mulf %153, %156 : vector<8x16x128xf32>
    %158 = arith.addf %152, %157 : vector<8x16x128xf32>
    %159 = vector.shape_cast %37 : vector<1x128xf32> to vector<1x1x128xf32>
    %160 = vector.broadcast %159 : vector<1x1x128xf32> to vector<8x16x128xf32>
    %161 = arith.addf %158, %160 : vector<8x16x128xf32>
    %cst_77 = arith.constant 0.000000e+00 : f32
    %cst_78 = arith.constant 6.000000e+00 : f32
    %162 = vector.broadcast %cst_77 : f32 to vector<8x16x128xf32>
    %163 = arith.maximumf %162, %161 : vector<8x16x128xf32>
    %164 = vector.broadcast %cst_78 : f32 to vector<8x16x128xf32>
    %165 = arith.minimumf %164, %163 : vector<8x16x128xf32>
    %166 = vector.shape_cast %165 : vector<8x16x128xf32> to vector<128x128xf32>
    %cst_79 = arith.constant dense<0.000000e+00> : vector<128x128xf32>
    %167 = tpu.matmul %166, %38, %cst_79 {dimension_numbers = #tpu.dot_dimension_numbers<[1], [0], [0], [1], [0, 0, 1, 1], [], []>} : vector<128x128xf32>, vector<128x128xf32>, vector<128x128xf32> -> vector<128x128xf32>
    %c128 = arith.constant 128 : index
    %c0_80 = arith.constant 0 : index
    %168 = vector.load %arg11[%c128, %c0_80] : memref<256x128xf32, #tpu.memory_space<vmem>>, vector<128x128xf32>
    tpu.vector_store %arg11[%c128, %c0_80], %167 {strides = array<i32>} : memref<256x128xf32, #tpu.memory_space<vmem>>, vector<128x128xf32>,
    %169 = vector.extract_strided_slice %4 {offsets = [1, 1, 0], sizes = [16, 16, 16], strides = [1, 1, 1]} : vector<18x24x16xf32> to vector<16x16x16xf32>
    %170 = vector.shape_cast %169 : vector<16x16x16xf32> to vector<256x16xf32>
    %c0_81 = arith.constant 0 : index
    %c0_82 = arith.constant 0 : index
    %171 = vector.load %arg11[%c0_81, %c0_82] : memref<256x128xf32, #tpu.memory_space<vmem>>, vector<256x16xf32>
    %172 = arith.addf %171, %170 : vector<256x16xf32>
    %c0_83 = arith.constant 0 : index
    %c0_84 = arith.constant 0 : index
    %173 = vector.load %arg11[%c0_83, %c0_84] : memref<256x128xf32, #tpu.memory_space<vmem>>, vector<256x16xf32>
    tpu.vector_store %arg11[%c0_83, %c0_84], %172 {strides = array<i32>} : memref<256x128xf32, #tpu.memory_space<vmem>>, vector<256x16xf32>,
    %c0_85 = arith.constant 0 : index
    %c0_86 = arith.constant 0 : index
    %174 = vector.load %arg11[%c0_85, %c0_86] : memref<256x128xf32, #tpu.memory_space<vmem>>, vector<256x128xf32>
    %c0_87 = arith.constant 0 : index
    %c0_88 = arith.constant 0 : index
    %175 = vector.load %arg8[%c0_87, %c0_88] : memref<1x128xf32, #tpu.memory_space<vmem>>, vector<1x128xf32>
    %176 = vector.broadcast %175 : vector<1x128xf32> to vector<256x128xf32>
    %177 = arith.addf %174, %176 : vector<256x128xf32>
    %178 = vector.shape_cast %177 : vector<256x128xf32> to vector<1x16x16x128xf32>
    %c0_89 = arith.constant 0 : index
    %c0_90 = arith.constant 0 : index
    %c0_91 = arith.constant 0 : index
    %c0_92 = arith.constant 0 : index
    %179 = vector.load %arg9[%c0_89, %c0_90, %c0_91, %c0_92] : memref<1x16x16x128xf32, #tpu.memory_space<vmem>>, vector<1x16x16x128xf32>
    tpu.vector_store %arg9[%c0_89, %c0_90, %c0_91, %c0_92], %178 {strides = array<i32>} : memref<1x16x16x128xf32, #tpu.memory_space<vmem>>, vector<1x16x16x128xf32>,
    return
  }
  func.func @transform_0(%arg0: i32, %arg1: i32) -> (i32, i32, i32, i32) {
    %c0_i32 = arith.constant 0 : i32
    %c0_i32_0 = arith.constant 0 : i32
    %c0_i32_1 = arith.constant 0 : i32
    %c0_i32_2 = arith.constant 0 : i32
    return %arg0, %c0_i32, %c0_i32_0, %c0_i32_1 : i32, i32, i32, i32
  }
  func.func @transform_1(%arg0: i32, %arg1: i32) -> (i32, i32) {
    %c0_i32 = arith.constant 0 : i32
    %c0_i32_0 = arith.constant 0 : i32
    %c0_i32_1 = arith.constant 0 : i32
    return %c0_i32, %c0_i32_0 : i32, i32
  }
  func.func @transform_2(%arg0: i32, %arg1: i32) -> (i32, i32) {
    %c0_i32 = arith.constant 0 : i32
    %c0_i32_0 = arith.constant 0 : i32
    %c0_i32_1 = arith.constant 0 : i32
    return %c0_i32, %c0_i32_0 : i32, i32
  }
  func.func @transform_3(%arg0: i32, %arg1: i32) -> (i32, i32) {
    %c0_i32 = arith.constant 0 : i32
    %c0_i32_0 = arith.constant 0 : i32
    %c0_i32_1 = arith.constant 0 : i32
    return %c0_i32, %c0_i32_0 : i32, i32
  }
  func.func @transform_4(%arg0: i32, %arg1: i32) -> (i32, i32) {
    %c0_i32 = arith.constant 0 : i32
    %c0_i32_0 = arith.constant 0 : i32
    %c0_i32_1 = arith.constant 0 : i32
    return %c0_i32, %c0_i32_0 : i32, i32
  }
  func.func @transform_5(%arg0: i32, %arg1: i32) -> (i32, i32) {
    %c0_i32 = arith.constant 0 : i32
    %c0_i32_0 = arith.constant 0 : i32
    %c0_i32_1 = arith.constant 0 : i32
    return %c0_i32, %c0_i32_0 : i32, i32
  }
  func.func @transform_6(%arg0: i32, %arg1: i32) -> (i32, i32) {
    %c0_i32 = arith.constant 0 : i32
    %c0_i32_0 = arith.constant 0 : i32
    %c0_i32_1 = arith.constant 0 : i32
    return %c0_i32, %c0_i32_0 : i32, i32
  }
  func.func @transform_7(%arg0: i32, %arg1: i32) -> (i32, i32, i32, i32) {
    %c0_i32 = arith.constant 0 : i32
    %c0_i32_0 = arith.constant 0 : i32
    %c0_i32_1 = arith.constant 0 : i32
    return %arg0, %arg1, %c0_i32, %c0_i32_0 : i32, i32, i32, i32
  }
}

</mosaic_0001>

<llo_original>
// kernel: tpu_custom_call.1
$region0: #{tpu_custom_call.1}
  #allocation0 [shape = 'u32[]', space=smem, size = 0x4, offset = 0x4, fixed_abs, tag = 'smem constant byte address 0x4 - core index']
  #allocation1 [shape = 'u32[72,128]{1,0:T(1,128)}', space=vmem, size = 0x9000, scoped, tag = 'internal scratch']
  #allocation2 [shape = 'f32[18,24,128]{2,1,0:T(8,128)}', space=vmem, size = 0x36000, scoped, tag = 'scratch operand']
  #allocation3 [shape = 'f32[256,128]{1,0:T(8,128)}', space=vmem, size = 0x20000, scoped, tag = 'scratch operand']
  %s0 = inlined_call_operand.vmem [shape: f32[2,18,24,16], index: 0, kind: input, shape index: {}]
  %s1 = inlined_call_operand.vmem [shape: f32[16,128], index: 1, kind: input, shape index: {}]
  %s2 = inlined_call_operand.vmem [shape: f32[1,128], index: 2, kind: input, shape index: {}]
  %s3 = inlined_call_operand.vmem [shape: f32[9,128], index: 3, kind: input, shape index: {}]
  %s4 = inlined_call_operand.vmem [shape: f32[1,128], index: 4, kind: input, shape index: {}]
  %s5 = inlined_call_operand.vmem [shape: f32[128,128], index: 5, kind: input, shape index: {}]
  %s6 = inlined_call_operand.vmem [shape: f32[1,128], index: 6, kind: input, shape index: {}]
  %s7 = inlined_call_operand.hbm [shape: f32[2,16,16,128], index: 7, kind: output, shape index: {}]
  %s8 = sld [smem:[#allocation0]]
  $region61: #{tpu_custom_call.1} parent=0
    _
  %s10 = ssub.s32 1, %s8
  %s11 = scalar_select 0, %s10, %s8
  $region1: #{tpu_custom_call.1} parent=0
    #allocation4 [shape = 'u8[262144]{0}', space=vmem, size = 0x40000, scoped, tag = 'output window, operand 0']
    #allocation5 [shape = 's32[2]{0}', space=sflag, size = 0x8, scoped, tag = 'scoped memory for tpu_custom_call.1']
    %12 = vsyncpa [#allocation5], 0
    %s13 = scalar_lea.sflag [#allocation5], 1
    %14 = vsyncpa %s13, 0
    loop: start=0, step=1, limit=4
    $region2: #{tpu_custom_call.1} parent=1 // loop_pre_header
      _
    $region3: #{tpu_custom_call.1} parent=1 // loop_header
      %s16 = sphi 0, %s20
      %p17 = scmp.ge.s32.totalorder %s16, 4
      %s23 = sphi 0, %s35
      %s24 = sphi 0, %s31
      %s25 = sphi 0, %s23
      %s26 = sphi 0, %s24
      %s27 = sphi 0, %s25
      %s28 = sphi 0, %s26
      %s38 = sphi 0, %s40
      %s41 = sphi 0, %s38
      %s42 = sphi 0, %s41
      %s58 = sphi 0, %s42
      %s62 = sphi 0, %s62
      %s64 = sphi 0, %s62
      %s65 = sphi 0, %s64
      %s79 = sphi 0, %s65
      %s83 = sphi 0, %s83
      %s85 = sphi 0, %s83
      %s86 = sphi 0, %s85
      %s100 = sphi 0, %s86
      %s104 = sphi 0, %s104
      %s106 = sphi 0, %s104
      %s107 = sphi 0, %s106
      %s121 = sphi 0, %s107
      %s125 = sphi 0, %s125
      %s127 = sphi 0, %s125
      %s128 = sphi 0, %s127
      %s142 = sphi 0, %s128
      %s146 = sphi 0, %s146
      %s148 = sphi 0, %s146
      %s149 = sphi 0, %s148
      %s163 = sphi 0, %s149
      %s167 = sphi 0, %s167
      %s169 = sphi 0, %s167
      %s170 = sphi 0, %s169
      %s184 = sphi 0, %s170
      %s192 = sphi 0, %s194
      %s195 = sphi 0, %s192
      %s196 = sphi 0, %s195
      %s212 = sphi 0, %s196
    $region4: #{tpu_custom_call.1} parent=1 // loop_header_branch
      %19 = sbr.rel (%p17) target = $region8
    $region5: #{tpu_custom_call.1} parent=1 // loop_body
      %s21 = ssub.s32 %s16, 1
      %s22 = ssub.s32 %s16, 2
      %s29 = sadd.s32 1, %s24
      %p30 = scmp.ge.s32.totalorder %s29, 1
      %s31 = scalar_select %p30, 0, %s29
      %s32 = sadd.s32 1, %s23
      %s33 = scalar_select %p30, %s32, %s23
      %p34 = scmp.ge.s32.totalorder %s33, 2
      %s35 = scalar_select %p34, 0, %s33
      %s36 = ssub.s32 %s23, %s35
      %p37 = scmp.eq.s32.totalorder %s36, 0
      %s39 = sadd.s32 %s38, 1
      %s40 = scalar_select %p37, %s38, %s39
      %p43 = pneg %p37
      %p44 = scmp.eq.s32.totalorder %s16, 1
      %p45 = por %p43, %p44
      %p46 = scmp.ne.s32.totalorder %s38, %s41
      %p47 = scmp.eq.s32.totalorder %s16, 0
      %p48 = por %p46, %p47
      %p49 = scmp.ne.s32.totalorder %s38, %s41
      %p50 = scmp.eq.s32.totalorder %s21, 1
      %p51 = por %p49, %p50
      %p52 = scmp.ne.s32.totalorder %s41, %s42
      %p53 = scmp.eq.s32.totalorder %s21, 0
      %p54 = por %p52, %p53
      %p55 = scmp.ne.s32.totalorder %s41, %s42
      %p56 = scmp.eq.s32.totalorder %s22, 1
      %p57 = por %p55, %p56
      %p59 = scmp.ne.s32.totalorder %s42, %s58
      %p60 = scmp.eq.s32.totalorder %s22, 0
      %p61 = por %p59, %p60
      %s63 = sadd.s32 %s62, 1
      %p66 = scmp.eq.s32.totalorder %s16, 1
      %p67 = scmp.ne.s32.totalorder %s62, %s64
      %p68 = scmp.eq.s32.totalorder %s16, 0
      %p69 = por %p67, %p68
      %p70 = scmp.ne.s32.totalorder %s62, %s64
      %p71 = scmp.eq.s32.totalorder %s21, 1
      %p72 = por %p70, %p71
      %p73 = scmp.ne.s32.totalorder %s64, %s65
      %p74 = scmp.eq.s32.totalorder %s21, 0
      %p75 = por %p73, %p74
      %p76 = scmp.ne.s32.totalorder %s64, %s65
      %p77 = scmp.eq.s32.totalorder %s22, 1
      %p78 = por %p76, %p77
      %p80 = scmp.ne.s32.totalorder %s65, %s79
      %p81 = scmp.eq.s32.totalorder %s22, 0
      %p82 = por %p80, %p81
      %s84 = sadd.s32 %s83, 1
      %p87 = scmp.eq.s32.totalorder %s16, 1
      %p88 = scmp.ne.s32.totalorder %s83, %s85
      %p89 = scmp.eq.s32.totalorder %s16, 0
      %p90 = por %p88, %p89
      %p91 = scmp.ne.s32.totalorder %s83, %s85
      %p92 = scmp.eq.s32.totalorder %s21, 1
      %p93 = por %p91, %p92
      %p94 = scmp.ne.s32.totalorder %s85, %s86
      %p95 = scmp.eq.s32.totalorder %s21, 0
      %p96 = por %p94, %p95
      %p97 = scmp.ne.s32.totalorder %s85, %s86
      %p98 = scmp.eq.s32.totalorder %s22, 1
      %p99 = por %p97, %p98
      %p101 = scmp.ne.s32.totalorder %s86, %s100
      %p102 = scmp.eq.s32.totalorder %s22, 0
      %p103 = por %p101, %p102
      %s105 = sadd.s32 %s104, 1
      %p108 = scmp.eq.s32.totalorder %s16, 1
      %p109 = scmp.ne.s32.totalorder %s104, %s106
      %p110 = scmp.eq.s32.totalorder %s16, 0
      %p111 = por %p109, %p110
      %p112 = scmp.ne.s32.totalorder %s104, %s106
      %p113 = scmp.eq.s32.totalorder %s21, 1
      %p114 = por %p112, %p113
      %p115 = scmp.ne.s32.totalorder %s106, %s107
      %p116 = scmp.eq.s32.totalorder %s21, 0
      %p117 = por %p115, %p116
      %p118 = scmp.ne.s32.totalorder %s106, %s107
      %p119 = scmp.eq.s32.totalorder %s22, 1
      %p120 = por %p118, %p119
      %p122 = scmp.ne.s32.totalorder %s107, %s121
      %p123 = scmp.eq.s32.totalorder %s22, 0
      %p124 = por %p122, %p123
      %s126 = sadd.s32 %s125, 1
      %p129 = scmp.eq.s32.totalorder %s16, 1
      %p130 = scmp.ne.s32.totalorder %s125, %s127
      %p131 = scmp.eq.s32.totalorder %s16, 0
      %p132 = por %p130, %p131
      %p133 = scmp.ne.s32.totalorder %s125, %s127
      %p134 = scmp.eq.s32.totalorder %s21, 1
      %p135 = por %p133, %p134
      %p136 = scmp.ne.s32.totalorder %s127, %s128
      %p137 = scmp.eq.s32.totalorder %s21, 0
      %p138 = por %p136, %p137
      %p139 = scmp.ne.s32.totalorder %s127, %s128
      %p140 = scmp.eq.s32.totalorder %s22, 1
      %p141 = por %p139, %p140
      %p143 = scmp.ne.s32.totalorder %s128, %s142
      %p144 = scmp.eq.s32.totalorder %s22, 0
      %p145 = por %p143, %p144
      %s147 = sadd.s32 %s146, 1
      %p150 = scmp.eq.s32.totalorder %s16, 1
      %p151 = scmp.ne.s32.totalorder %s146, %s148
      %p152 = scmp.eq.s32.totalorder %s16, 0
      %p153 = por %p151, %p152
      %p154 = scmp.ne.s32.totalorder %s146, %s148
      %p155 = scmp.eq.s32.totalorder %s21, 1
      %p156 = por %p154, %p155
      %p157 = scmp.ne.s32.totalorder %s148, %s149
      %p158 = scmp.eq.s32.totalorder %s21, 0
      %p159 = por %p157, %p158
      %p160 = scmp.ne.s32.totalorder %s148, %s149
      %p161 = scmp.eq.s32.totalorder %s22, 1
      %p162 = por %p160, %p161
      %p164 = scmp.ne.s32.totalorder %s149, %s163
      %p165 = scmp.eq.s32.totalorder %s22, 0
      %p166 = por %p164, %p165
      %s168 = sadd.s32 %s167, 1
      %p171 = scmp.eq.s32.totalorder %s16, 1
      %p172 = scmp.ne.s32.totalorder %s167, %s169
      %p173 = scmp.eq.s32.totalorder %s16, 0
      %p174 = por %p172, %p173
      %p175 = scmp.ne.s32.totalorder %s167, %s169
      %p176 = scmp.eq.s32.totalorder %s21, 1
      %p177 = por %p175, %p176
      %p178 = scmp.ne.s32.totalorder %s169, %s170
      %p179 = scmp.eq.s32.totalorder %s21, 0
      %p180 = por %p178, %p179
      %p181 = scmp.ne.s32.totalorder %s169, %s170
      %p182 = scmp.eq.s32.totalorder %s22, 1
      %p183 = por %p181, %p182
      %p185 = scmp.ne.s32.totalorder %s170, %s184
      %p186 = scmp.eq.s32.totalorder %s22, 0
      %p187 = por %p185, %p186
      %s188 = ssub.s32 %s23, %s35
      %s189 = ssub.s32 %s24, %s31
      %s190 = sor.u32 %s188, %s189
      %p191 = scmp.eq.s32.totalorder %s190, 0
      %s193 = sadd.s32 %s192, 1
      %s194 = scalar_select %p191, %s192, %s193
      %p197 = pneg %p191
      %p198 = scmp.eq.s32.totalorder %s16, 1
      %p199 = por %p197, %p198
      %p200 = scmp.ne.s32.totalorder %s192, %s195
      %p201 = scmp.eq.s32.totalorder %s16, 0
      %p202 = por %p200, %p201
      %p203 = scmp.ne.s32.totalorder %s192, %s195
      %p204 = scmp.eq.s32.totalorder %s21, 1
      %p205 = por %p203, %p204
      %p206 = scmp.ne.s32.totalorder %s195, %s196
      %p207 = scmp.eq.s32.totalorder %s21, 0
      %p208 = por %p206, %p207
      %p209 = scmp.ne.s32.totalorder %s195, %s196
      %p210 = scmp.eq.s32.totalorder %s22, 1
      %p211 = por %p209, %p210
      %p213 = scmp.ne.s32.totalorder %s196, %s212
      %p214 = scmp.eq.s32.totalorder %s22, 0
      %p215 = por %p213, %p214
      %p216 = scmp.le.s32.totalorder 1, %s16
      %p217 = scmp.lt.s32.totalorder %s16, 3
      %p218 = pnand %p216, %p217
      %p219 = pneg %p218
      // Predicated region
      $region9: #{tpu_custom_call.1} parent=5 // pred_check
        _
      $region10: #{tpu_custom_call.1} parent=5 // pred_check_branch
        %221 = sbr.rel (%p218) target = $region12
      $region11: #{tpu_custom_call.1} parent=5 // pred_region
        %s222 = ssub.s32 %s16, 1
        // Predicated region
        $region13: #{tpu_custom_call.1} parent=11 // pred_check
          %p223 = pneg %p75
        $region14: #{tpu_custom_call.1} parent=11 // pred_check_branch
          %225 = sbr.rel (%p223) target = $region16
        $region15: #{tpu_custom_call.1} parent=11 // pred_region
          _
        $region16: #{tpu_custom_call.1} parent=11 // pred_fallthru
          _
        // Predicated region
        $region17: #{tpu_custom_call.1} parent=11 // pred_check
          %p226 = pneg %p96
        $region18: #{tpu_custom_call.1} parent=11 // pred_check_branch
          %228 = sbr.rel (%p226) target = $region20
        $region19: #{tpu_custom_call.1} parent=11 // pred_region
          _
        $region20: #{tpu_custom_call.1} parent=11 // pred_fallthru
          _
        // Predicated region
        $region21: #{tpu_custom_call.1} parent=11 // pred_check
          %p229 = pneg %p117
        $region22: #{tpu_custom_call.1} parent=11 // pred_check_branch
          %231 = sbr.rel (%p229) target = $region24
        $region23: #{tpu_custom_call.1} parent=11 // pred_region
          _
        $region24: #{tpu_custom_call.1} parent=11 // pred_fallthru
          _
        // Predicated region
        $region25: #{tpu_custom_call.1} parent=11 // pred_check
          %p232 = pneg %p138
        $region26: #{tpu_custom_call.1} parent=11 // pred_check_branch
          %234 = sbr.rel (%p232) target = $region28
        $region27: #{tpu_custom_call.1} parent=11 // pred_region
          _
        $region28: #{tpu_custom_call.1} parent=11 // pred_fallthru
          _
        // Predicated region
        $region29: #{tpu_custom_call.1} parent=11 // pred_check
          %p235 = pneg %p159
        $region30: #{tpu_custom_call.1} parent=11 // pred_check_branch
          %237 = sbr.rel (%p235) target = $region32
        $region31: #{tpu_custom_call.1} parent=11 // pred_region
          _
        $region32: #{tpu_custom_call.1} parent=11 // pred_fallthru
          _
        // Predicated region
        $region33: #{tpu_custom_call.1} parent=11 // pred_check
          %p238 = pneg %p180
        $region34: #{tpu_custom_call.1} parent=11 // pred_check_branch
          %240 = sbr.rel (%p238) target = $region36
        $region35: #{tpu_custom_call.1} parent=11 // pred_region
          _
        $region36: #{tpu_custom_call.1} parent=11 // pred_fallthru
          _
      $region12: #{tpu_custom_call.1} parent=5 // pred_fallthru
        _
      %p241 = scmp.lt.s32.totalorder %s16, 2
      // Predicated region
      $region37: #{tpu_custom_call.1} parent=5 // pred_check
        %p242 = pneg %p241
      $region38: #{tpu_custom_call.1} parent=5 // pred_check_branch
        %244 = sbr.rel (%p242) target = $region40
      $region39: #{tpu_custom_call.1} parent=5 // pred_region
        // Predicated region
        $region41: #{tpu_custom_call.1} parent=39 // pred_check
          %p245 = pneg %p48
        $region42: #{tpu_custom_call.1} parent=39 // pred_check_branch
          %247 = sbr.rel (%p245) target = $region44
        $region43: #{tpu_custom_call.1} parent=39 // pred_region
          %p248 = scmp.lt.s32.totalorder %s23, 1
          %s249 = scalar_select %p248, %s23, 1
          %s250 = smul.addr %s249, 54
          %s251 = smul.addr %s250, 8
          %s252 = scalar_lea.vmem %s0, %s251
        $region44: #{tpu_custom_call.1} parent=39 // pred_fallthru
          _
      $region40: #{tpu_custom_call.1} parent=5 // pred_fallthru
        _
      %p253 = scmp.le.s32.totalorder 1, %s16
      %p254 = scmp.lt.s32.totalorder %s16, 3
      %p255 = pnand %p253, %p254
      %p256 = pneg %p255
      // Predicated region
      $region45: #{tpu_custom_call.1} parent=5 // pred_check
        _
      $region46: #{tpu_custom_call.1} parent=5 // pred_check_branch
        %258 = sbr.rel (%p255) target = $region48
      $region47: #{tpu_custom_call.1} parent=5 // pred_region
        %s259 = ssub.s32 %s16, 1
        %p260 = scmp.lt.s32.totalorder %s25, 1
        %s261 = scalar_select %p260, %s25, 1
        %s262 = smul.addr %s261, 54
        %s263 = smul.addr %s262, 8
        %s264 = scalar_lea.vmem %s0, %s263
        %p265 = pneg %p54
        %p266 = pneg %p51
        %p267 = pneg %p75
        %p268 = pneg %p72
        %p269 = pneg %p96
        %p270 = pneg %p93
        %p271 = pneg %p117
        %p272 = pneg %p114
        %p273 = pneg %p138
        %p274 = pneg %p135
        %p275 = pneg %p159
        %p276 = pneg %p156
        %p277 = pneg %p180
        %p278 = pneg %p177
        %p279 = pneg %p208
        %p280 = pneg %p205
        %s281 = sand.u32 %s195, 1
        %s282 = scalar_lea.sflag [#allocation5], %s281
        %s283 = sand.u32 %s195, 1
        %s284 = smul.addr %s283, 256
        %s285 = scalar_lea.vmem [#allocation4], %s284
        %p286 = scmp.lt.s32.totalorder %s25, 1
        %s287 = scalar_select %p286, %s25, 1
        %s288 = smul.addr %s287, 54
        %s289 = smul.addr %s288, 8
        %s290 = scalar_lea.vmem %s0, %s289
        %s291 = smul.u32 16, %s26
        %s292 = smul.u32 %s26, 16
        %s293 = smul.u32 %s292, 24
        %s294 = scalar_lea.vmem %s290, %s293
        %v295 = vld [vmem:[%s294] sm:$0xff]
        %v296 = vld [vmem:[%s294 + $0x8] sm:$0xff]
        %v297 = vld [vmem:[%s294 + $0x10] sm:$0xff]
        %v298 = vld [vmem:[%s294 + $0x18] sm:$0xff]
        %v299 = vld [vmem:[%s294 + $0x20] sm:$0xff]
        %v300 = vld [vmem:[%s294 + $0x28] sm:$0xff]
        %v301 = vld [vmem:[%s294 + $0x30] sm:$0xff]
        %v302 = vld [vmem:[%s294 + $0x38] sm:$0xff]
        %v303 = vld [vmem:[%s294 + $0x40] sm:$0xff]
        %v304 = vld [vmem:[%s294 + $0x48] sm:$0xff]
        %v305 = vld [vmem:[%s294 + $0x50] sm:$0xff]
        %v306 = vld [vmem:[%s294 + $0x58] sm:$0xff]
        %v307 = vld [vmem:[%s294 + $0x60] sm:$0xff]
        %v308 = vld [vmem:[%s294 + $0x68] sm:$0xff]
        %v309 = vld [vmem:[%s294 + $0x70] sm:$0xff]
        %v310 = vld [vmem:[%s294 + $0x78] sm:$0xff]
        %v311 = vld [vmem:[%s294 + $0x80] sm:$0xff]
        %v312 = vld [vmem:[%s294 + $0x88] sm:$0xff]
        %v313 = vld [vmem:[%s294 + $0x90] sm:$0xff]
        %v314 = vld [vmem:[%s294 + $0x98] sm:$0xff]
        %v315 = vld [vmem:[%s294 + $0xa0] sm:$0xff]
        %v316 = vld [vmem:[%s294 + $0xa8] sm:$0xff]
        %v317 = vld [vmem:[%s294 + $0xb0] sm:$0xff]
        %v318 = vld [vmem:[%s294 + $0xb8] sm:$0xff]
        %v319 = vld [vmem:[%s294 + $0xc0] sm:$0xff]
        %v320 = vld [vmem:[%s294 + $0xc8] sm:$0xff]
        %v321 = vld [vmem:[%s294 + $0xd0] sm:$0xff]
        %v322 = vld [vmem:[%s294 + $0xd8] sm:$0xff]
        %v323 = vld [vmem:[%s294 + $0xe0] sm:$0xff]
        %v324 = vld [vmem:[%s294 + $0xe8] sm:$0xff]
        %v325 = vld [vmem:[%s294 + $0xf0] sm:$0xff]
        %v326 = vld [vmem:[%s294 + $0xf8] sm:$0xff]
        %v327 = vld [vmem:[%s294 + $0x100] sm:$0xff]
        %v328 = vld [vmem:[%s294 + $0x108] sm:$0xff]
        %v329 = vld [vmem:[%s294 + $0x110] sm:$0xff]
        %v330 = vld [vmem:[%s294 + $0x118] sm:$0xff]
        %v331 = vld [vmem:[%s294 + $0x120] sm:$0xff]
        %v332 = vld [vmem:[%s294 + $0x128] sm:$0xff]
        %v333 = vld [vmem:[%s294 + $0x130] sm:$0xff]
        %v334 = vld [vmem:[%s294 + $0x138] sm:$0xff]
        %v335 = vld [vmem:[%s294 + $0x140] sm:$0xff]
        %v336 = vld [vmem:[%s294 + $0x148] sm:$0xff]
        %v337 = vld [vmem:[%s294 + $0x150] sm:$0xff]
        %v338 = vld [vmem:[%s294 + $0x158] sm:$0xff]
        %v339 = vld [vmem:[%s294 + $0x160] sm:$0xff]
        %v340 = vld [vmem:[%s294 + $0x168] sm:$0xff]
        %v341 = vld [vmem:[%s294 + $0x170] sm:$0xff]
        %v342 = vld [vmem:[%s294 + $0x178] sm:$0xff]
        %v343 = vld [vmem:[%s294 + $0x180] sm:$0xff]
        %v344 = vld [vmem:[%s294 + $0x188] sm:$0xff]
        %v345 = vld [vmem:[%s294 + $0x190] sm:$0xff]
        %v346 = vld [vmem:[%s294 + $0x198] sm:$0xff]
        %v347 = vld [vmem:[%s294 + $0x1a0] sm:$0xff]
        %v348 = vld [vmem:[%s294 + $0x1a8] sm:$0xff]
        %v349 = vstv %s292
        %v350 = vadd.s32 %v349, 1
        %v351 = vadd.s32 %v349, 2
        %v352 = vadd.s32 %v349, 3
        %v353 = vadd.s32 %v349, 4
        %v354 = vadd.s32 %v349, 5
        %v355 = vadd.s32 %v349, 6
        %v356 = vadd.s32 %v349, 7
        %v357 = vadd.s32 %v349, 8
        %v358 = vadd.s32 %v349, 9
        %v359 = vadd.s32 %v349, 10
        %v360 = vadd.s32 %v349, 11
        %v361 = vadd.s32 %v349, 12
        %v362 = vadd.s32 %v349, 13
        %v363 = vadd.s32 %v349, 14
        %v364 = vadd.s32 %v349, 15
        %v365 = vadd.s32 %v349, 16
        %v366 = vadd.s32 %v349, 17
        %v367 = vlaneseq
        %v368 = vshrl.u32 %v367, 7
        %v369 = vadd.s32 %v368, 8
        %v370 = vadd.s32 %v368, 16
        %vm371 = vcmp.ge.s32.totalorder %v349, 1
        %vm372 = vcmp.ge.s32.totalorder %v350, 1
        %vm373 = vcmp.ge.s32.totalorder %v351, 1
        %vm374 = vcmp.ge.s32.totalorder %v352, 1
        %vm375 = vcmp.ge.s32.totalorder %v353, 1
        %vm376 = vcmp.ge.s32.totalorder %v354, 1
        %vm377 = vcmp.ge.s32.totalorder %v355, 1
        %vm378 = vcmp.ge.s32.totalorder %v356, 1
        %vm379 = vcmp.ge.s32.totalorder %v357, 1
        %vm380 = vcmp.ge.s32.totalorder %v358, 1
        %vm381 = vcmp.ge.s32.totalorder %v359, 1
        %vm382 = vcmp.ge.s32.totalorder %v360, 1
        %vm383 = vcmp.ge.s32.totalorder %v361, 1
        %vm384 = vcmp.ge.s32.totalorder %v362, 1
        %vm385 = vcmp.ge.s32.totalorder %v363, 1
        %vm386 = vcmp.ge.s32.totalorder %v364, 1
        %vm387 = vcmp.ge.s32.totalorder %v365, 1
        %vm388 = vcmp.ge.s32.totalorder %v366, 1
        %vm389 = vcmp.le.s32.totalorder %v349, 16
        %vm390 = vcmp.le.s32.totalorder %v350, 16
        %vm391 = vcmp.le.s32.totalorder %v351, 16
        %vm392 = vcmp.le.s32.totalorder %v352, 16
        %vm393 = vcmp.le.s32.totalorder %v353, 16
        %vm394 = vcmp.le.s32.totalorder %v354, 16
        %vm395 = vcmp.le.s32.totalorder %v355, 16
        %vm396 = vcmp.le.s32.totalorder %v356, 16
        %vm397 = vcmp.le.s32.totalorder %v357, 16
        %vm398 = vcmp.le.s32.totalorder %v358, 16
        %vm399 = vcmp.le.s32.totalorder %v359, 16
        %vm400 = vcmp.le.s32.totalorder %v360, 16
        %vm401 = vcmp.le.s32.totalorder %v361, 16
        %vm402 = vcmp.le.s32.totalorder %v362, 16
        %vm403 = vcmp.le.s32.totalorder %v363, 16
        %vm404 = vcmp.le.s32.totalorder %v364, 16
        %vm405 = vcmp.le.s32.totalorder %v365, 16
        %vm406 = vcmp.le.s32.totalorder %v366, 16
        %vm407 = vmand %vm371, %vm389
        %vm408 = vmand %vm372, %vm390
        %vm409 = vmand %vm373, %vm391
        %vm410 = vmand %vm374, %vm392
        %vm411 = vmand %vm375, %vm393
        %vm412 = vmand %vm376, %vm394
        %vm413 = vmand %vm377, %vm395
        %vm414 = vmand %vm378, %vm396
        %vm415 = vmand %vm379, %vm397
        %vm416 = vmand %vm380, %vm398
        %vm417 = vmand %vm381, %vm399
        %vm418 = vmand %vm382, %vm400
        %vm419 = vmand %vm383, %vm401
        %vm420 = vmand %vm384, %vm402
        %vm421 = vmand %vm385, %vm403
        %vm422 = vmand %vm386, %vm404
        %vm423 = vmand %vm387, %vm405
        %vm424 = vmand %vm388, %vm406
        %vm425 = vcmp.ge.s32.totalorder %v368, 1
        %vm426 = vcmp.ge.s32.totalorder %v369, 1
        %vm427 = vcmp.ge.s32.totalorder %v370, 1
        %vm428 = vmand %vm407, %vm425
        %vm429 = vmand %vm407, %vm426
        %vm430 = vmand %vm407, %vm427
        %vm431 = vmand %vm408, %vm425
        %vm432 = vmand %vm408, %vm426
        %vm433 = vmand %vm408, %vm427
        %vm434 = vmand %vm409, %vm425
        %vm435 = vmand %vm409, %vm426
        %vm436 = vmand %vm409, %vm427
        %vm437 = vmand %vm410, %vm425
        %vm438 = vmand %vm410, %vm426
        %vm439 = vmand %vm410, %vm427
        %vm440 = vmand %vm411, %vm425
        %vm441 = vmand %vm411, %vm426
        %vm442 = vmand %vm411, %vm427
        %vm443 = vmand %vm412, %vm425
        %vm444 = vmand %vm412, %vm426
        %vm445 = vmand %vm412, %vm427
        %vm446 = vmand %vm413, %vm425
        %vm447 = vmand %vm413, %vm426
        %vm448 = vmand %vm413, %vm427
        %vm449 = vmand %vm414, %vm425
        %vm450 = vmand %vm414, %vm426
        %vm451 = vmand %vm414, %vm427
        %vm452 = vmand %vm415, %vm425
        %vm453 = vmand %vm415, %vm426
        %vm454 = vmand %vm415, %vm427
        %vm455 = vmand %vm416, %vm425
        %vm456 = vmand %vm416, %vm426
        %vm457 = vmand %vm416, %vm427
        %vm458 = vmand %vm417, %vm425
        %vm459 = vmand %vm417, %vm426
        %vm460 = vmand %vm417, %vm427
        %vm461 = vmand %vm418, %vm425
        %vm462 = vmand %vm418, %vm426
        %vm463 = vmand %vm418, %vm427
        %vm464 = vmand %vm419, %vm425
        %vm465 = vmand %vm419, %vm426
        %vm466 = vmand %vm419, %vm427
        %vm467 = vmand %vm420, %vm425
        %vm468 = vmand %vm420, %vm426
        %vm469 = vmand %vm420, %vm427
        %vm470 = vmand %vm421, %vm425
        %vm471 = vmand %vm421, %vm426
        %vm472 = vmand %vm421, %vm427
        %vm473 = vmand %vm422, %vm425
        %vm474 = vmand %vm422, %vm426
        %vm475 = vmand %vm422, %vm427
        %vm476 = vmand %vm423, %vm425
        %vm477 = vmand %vm423, %vm426
        %vm478 = vmand %vm423, %vm427
        %vm479 = vmand %vm424, %vm425
        %vm480 = vmand %vm424, %vm426
        %vm481 = vmand %vm424, %vm427
        %vm482 = vcmp.le.s32.totalorder %v368, 16
        %vm483 = vcmp.le.s32.totalorder %v369, 16
        %vm484 = vcmp.le.s32.totalorder %v370, 16
        %vm485 = vmand %vm428, %vm482
        %vm486 = vmand %vm429, %vm483
        %vm487 = vmand %vm430, %vm484
        %vm488 = vmand %vm431, %vm482
        %vm489 = vmand %vm432, %vm483
        %vm490 = vmand %vm433, %vm484
        %vm491 = vmand %vm434, %vm482
        %vm492 = vmand %vm435, %vm483
        %vm493 = vmand %vm436, %vm484
        %vm494 = vmand %vm437, %vm482
        %vm495 = vmand %vm438, %vm483
        %vm496 = vmand %vm439, %vm484
        %vm497 = vmand %vm440, %vm482
        %vm498 = vmand %vm441, %vm483
        %vm499 = vmand %vm442, %vm484
        %vm500 = vmand %vm443, %vm482
        %vm501 = vmand %vm444, %vm483
        %vm502 = vmand %vm445, %vm484
        %vm503 = vmand %vm446, %vm482
        %vm504 = vmand %vm447, %vm483
        %vm505 = vmand %vm448, %vm484
        %vm506 = vmand %vm449, %vm482
        %vm507 = vmand %vm450, %vm483
        %vm508 = vmand %vm451, %vm484
        %vm509 = vmand %vm452, %vm482
        %vm510 = vmand %vm453, %vm483
        %vm511 = vmand %vm454, %vm484
        %vm512 = vmand %vm455, %vm482
        %vm513 = vmand %vm456, %vm483
        %vm514 = vmand %vm457, %vm484
        %vm515 = vmand %vm458, %vm482
        %vm516 = vmand %vm459, %vm483
        %vm517 = vmand %vm460, %vm484
        %vm518 = vmand %vm461, %vm482
        %vm519 = vmand %vm462, %vm483
        %vm520 = vmand %vm463, %vm484
        %vm521 = vmand %vm464, %vm482
        %vm522 = vmand %vm465, %vm483
        %vm523 = vmand %vm466, %vm484
        %vm524 = vmand %vm467, %vm482
        %vm525 = vmand %vm468, %vm483
        %vm526 = vmand %vm469, %vm484
        %vm527 = vmand %vm470, %vm482
        %vm528 = vmand %vm471, %vm483
        %vm529 = vmand %vm472, %vm484
        %vm530 = vmand %vm473, %vm482
        %vm531 = vmand %vm474, %vm483
        %vm532 = vmand %vm475, %vm484
        %vm533 = vmand %vm476, %vm482
        %vm534 = vmand %vm477, %vm483
        %vm535 = vmand %vm478, %vm484
        %vm536 = vmand %vm479, %vm482
        %vm537 = vmand %vm480, %vm483
        %vm538 = vmand %vm481, %vm484
        %v539 = vld [vmem:[%s1] sm:$0xff]
        %v540 = vld [vmem:[%s1 + $0x8] sm:$0xff]
        %v541 = vld [vmem:[%s2] sm:$0x1]
        %v543 = vperm.slane %v541, 0
        %vm545 = vcmask 130048
        %v547 = vsel %vm545, %v295, 0
        %v550 = vsel %vm545, %v296, 0
        %v553 = vsel %vm545, %v297, 0
        %v556 = vsel %vm545, %v298, 0
        %v559 = vsel %vm545, %v299, 0
        %v562 = vsel %vm545, %v300, 0
        %v565 = vsel %vm545, %v301, 0
        %v568 = vsel %vm545, %v302, 0
        %v571 = vsel %vm545, %v303, 0
        %v574 = vsel %vm545, %v304, 0
        %v577 = vsel %vm545, %v305, 0
        %v580 = vsel %vm545, %v306, 0
        %v583 = vsel %vm545, %v307, 0
        %v586 = vsel %vm545, %v308, 0
        %v589 = vsel %vm545, %v309, 0
        %v592 = vsel %vm545, %v310, 0
        %v595 = vsel %vm545, %v311, 0
        %v598 = vsel %vm545, %v312, 0
        %v601 = vsel %vm545, %v313, 0
        %v604 = vsel %vm545, %v314, 0
        %v607 = vsel %vm545, %v315, 0
        %v610 = vsel %vm545, %v316, 0
        %v613 = vsel %vm545, %v317, 0
        %v616 = vsel %vm545, %v318, 0
        %v619 = vsel %vm545, %v319, 0
        %v622 = vsel %vm545, %v320, 0
        %v625 = vsel %vm545, %v321, 0
        %v628 = vsel %vm545, %v322, 0
        %v631 = vsel %vm545, %v323, 0
        %v634 = vsel %vm545, %v324, 0
        %v637 = vsel %vm545, %v325, 0
        %v640 = vsel %vm545, %v326, 0
        %v643 = vsel %vm545, %v327, 0
        %v646 = vsel %vm545, %v328, 0
        %v649 = vsel %vm545, %v329, 0
        %v652 = vsel %vm545, %v330, 0
        %v655 = vsel %vm545, %v331, 0
        %v658 = vsel %vm545, %v332, 0
        %v661 = vsel %vm545, %v333, 0
        %v664 = vsel %vm545, %v334, 0
        %v667 = vsel %vm545, %v335, 0
        %v670 = vsel %vm545, %v336, 0
        %v673 = vsel %vm545, %v337, 0
        %v676 = vsel %vm545, %v338, 0
        %v679 = vsel %vm545, %v339, 0
        %v682 = vsel %vm545, %v340, 0
        %v685 = vsel %vm545, %v341, 0
        %v688 = vsel %vm545, %v342, 0
        %v691 = vsel %vm545, %v343, 0
        %v694 = vsel %vm545, %v344, 0
        %v697 = vsel %vm545, %v345, 0
        %v700 = vsel %vm545, %v346, 0
        %v703 = vsel %vm545, %v347, 0
        %v706 = vsel %vm545, %v348, 0
        %708 = vmatpush.msra.mxu0 0.0
        %709 = vmatpush.msra.mxu0 0.0
        %710 = vmatpush.msra.mxu0 0.0
        %711 = vmatpush.msra.mxu0 0.0
        %712 = vmatpush.msra.mxu0 0.0
        %713 = vmatpush.msra.mxu0 0.0
        %714 = vmatpush.msra.mxu0 0.0
        %715 = vmatpush.msra.mxu0 0.0
        %716 = vmatpush.msra.mxu0 0.0
        %717 = vmatpush.msra.mxu0 0.0
        %718 = vmatpush.msra.mxu0 0.0
        %719 = vmatpush.msra.mxu0 0.0
        %720 = vmatpush.msra.mxu0 0.0
        %721 = vmatpush.msra.mxu0 0.0
        %722 = vmatpush.msra.mxu0 %v540
        %723 = vmatpush.msra.mxu0 %v539
        %724 = vmatmul.f32.gmra.mxu0 %v547
        %v725 = vpop.f32.mrf.mxu0
        %v726 = vadd.f32 %v543, %v725
        %727 = vmatmul.f32.gmra.mxu0 %v550
        %v728 = vpop.f32.mrf.mxu0
        %v729 = vadd.f32 %v543, %v728
        %730 = vmatmul.f32.gmra.mxu0 %v553
        %v731 = vpop.f32.mrf.mxu0
        %v732 = vadd.f32 %v543, %v731
        %733 = vmatmul.f32.gmra.mxu0 %v556
        %v734 = vpop.f32.mrf.mxu0
        %v735 = vadd.f32 %v543, %v734
        %736 = vmatmul.f32.gmra.mxu0 %v559
        %v737 = vpop.f32.mrf.mxu0
        %v738 = vadd.f32 %v543, %v737
        %739 = vmatmul.f32.gmra.mxu0 %v562
        %v740 = vpop.f32.mrf.mxu0
        %v741 = vadd.f32 %v543, %v740
        %742 = vmatmul.f32.gmra.mxu0 %v565
        %v743 = vpop.f32.mrf.mxu0
        %v744 = vadd.f32 %v543, %v743
        %745 = vmatmul.f32.gmra.mxu0 %v568
        %v746 = vpop.f32.mrf.mxu0
        %v747 = vadd.f32 %v543, %v746
        %748 = vmatmul.f32.gmra.mxu0 %v571
        %v749 = vpop.f32.mrf.mxu0
        %v750 = vadd.f32 %v543, %v749
        %751 = vmatmul.f32.gmra.mxu0 %v574
        %v752 = vpop.f32.mrf.mxu0
        %v753 = vadd.f32 %v543, %v752
        %754 = vmatmul.f32.gmra.mxu0 %v577
        %v755 = vpop.f32.mrf.mxu0
        %v756 = vadd.f32 %v543, %v755
        %757 = vmatmul.f32.gmra.mxu0 %v580
        %v758 = vpop.f32.mrf.mxu0
        %v759 = vadd.f32 %v543, %v758
        %760 = vmatmul.f32.gmra.mxu0 %v583
        %v761 = vpop.f32.mrf.mxu0
        %v762 = vadd.f32 %v543, %v761
        %763 = vmatmul.f32.gmra.mxu0 %v586
        %v764 = vpop.f32.mrf.mxu0
        %v765 = vadd.f32 %v543, %v764
        %766 = vmatmul.f32.gmra.mxu0 %v589
        %v767 = vpop.f32.mrf.mxu0
        %v768 = vadd.f32 %v543, %v767
        %769 = vmatmul.f32.gmra.mxu0 %v592
        %v770 = vpop.f32.mrf.mxu0
        %v771 = vadd.f32 %v543, %v770
        %772 = vmatmul.f32.gmra.mxu0 %v595
        %v773 = vpop.f32.mrf.mxu0
        %v774 = vadd.f32 %v543, %v773
        %775 = vmatmul.f32.gmra.mxu0 %v598
        %v776 = vpop.f32.mrf.mxu0
        %v777 = vadd.f32 %v543, %v776
        %778 = vmatmul.f32.gmra.mxu0 %v601
        %v779 = vpop.f32.mrf.mxu0
        %v780 = vadd.f32 %v543, %v779
        %781 = vmatmul.f32.gmra.mxu0 %v604
        %v782 = vpop.f32.mrf.mxu0
        %v783 = vadd.f32 %v543, %v782
        %784 = vmatmul.f32.gmra.mxu0 %v607
        %v785 = vpop.f32.mrf.mxu0
        %v786 = vadd.f32 %v543, %v785
        %787 = vmatmul.f32.gmra.mxu0 %v610
        %v788 = vpop.f32.mrf.mxu0
        %v789 = vadd.f32 %v543, %v788
        %790 = vmatmul.f32.gmra.mxu0 %v613
        %v791 = vpop.f32.mrf.mxu0
        %v792 = vadd.f32 %v543, %v791
        %793 = vmatmul.f32.gmra.mxu0 %v616
        %v794 = vpop.f32.mrf.mxu0
        %v795 = vadd.f32 %v543, %v794
        %796 = vmatmul.f32.gmra.mxu0 %v619
        %v797 = vpop.f32.mrf.mxu0
        %v798 = vadd.f32 %v543, %v797
        %799 = vmatmul.f32.gmra.mxu0 %v622
        %v800 = vpop.f32.mrf.mxu0
        %v801 = vadd.f32 %v543, %v800
        %802 = vmatmul.f32.gmra.mxu0 %v625
        %v803 = vpop.f32.mrf.mxu0
        %v804 = vadd.f32 %v543, %v803
        %805 = vmatmul.f32.gmra.mxu0 %v628
        %v806 = vpop.f32.mrf.mxu0
        %v807 = vadd.f32 %v543, %v806
        %808 = vmatmul.f32.gmra.mxu0 %v631
        %v809 = vpop.f32.mrf.mxu0
        %v810 = vadd.f32 %v543, %v809
        %811 = vmatmul.f32.gmra.mxu0 %v634
        %v812 = vpop.f32.mrf.mxu0
        %v813 = vadd.f32 %v543, %v812
        %814 = vmatmul.f32.gmra.mxu0 %v637
        %v815 = vpop.f32.mrf.mxu0
        %v816 = vadd.f32 %v543, %v815
        %817 = vmatmul.f32.gmra.mxu0 %v640
        %v818 = vpop.f32.mrf.mxu0
        %v819 = vadd.f32 %v543, %v818
        %820 = vmatmul.f32.gmra.mxu0 %v643
        %v821 = vpop.f32.mrf.mxu0
        %v822 = vadd.f32 %v543, %v821
        %823 = vmatmul.f32.gmra.mxu0 %v646
        %v824 = vpop.f32.mrf.mxu0
        %v825 = vadd.f32 %v543, %v824
        %826 = vmatmul.f32.gmra.mxu0 %v649
        %v827 = vpop.f32.mrf.mxu0
        %v828 = vadd.f32 %v543, %v827
        %829 = vmatmul.f32.gmra.mxu0 %v652
        %v830 = vpop.f32.mrf.mxu0
        %v831 = vadd.f32 %v543, %v830
        %832 = vmatmul.f32.gmra.mxu0 %v655
        %v833 = vpop.f32.mrf.mxu0
        %v834 = vadd.f32 %v543, %v833
        %835 = vmatmul.f32.gmra.mxu0 %v658
        %v836 = vpop.f32.mrf.mxu0
        %v837 = vadd.f32 %v543, %v836
        %838 = vmatmul.f32.gmra.mxu0 %v661
        %v839 = vpop.f32.mrf.mxu0
        %v840 = vadd.f32 %v543, %v839
        %841 = vmatmul.f32.gmra.mxu0 %v664
        %v842 = vpop.f32.mrf.mxu0
        %v843 = vadd.f32 %v543, %v842
        %844 = vmatmul.f32.gmra.mxu0 %v667
        %v845 = vpop.f32.mrf.mxu0
        %v846 = vadd.f32 %v543, %v845
        %847 = vmatmul.f32.gmra.mxu0 %v670
        %v848 = vpop.f32.mrf.mxu0
        %v849 = vadd.f32 %v543, %v848
        %850 = vmatmul.f32.gmra.mxu0 %v673
        %v851 = vpop.f32.mrf.mxu0
        %v852 = vadd.f32 %v543, %v851
        %853 = vmatmul.f32.gmra.mxu0 %v676
        %v854 = vpop.f32.mrf.mxu0
        %v855 = vadd.f32 %v543, %v854
        %856 = vmatmul.f32.gmra.mxu0 %v679
        %v857 = vpop.f32.mrf.mxu0
        %v858 = vadd.f32 %v543, %v857
        %859 = vmatmul.f32.gmra.mxu0 %v682
        %v860 = vpop.f32.mrf.mxu0
        %v861 = vadd.f32 %v543, %v860
        %862 = vmatmul.f32.gmra.mxu0 %v685
        %v863 = vpop.f32.mrf.mxu0
        %v864 = vadd.f32 %v543, %v863
        %865 = vmatmul.f32.gmra.mxu0 %v688
        %v866 = vpop.f32.mrf.mxu0
        %v867 = vadd.f32 %v543, %v866
        %868 = vmatmul.f32.gmra.mxu0 %v691
        %v869 = vpop.f32.mrf.mxu0
        %v870 = vadd.f32 %v543, %v869
        %871 = vmatmul.f32.gmra.mxu0 %v694
        %v872 = vpop.f32.mrf.mxu0
        %v873 = vadd.f32 %v543, %v872
        %874 = vmatmul.f32.gmra.mxu0 %v697
        %v875 = vpop.f32.mrf.mxu0
        %v876 = vadd.f32 %v543, %v875
        %877 = vmatmul.f32.gmra.mxu0 %v700
        %v878 = vpop.f32.mrf.mxu0
        %v879 = vadd.f32 %v543, %v878
        %880 = vmatmul.f32.gmra.mxu0 %v703
        %v881 = vpop.f32.mrf.mxu0
        %v882 = vadd.f32 %v543, %v881
        %883 = vmatmul.f32.gmra.mxu0 %v706
        %v884 = vpop.f32.mrf.mxu0
        %v885 = vadd.f32 %v543, %v884
        %886 = vdwg.mxu0
        %v887 = vmax.f32 %v726, 0.0
        %v888 = vmax.f32 %v729, 0.0
        %v889 = vmax.f32 %v732, 0.0
        %v890 = vmax.f32 %v735, 0.0
        %v891 = vmax.f32 %v738, 0.0
        %v892 = vmax.f32 %v741, 0.0
        %v893 = vmax.f32 %v744, 0.0
        %v894 = vmax.f32 %v747, 0.0
        %v895 = vmax.f32 %v750, 0.0
        %v896 = vmax.f32 %v753, 0.0
        %v897 = vmax.f32 %v756, 0.0
        %v898 = vmax.f32 %v759, 0.0
        %v899 = vmax.f32 %v762, 0.0
        %v900 = vmax.f32 %v765, 0.0
        %v901 = vmax.f32 %v768, 0.0
        %v902 = vmax.f32 %v771, 0.0
        %v903 = vmax.f32 %v774, 0.0
        %v904 = vmax.f32 %v777, 0.0
        %v905 = vmax.f32 %v780, 0.0
        %v906 = vmax.f32 %v783, 0.0
        %v907 = vmax.f32 %v786, 0.0
        %v908 = vmax.f32 %v789, 0.0
        %v909 = vmax.f32 %v792, 0.0
        %v910 = vmax.f32 %v795, 0.0
        %v911 = vmax.f32 %v798, 0.0
        %v912 = vmax.f32 %v801, 0.0
        %v913 = vmax.f32 %v804, 0.0
        %v914 = vmax.f32 %v807, 0.0
        %v915 = vmax.f32 %v810, 0.0
        %v916 = vmax.f32 %v813, 0.0
        %v917 = vmax.f32 %v816, 0.0
        %v918 = vmax.f32 %v819, 0.0
        %v919 = vmax.f32 %v822, 0.0
        %v920 = vmax.f32 %v825, 0.0
        %v921 = vmax.f32 %v828, 0.0
        %v922 = vmax.f32 %v831, 0.0
        %v923 = vmax.f32 %v834, 0.0
        %v924 = vmax.f32 %v837, 0.0
        %v925 = vmax.f32 %v840, 0.0
        %v926 = vmax.f32 %v843, 0.0
        %v927 = vmax.f32 %v846, 0.0
        %v928 = vmax.f32 %v849, 0.0
        %v929 = vmax.f32 %v852, 0.0
        %v930 = vmax.f32 %v855, 0.0
        %v931 = vmax.f32 %v858, 0.0
        %v932 = vmax.f32 %v861, 0.0
        %v933 = vmax.f32 %v864, 0.0
        %v934 = vmax.f32 %v867, 0.0
        %v935 = vmax.f32 %v870, 0.0
        %v936 = vmax.f32 %v873, 0.0
        %v937 = vmax.f32 %v876, 0.0
        %v938 = vmax.f32 %v879, 0.0
        %v939 = vmax.f32 %v882, 0.0
        %v940 = vmax.f32 %v885, 0.0
        %v941 = vmin.f32 %v887, 6.0
        %v942 = vmin.f32 %v888, 6.0
        %v943 = vmin.f32 %v889, 6.0
        %v944 = vmin.f32 %v890, 6.0
        %v945 = vmin.f32 %v891, 6.0
        %v946 = vmin.f32 %v892, 6.0
        %v947 = vmin.f32 %v893, 6.0
        %v948 = vmin.f32 %v894, 6.0
        %v949 = vmin.f32 %v895, 6.0
        %v950 = vmin.f32 %v896, 6.0
        %v951 = vmin.f32 %v897, 6.0
        %v952 = vmin.f32 %v898, 6.0
        %v953 = vmin.f32 %v899, 6.0
        %v954 = vmin.f32 %v900, 6.0
        %v955 = vmin.f32 %v901, 6.0
        %v956 = vmin.f32 %v902, 6.0
        %v957 = vmin.f32 %v903, 6.0
        %v958 = vmin.f32 %v904, 6.0
        %v959 = vmin.f32 %v905, 6.0
        %v960 = vmin.f32 %v906, 6.0
        %v961 = vmin.f32 %v907, 6.0
        %v962 = vmin.f32 %v908, 6.0
        %v963 = vmin.f32 %v909, 6.0
        %v964 = vmin.f32 %v910, 6.0
        %v965 = vmin.f32 %v911, 6.0
        %v966 = vmin.f32 %v912, 6.0
        %v967 = vmin.f32 %v913, 6.0
        %v968 = vmin.f32 %v914, 6.0
        %v969 = vmin.f32 %v915, 6.0
        %v970 = vmin.f32 %v916, 6.0
        %v971 = vmin.f32 %v917, 6.0
        %v972 = vmin.f32 %v918, 6.0
        %v973 = vmin.f32 %v919, 6.0
        %v974 = vmin.f32 %v920, 6.0
        %v975 = vmin.f32 %v921, 6.0
        %v976 = vmin.f32 %v922, 6.0
        %v977 = vmin.f32 %v923, 6.0
        %v978 = vmin.f32 %v924, 6.0
        %v979 = vmin.f32 %v925, 6.0
        %v980 = vmin.f32 %v926, 6.0
        %v981 = vmin.f32 %v927, 6.0
        %v982 = vmin.f32 %v928, 6.0
        %v983 = vmin.f32 %v929, 6.0
        %v984 = vmin.f32 %v930, 6.0
        %v985 = vmin.f32 %v931, 6.0
        %v986 = vmin.f32 %v932, 6.0
        %v987 = vmin.f32 %v933, 6.0
        %v988 = vmin.f32 %v934, 6.0
        %v989 = vmin.f32 %v935, 6.0
        %v990 = vmin.f32 %v936, 6.0
        %v991 = vmin.f32 %v937, 6.0
        %v992 = vmin.f32 %v938, 6.0
        %v993 = vmin.f32 %v939, 6.0
        %v994 = vmin.f32 %v940, 6.0
        %v995 = vsel %vm485, 1, 0
        %v996 = vsel %vm486, 1, 0
        %v997 = vsel %vm487, 1, 0
        %v998 = vsel %vm488, 1, 0
        %v999 = vsel %vm489, 1, 0
        %v1000 = vsel %vm490, 1, 0
        %v1001 = vsel %vm491, 1, 0
        %v1002 = vsel %vm492, 1, 0
        %v1003 = vsel %vm493, 1, 0
        %v1004 = vsel %vm494, 1, 0
        %v1005 = vsel %vm495, 1, 0
        %v1006 = vsel %vm496, 1, 0
        %v1007 = vsel %vm497, 1, 0
        %v1008 = vsel %vm498, 1, 0
        %v1009 = vsel %vm499, 1, 0
        %v1010 = vsel %vm500, 1, 0
        %v1011 = vsel %vm501, 1, 0
        %v1012 = vsel %vm502, 1, 0
        %v1013 = vsel %vm503, 1, 0
        %v1014 = vsel %vm504, 1, 0
        %v1015 = vsel %vm505, 1, 0
        %v1016 = vsel %vm506, 1, 0
        %v1017 = vsel %vm507, 1, 0
        %v1018 = vsel %vm508, 1, 0
        %v1019 = vsel %vm509, 1, 0
        %v1020 = vsel %vm510, 1, 0
        %v1021 = vsel %vm511, 1, 0
        %v1022 = vsel %vm512, 1, 0
        %v1023 = vsel %vm513, 1, 0
        %v1024 = vsel %vm514, 1, 0
        %v1025 = vsel %vm515, 1, 0
        %v1026 = vsel %vm516, 1, 0
        %v1027 = vsel %vm517, 1, 0
        %v1028 = vsel %vm518, 1, 0
        %v1029 = vsel %vm519, 1, 0
        %v1030 = vsel %vm520, 1, 0
        %v1031 = vsel %vm521, 1, 0
        %v1032 = vsel %vm522, 1, 0
        %v1033 = vsel %vm523, 1, 0
        %v1034 = vsel %vm524, 1, 0
        %v1035 = vsel %vm525, 1, 0
        %v1036 = vsel %vm526, 1, 0
        %v1037 = vsel %vm527, 1, 0
        %v1038 = vsel %vm528, 1, 0
        %v1039 = vsel %vm529, 1, 0
        %v1040 = vsel %vm530, 1, 0
        %v1041 = vsel %vm531, 1, 0
        %v1042 = vsel %vm532, 1, 0
        %v1043 = vsel %vm533, 1, 0
        %v1044 = vsel %vm534, 1, 0
        %v1045 = vsel %vm535, 1, 0
        %v1046 = vsel %vm536, 1, 0
        %v1047 = vsel %vm537, 1, 0
        %v1048 = vsel %vm538, 1, 0
        %vm1049 = vcmp.eq.s32.totalorder %v995, 1
        %vm1050 = vcmp.eq.s32.totalorder %v996, 1
        %vm1051 = vcmp.eq.s32.totalorder %v997, 1
        %vm1052 = vcmp.eq.s32.totalorder %v998, 1
        %vm1053 = vcmp.eq.s32.totalorder %v999, 1
        %vm1054 = vcmp.eq.s32.totalorder %v1000, 1
        %vm1055 = vcmp.eq.s32.totalorder %v1001, 1
        %vm1056 = vcmp.eq.s32.totalorder %v1002, 1
        %vm1057 = vcmp.eq.s32.totalorder %v1003, 1
        %vm1058 = vcmp.eq.s32.totalorder %v1004, 1
        %vm1059 = vcmp.eq.s32.totalorder %v1005, 1
        %vm1060 = vcmp.eq.s32.totalorder %v1006, 1
        %vm1061 = vcmp.eq.s32.totalorder %v1007, 1
        %vm1062 = vcmp.eq.s32.totalorder %v1008, 1
        %vm1063 = vcmp.eq.s32.totalorder %v1009, 1
        %vm1064 = vcmp.eq.s32.totalorder %v1010, 1
        %vm1065 = vcmp.eq.s32.totalorder %v1011, 1
        %vm1066 = vcmp.eq.s32.totalorder %v1012, 1
        %vm1067 = vcmp.eq.s32.totalorder %v1013, 1
        %vm1068 = vcmp.eq.s32.totalorder %v1014, 1
        %vm1069 = vcmp.eq.s32.totalorder %v1015, 1
        %vm1070 = vcmp.eq.s32.totalorder %v1016, 1
        %vm1071 = vcmp.eq.s32.totalorder %v1017, 1
        %vm1072 = vcmp.eq.s32.totalorder %v1018, 1
        %vm1073 = vcmp.eq.s32.totalorder %v1019, 1
        %vm1074 = vcmp.eq.s32.totalorder %v1020, 1
        %vm1075 = vcmp.eq.s32.totalorder %v1021, 1
        %vm1076 = vcmp.eq.s32.totalorder %v1022, 1
        %vm1077 = vcmp.eq.s32.totalorder %v1023, 1
        %vm1078 = vcmp.eq.s32.totalorder %v1024, 1
        %vm1079 = vcmp.eq.s32.totalorder %v1025, 1
        %vm1080 = vcmp.eq.s32.totalorder %v1026, 1
        %vm1081 = vcmp.eq.s32.totalorder %v1027, 1
        %vm1082 = vcmp.eq.s32.totalorder %v1028, 1
        %vm1083 = vcmp.eq.s32.totalorder %v1029, 1
        %vm1084 = vcmp.eq.s32.totalorder %v1030, 1
        %vm1085 = vcmp.eq.s32.totalorder %v1031, 1
        %vm1086 = vcmp.eq.s32.totalorder %v1032, 1
        %vm1087 = vcmp.eq.s32.totalorder %v1033, 1
        %vm1088 = vcmp.eq.s32.totalorder %v1034, 1
        %vm1089 = vcmp.eq.s32.totalorder %v1035, 1
        %vm1090 = vcmp.eq.s32.totalorder %v1036, 1
        %vm1091 = vcmp.eq.s32.totalorder %v1037, 1
        %vm1092 = vcmp.eq.s32.totalorder %v1038, 1
        %vm1093 = vcmp.eq.s32.totalorder %v1039, 1
        %vm1094 = vcmp.eq.s32.totalorder %v1040, 1
        %vm1095 = vcmp.eq.s32.totalorder %v1041, 1
        %vm1096 = vcmp.eq.s32.totalorder %v1042, 1
        %vm1097 = vcmp.eq.s32.totalorder %v1043, 1
        %vm1098 = vcmp.eq.s32.totalorder %v1044, 1
        %vm1099 = vcmp.eq.s32.totalorder %v1045, 1
        %vm1100 = vcmp.eq.s32.totalorder %v1046, 1
        %vm1101 = vcmp.eq.s32.totalorder %v1047, 1
        %vm1102 = vcmp.eq.s32.totalorder %v1048, 1
        %v1103 = vsel %vm1049, %v941, 0.0
        %v1104 = vsel %vm1050, %v942, 0.0
        %v1105 = vsel %vm1051, %v943, 0.0
        %v1106 = vsel %vm1052, %v944, 0.0
        %v1107 = vsel %vm1053, %v945, 0.0
        %v1108 = vsel %vm1054, %v946, 0.0
        %v1109 = vsel %vm1055, %v947, 0.0
        %v1110 = vsel %vm1056, %v948, 0.0
        %v1111 = vsel %vm1057, %v949, 0.0
        %v1112 = vsel %vm1058, %v950, 0.0
        %v1113 = vsel %vm1059, %v951, 0.0
        %v1114 = vsel %vm1060, %v952, 0.0
        %v1115 = vsel %vm1061, %v953, 0.0
        %v1116 = vsel %vm1062, %v954, 0.0
        %v1117 = vsel %vm1063, %v955, 0.0
        %v1118 = vsel %vm1064, %v956, 0.0
        %v1119 = vsel %vm1065, %v957, 0.0
        %v1120 = vsel %vm1066, %v958, 0.0
        %v1121 = vsel %vm1067, %v959, 0.0
        %v1122 = vsel %vm1068, %v960, 0.0
        %v1123 = vsel %vm1069, %v961, 0.0
        %v1124 = vsel %vm1070, %v962, 0.0
        %v1125 = vsel %vm1071, %v963, 0.0
        %v1126 = vsel %vm1072, %v964, 0.0
        %v1127 = vsel %vm1073, %v965, 0.0
        %v1128 = vsel %vm1074, %v966, 0.0
        %v1129 = vsel %vm1075, %v967, 0.0
        %v1130 = vsel %vm1076, %v968, 0.0
        %v1131 = vsel %vm1077, %v969, 0.0
        %v1132 = vsel %vm1078, %v970, 0.0
        %v1133 = vsel %vm1079, %v971, 0.0
        %v1134 = vsel %vm1080, %v972, 0.0
        %v1135 = vsel %vm1081, %v973, 0.0
        %v1136 = vsel %vm1082, %v974, 0.0
        %v1137 = vsel %vm1083, %v975, 0.0
        %v1138 = vsel %vm1084, %v976, 0.0
        %v1139 = vsel %vm1085, %v977, 0.0
        %v1140 = vsel %vm1086, %v978, 0.0
        %v1141 = vsel %vm1087, %v979, 0.0
        %v1142 = vsel %vm1088, %v980, 0.0
        %v1143 = vsel %vm1089, %v981, 0.0
        %v1144 = vsel %vm1090, %v982, 0.0
        %v1145 = vsel %vm1091, %v983, 0.0
        %v1146 = vsel %vm1092, %v984, 0.0
        %v1147 = vsel %vm1093, %v985, 0.0
        %v1148 = vsel %vm1094, %v986, 0.0
        %v1149 = vsel %vm1095, %v987, 0.0
        %v1150 = vsel %vm1096, %v988, 0.0
        %v1151 = vsel %vm1097, %v989, 0.0
        %v1152 = vsel %vm1098, %v990, 0.0
        %v1153 = vsel %vm1099, %v991, 0.0
        %v1154 = vsel %vm1100, %v992, 0.0
        %v1155 = vsel %vm1101, %v993, 0.0
        %v1156 = vsel %vm1102, %v994, 0.0
        %1157 = vst [vmem:[#allocation2] sm:$0xff] %v1103
        %1158 = vst [vmem:[#allocation2 + $0x8] sm:$0xff] %v1104
        %1159 = vst [vmem:[#allocation2 + $0x10] sm:$0xff] %v1105
        %1160 = vst [vmem:[#allocation2 + $0x18] sm:$0xff] %v1106
        %1161 = vst [vmem:[#allocation2 + $0x20] sm:$0xff] %v1107
        %1162 = vst [vmem:[#allocation2 + $0x28] sm:$0xff] %v1108
        %1163 = vst [vmem:[#allocation2 + $0x30] sm:$0xff] %v1109
        %1164 = vst [vmem:[#allocation2 + $0x38] sm:$0xff] %v1110
        %1165 = vst [vmem:[#allocation2 + $0x40] sm:$0xff] %v1111
        %1166 = vst [vmem:[#allocation2 + $0x48] sm:$0xff] %v1112
        %1167 = vst [vmem:[#allocation2 + $0x50] sm:$0xff] %v1113
        %1168 = vst [vmem:[#allocation2 + $0x58] sm:$0xff] %v1114
        %1169 = vst [vmem:[#allocation2 + $0x60] sm:$0xff] %v1115
        %1170 = vst [vmem:[#allocation2 + $0x68] sm:$0xff] %v1116
        %1171 = vst [vmem:[#allocation2 + $0x70] sm:$0xff] %v1117
        %1172 = vst [vmem:[#allocation2 + $0x78] sm:$0xff] %v1118
        %1173 = vst [vmem:[#allocation2 + $0x80] sm:$0xff] %v1119
        %1174 = vst [vmem:[#allocation2 + $0x88] sm:$0xff] %v1120
        %1175 = vst [vmem:[#allocation2 + $0x90] sm:$0xff] %v1121
        %1176 = vst [vmem:[#allocation2 + $0x98] sm:$0xff] %v1122
        %1177 = vst [vmem:[#allocation2 + $0xa0] sm:$0xff] %v1123
        %1178 = vst [vmem:[#allocation2 + $0xa8] sm:$0xff] %v1124
        %1179 = vst [vmem:[#allocation2 + $0xb0] sm:$0xff] %v1125
        %1180 = vst [vmem:[#allocation2 + $0xb8] sm:$0xff] %v1126
        %1181 = vst [vmem:[#allocation2 + $0xc0] sm:$0xff] %v1127
        %1182 = vst [vmem:[#allocation2 + $0xc8] sm:$0xff] %v1128
        %1183 = vst [vmem:[#allocation2 + $0xd0] sm:$0xff] %v1129
        %1184 = vst [vmem:[#allocation2 + $0xd8] sm:$0xff] %v1130
        %1185 = vst [vmem:[#allocation2 + $0xe0] sm:$0xff] %v1131
        %1186 = vst [vmem:[#allocation2 + $0xe8] sm:$0xff] %v1132
        %1187 = vst [vmem:[#allocation2 + $0xf0] sm:$0xff] %v1133
        %1188 = vst [vmem:[#allocation2 + $0xf8] sm:$0xff] %v1134
        %1189 = vst [vmem:[#allocation2 + $0x100] sm:$0xff] %v1135
        %1190 = vst [vmem:[#allocation2 + $0x108] sm:$0xff] %v1136
        %1191 = vst [vmem:[#allocation2 + $0x110] sm:$0xff] %v1137
        %1192 = vst [vmem:[#allocation2 + $0x118] sm:$0xff] %v1138
        %1193 = vst [vmem:[#allocation2 + $0x120] sm:$0xff] %v1139
        %1194 = vst [vmem:[#allocation2 + $0x128] sm:$0xff] %v1140
        %1195 = vst [vmem:[#allocation2 + $0x130] sm:$0xff] %v1141
        %1196 = vst [vmem:[#allocation2 + $0x138] sm:$0xff] %v1142
        %1197 = vst [vmem:[#allocation2 + $0x140] sm:$0xff] %v1143
        %1198 = vst [vmem:[#allocation2 + $0x148] sm:$0xff] %v1144
        %1199 = vst [vmem:[#allocation2 + $0x150] sm:$0xff] %v1145
        %1200 = vst [vmem:[#allocation2 + $0x158] sm:$0xff] %v1146
        %1201 = vst [vmem:[#allocation2 + $0x160] sm:$0xff] %v1147
        %1202 = vst [vmem:[#allocation2 + $0x168] sm:$0xff] %v1148
        %1203 = vst [vmem:[#allocation2 + $0x170] sm:$0xff] %v1149
        %1204 = vst [vmem:[#allocation2 + $0x178] sm:$0xff] %v1150
        %1205 = vst [vmem:[#allocation2 + $0x180] sm:$0xff] %v1151
        %1206 = vst [vmem:[#allocation2 + $0x188] sm:$0xff] %v1152
        %1207 = vst [vmem:[#allocation2 + $0x190] sm:$0xff] %v1153
        %1208 = vst [vmem:[#allocation2 + $0x198] sm:$0xff] %v1154
        %1209 = vst [vmem:[#allocation2 + $0x1a0] sm:$0xff] %v1155
        %1210 = vst [vmem:[#allocation2 + $0x1a8] sm:$0xff] %v1156
        %v1211 = vld [vmem:[%s3] sm:$0xff]
        %v1212 = vld [vmem:[%s3 + $0x8] sm:$0x1]
        %v1213 = vld [vmem:[%s4] sm:$0x1]
        %v1214 = vld [vmem:[%s5] sm:$0xff]
        %v1215 = vld [vmem:[%s5 + $0x8] sm:$0xff]
        %v1216 = vld [vmem:[%s5 + $0x10] sm:$0xff]
        %v1217 = vld [vmem:[%s5 + $0x18] sm:$0xff]
        %v1218 = vld [vmem:[%s5 + $0x20] sm:$0xff]
        %v1219 = vld [vmem:[%s5 + $0x28] sm:$0xff]
        %v1220 = vld [vmem:[%s5 + $0x30] sm:$0xff]
        %v1221 = vld [vmem:[%s5 + $0x38] sm:$0xff]
        %v1222 = vld [vmem:[%s5 + $0x40] sm:$0xff]
        %v1223 = vld [vmem:[%s5 + $0x48] sm:$0xff]
        %v1224 = vld [vmem:[%s5 + $0x50] sm:$0xff]
        %v1225 = vld [vmem:[%s5 + $0x58] sm:$0xff]
        %v1226 = vld [vmem:[%s5 + $0x60] sm:$0xff]
        %v1227 = vld [vmem:[%s5 + $0x68] sm:$0xff]
        %v1228 = vld [vmem:[%s5 + $0x70] sm:$0xff]
        %v1229 = vld [vmem:[%s5 + $0x78] sm:$0xff]
        %v1230 = vld [vmem:[#allocation2] sm:$0xff]
        %v1231 = vld [vmem:[#allocation2 + $0x8] sm:$0xff]
        %v1232 = vld [vmem:[#allocation2 + $0x18] sm:$0xff]
        %v1233 = vld [vmem:[#allocation2 + $0x20] sm:$0xff]
        %v1234 = vld [vmem:[#allocation2 + $0x30] sm:$0xff]
        %v1235 = vld [vmem:[#allocation2 + $0x38] sm:$0xff]
        %v1236 = vld [vmem:[#allocation2 + $0x48] sm:$0xff]
        %v1237 = vld [vmem:[#allocation2 + $0x50] sm:$0xff]
        %v1238 = vld [vmem:[#allocation2 + $0x60] sm:$0xff]
        %v1239 = vld [vmem:[#allocation2 + $0x68] sm:$0xff]
        %v1240 = vld [vmem:[#allocation2 + $0x78] sm:$0xff]
        %v1241 = vld [vmem:[#allocation2 + $0x80] sm:$0xff]
        %v1242 = vld [vmem:[#allocation2 + $0x90] sm:$0xff]
        %v1243 = vld [vmem:[#allocation2 + $0x98] sm:$0xff]
        %v1244 = vld [vmem:[#allocation2 + $0xa8] sm:$0xff]
        %v1245 = vld [vmem:[#allocation2 + $0xb0] sm:$0xff]
        %v1246 = vperm.slane %v1211, 0
        %v1247 = vmul.f32 %v1230, %v1246
        %v1248 = vmul.f32 %v1231, %v1246
        %v1249 = vmul.f32 %v1232, %v1246
        %v1250 = vmul.f32 %v1233, %v1246
        %v1251 = vmul.f32 %v1234, %v1246
        %v1252 = vmul.f32 %v1235, %v1246
        %v1253 = vmul.f32 %v1236, %v1246
        %v1254 = vmul.f32 %v1237, %v1246
        %v1255 = vmul.f32 %v1238, %v1246
        %v1256 = vmul.f32 %v1239, %v1246
        %v1257 = vmul.f32 %v1240, %v1246
        %v1258 = vmul.f32 %v1241, %v1246
        %v1259 = vmul.f32 %v1242, %v1246
        %v1260 = vmul.f32 %v1243, %v1246
        %v1261 = vmul.f32 %v1244, %v1246
        %v1262 = vmul.f32 %v1245, %v1246
        %v1263 = vadd.f32 %v1247, 0.0
        %v1264 = vadd.f32 %v1248, 0.0
        %v1265 = vadd.f32 %v1249, 0.0
        %v1266 = vadd.f32 %v1250, 0.0
        %v1267 = vadd.f32 %v1251, 0.0
        %v1268 = vadd.f32 %v1252, 0.0
        %v1269 = vadd.f32 %v1253, 0.0
        %v1270 = vadd.f32 %v1254, 0.0
        %v1271 = vadd.f32 %v1255, 0.0
        %v1272 = vadd.f32 %v1256, 0.0
        %v1273 = vadd.f32 %v1257, 0.0
        %v1274 = vadd.f32 %v1258, 0.0
        %v1275 = vadd.f32 %v1259, 0.0
        %v1276 = vadd.f32 %v1260, 0.0
        %v1277 = vadd.f32 %v1261, 0.0
        %v1278 = vadd.f32 %v1262, 0.0
        %v1279 = vld [vmem:[#allocation2 + $0x1] sm:$0xff]
        %v1280 = vld [vmem:[#allocation2 + $0x9] sm:$0xff]
        %v1281 = vld [vmem:[#allocation2 + $0x19] sm:$0xff]
        %v1282 = vld [vmem:[#allocation2 + $0x21] sm:$0xff]
        %v1283 = vld [vmem:[#allocation2 + $0x31] sm:$0xff]
        %v1284 = vld [vmem:[#allocation2 + $0x39] sm:$0xff]
        %v1285 = vld [vmem:[#allocation2 + $0x49] sm:$0xff]
        %v1286 = vld [vmem:[#allocation2 + $0x51] sm:$0xff]
        %v1287 = vld [vmem:[#allocation2 + $0x61] sm:$0xff]
        %v1288 = vld [vmem:[#allocation2 + $0x69] sm:$0xff]
        %v1289 = vld [vmem:[#allocation2 + $0x79] sm:$0xff]
        %v1290 = vld [vmem:[#allocation2 + $0x81] sm:$0xff]
        %v1291 = vld [vmem:[#allocation2 + $0x91] sm:$0xff]
        %v1292 = vld [vmem:[#allocation2 + $0x99] sm:$0xff]
        %v1293 = vld [vmem:[#allocation2 + $0xa9] sm:$0xff]
        %v1294 = vld [vmem:[#allocation2 + $0xb1] sm:$0xff]
        %v1295 = vperm.slane %v1211, 1
        %v1296 = vmul.f32 %v1279, %v1295
        %v1297 = vmul.f32 %v1280, %v1295
        %v1298 = vmul.f32 %v1281, %v1295
        %v1299 = vmul.f32 %v1282, %v1295
        %v1300 = vmul.f32 %v1283, %v1295
        %v1301 = vmul.f32 %v1284, %v1295
        %v1302 = vmul.f32 %v1285, %v1295
        %v1303 = vmul.f32 %v1286, %v1295
        %v1304 = vmul.f32 %v1287, %v1295
        %v1305 = vmul.f32 %v1288, %v1295
        %v1306 = vmul.f32 %v1289, %v1295
        %v1307 = vmul.f32 %v1290, %v1295
        %v1308 = vmul.f32 %v1291, %v1295
        %v1309 = vmul.f32 %v1292, %v1295
        %v1310 = vmul.f32 %v1293, %v1295
        %v1311 = vmul.f32 %v1294, %v1295
        %v1312 = vadd.f32 %v1263, %v1296
        %v1313 = vadd.f32 %v1264, %v1297
        %v1314 = vadd.f32 %v1265, %v1298
        %v1315 = vadd.f32 %v1266, %v1299
        %v1316 = vadd.f32 %v1267, %v1300
        %v1317 = vadd.f32 %v1268, %v1301
        %v1318 = vadd.f32 %v1269, %v1302
        %v1319 = vadd.f32 %v1270, %v1303
        %v1320 = vadd.f32 %v1271, %v1304
        %v1321 = vadd.f32 %v1272, %v1305
        %v1322 = vadd.f32 %v1273, %v1306
        %v1323 = vadd.f32 %v1274, %v1307
        %v1324 = vadd.f32 %v1275, %v1308
        %v1325 = vadd.f32 %v1276, %v1309
        %v1326 = vadd.f32 %v1277, %v1310
        %v1327 = vadd.f32 %v1278, %v1311
        %v1328 = vld [vmem:[#allocation2 + $0x2] sm:$0xff]
        %v1329 = vld [vmem:[#allocation2 + $0xa] sm:$0xff]
        %v1330 = vld [vmem:[#allocation2 + $0x1a] sm:$0xff]
        %v1331 = vld [vmem:[#allocation2 + $0x22] sm:$0xff]
        %v1332 = vld [vmem:[#allocation2 + $0x32] sm:$0xff]
        %v1333 = vld [vmem:[#allocation2 + $0x3a] sm:$0xff]
        %v1334 = vld [vmem:[#allocation2 + $0x4a] sm:$0xff]
        %v1335 = vld [vmem:[#allocation2 + $0x52] sm:$0xff]
        %v1336 = vld [vmem:[#allocation2 + $0x62] sm:$0xff]
        %v1337 = vld [vmem:[#allocation2 + $0x6a] sm:$0xff]
        %v1338 = vld [vmem:[#allocation2 + $0x7a] sm:$0xff]
        %v1339 = vld [vmem:[#allocation2 + $0x82] sm:$0xff]
        %v1340 = vld [vmem:[#allocation2 + $0x92] sm:$0xff]
        %v1341 = vld [vmem:[#allocation2 + $0x9a] sm:$0xff]
        %v1342 = vld [vmem:[#allocation2 + $0xaa] sm:$0xff]
        %v1343 = vld [vmem:[#allocation2 + $0xb2] sm:$0xff]
        %v1344 = vperm.slane %v1211, 2
        %v1345 = vmul.f32 %v1328, %v1344
        %v1346 = vmul.f32 %v1329, %v1344
        %v1347 = vmul.f32 %v1330, %v1344
        %v1348 = vmul.f32 %v1331, %v1344
        %v1349 = vmul.f32 %v1332, %v1344
        %v1350 = vmul.f32 %v1333, %v1344
        %v1351 = vmul.f32 %v1334, %v1344
        %v1352 = vmul.f32 %v1335, %v1344
        %v1353 = vmul.f32 %v1336, %v1344
        %v1354 = vmul.f32 %v1337, %v1344
        %v1355 = vmul.f32 %v1338, %v1344
        %v1356 = vmul.f32 %v1339, %v1344
        %v1357 = vmul.f32 %v1340, %v1344
        %v1358 = vmul.f32 %v1341, %v1344
        %v1359 = vmul.f32 %v1342, %v1344
        %v1360 = vmul.f32 %v1343, %v1344
        %v1361 = vadd.f32 %v1312, %v1345
        %v1362 = vadd.f32 %v1313, %v1346
        %v1363 = vadd.f32 %v1314, %v1347
        %v1364 = vadd.f32 %v1315, %v1348
        %v1365 = vadd.f32 %v1316, %v1349
        %v1366 = vadd.f32 %v1317, %v1350
        %v1367 = vadd.f32 %v1318, %v1351
        %v1368 = vadd.f32 %v1319, %v1352
        %v1369 = vadd.f32 %v1320, %v1353
        %v1370 = vadd.f32 %v1321, %v1354
        %v1371 = vadd.f32 %v1322, %v1355
        %v1372 = vadd.f32 %v1323, %v1356
        %v1373 = vadd.f32 %v1324, %v1357
        %v1374 = vadd.f32 %v1325, %v1358
        %v1375 = vadd.f32 %v1326, %v1359
        %v1376 = vadd.f32 %v1327, %v1360
        %s1377 = scalar_lea.vmem [#allocation2], 24
        %v1378 = vld [vmem:[%s1377] sm:$0xff]
        %v1379 = vld [vmem:[%s1377 + $0x8] sm:$0xff]
        %v1380 = vld [vmem:[%s1377 + $0x18] sm:$0xff]
        %v1381 = vld [vmem:[%s1377 + $0x20] sm:$0xff]
        %v1382 = vld [vmem:[%s1377 + $0x30] sm:$0xff]
        %v1383 = vld [vmem:[%s1377 + $0x38] sm:$0xff]
        %v1384 = vld [vmem:[%s1377 + $0x48] sm:$0xff]
        %v1385 = vld [vmem:[%s1377 + $0x50] sm:$0xff]
        %v1386 = vld [vmem:[%s1377 + $0x60] sm:$0xff]
        %v1387 = vld [vmem:[%s1377 + $0x68] sm:$0xff]
        %v1388 = vld [vmem:[%s1377 + $0x78] sm:$0xff]
        %v1389 = vld [vmem:[%s1377 + $0x80] sm:$0xff]
        %v1390 = vld [vmem:[%s1377 + $0x90] sm:$0xff]
        %v1391 = vld [vmem:[%s1377 + $0x98] sm:$0xff]
        %v1392 = vld [vmem:[%s1377 + $0xa8] sm:$0xff]
        %v1393 = vld [vmem:[%s1377 + $0xb0] sm:$0xff]
        %v1394 = vperm.slane %v1211, 3
        %v1395 = vmul.f32 %v1378, %v1394
        %v1396 = vmul.f32 %v1379, %v1394
        %v1397 = vmul.f32 %v1380, %v1394
        %v1398 = vmul.f32 %v1381, %v1394
        %v1399 = vmul.f32 %v1382, %v1394
        %v1400 = vmul.f32 %v1383, %v1394
        %v1401 = vmul.f32 %v1384, %v1394
        %v1402 = vmul.f32 %v1385, %v1394
        %v1403 = vmul.f32 %v1386, %v1394
        %v1404 = vmul.f32 %v1387, %v1394
        %v1405 = vmul.f32 %v1388, %v1394
        %v1406 = vmul.f32 %v1389, %v1394
        %v1407 = vmul.f32 %v1390, %v1394
        %v1408 = vmul.f32 %v1391, %v1394
        %v1409 = vmul.f32 %v1392, %v1394
        %v1410 = vmul.f32 %v1393, %v1394
        %v1411 = vadd.f32 %v1361, %v1395
        %v1412 = vadd.f32 %v1362, %v1396
        %v1413 = vadd.f32 %v1363, %v1397
        %v1414 = vadd.f32 %v1364, %v1398
        %v1415 = vadd.f32 %v1365, %v1399
        %v1416 = vadd.f32 %v1366, %v1400
        %v1417 = vadd.f32 %v1367, %v1401
        %v1418 = vadd.f32 %v1368, %v1402
        %v1419 = vadd.f32 %v1369, %v1403
        %v1420 = vadd.f32 %v1370, %v1404
        %v1421 = vadd.f32 %v1371, %v1405
        %v1422 = vadd.f32 %v1372, %v1406
        %v1423 = vadd.f32 %v1373, %v1407
        %v1424 = vadd.f32 %v1374, %v1408
        %v1425 = vadd.f32 %v1375, %v1409
        %v1426 = vadd.f32 %v1376, %v1410
        %v1427 = vld [vmem:[%s1377 + $0x1] sm:$0xff]
        %v1428 = vld [vmem:[%s1377 + $0x9] sm:$0xff]
        %v1429 = vld [vmem:[%s1377 + $0x19] sm:$0xff]
        %v1430 = vld [vmem:[%s1377 + $0x21] sm:$0xff]
        %v1431 = vld [vmem:[%s1377 + $0x31] sm:$0xff]
        %v1432 = vld [vmem:[%s1377 + $0x39] sm:$0xff]
        %v1433 = vld [vmem:[%s1377 + $0x49] sm:$0xff]
        %v1434 = vld [vmem:[%s1377 + $0x51] sm:$0xff]
        %v1435 = vld [vmem:[%s1377 + $0x61] sm:$0xff]
        %v1436 = vld [vmem:[%s1377 + $0x69] sm:$0xff]
        %v1437 = vld [vmem:[%s1377 + $0x79] sm:$0xff]
        %v1438 = vld [vmem:[%s1377 + $0x81] sm:$0xff]
        %v1439 = vld [vmem:[%s1377 + $0x91] sm:$0xff]
        %v1440 = vld [vmem:[%s1377 + $0x99] sm:$0xff]
        %v1441 = vld [vmem:[%s1377 + $0xa9] sm:$0xff]
        %v1442 = vld [vmem:[%s1377 + $0xb1] sm:$0xff]
        %v1443 = vperm.slane %v1211, 4
        %v1444 = vmul.f32 %v1427, %v1443
        %v1445 = vmul.f32 %v1428, %v1443
        %v1446 = vmul.f32 %v1429, %v1443
        %v1447 = vmul.f32 %v1430, %v1443
        %v1448 = vmul.f32 %v1431, %v1443
        %v1449 = vmul.f32 %v1432, %v1443
        %v1450 = vmul.f32 %v1433, %v1443
        %v1451 = vmul.f32 %v1434, %v1443
        %v1452 = vmul.f32 %v1435, %v1443
        %v1453 = vmul.f32 %v1436, %v1443
        %v1454 = vmul.f32 %v1437, %v1443
        %v1455 = vmul.f32 %v1438, %v1443
        %v1456 = vmul.f32 %v1439, %v1443
        %v1457 = vmul.f32 %v1440, %v1443
        %v1458 = vmul.f32 %v1441, %v1443
        %v1459 = vmul.f32 %v1442, %v1443
        %v1460 = vadd.f32 %v1411, %v1444
        %v1461 = vadd.f32 %v1412, %v1445
        %v1462 = vadd.f32 %v1413, %v1446
        %v1463 = vadd.f32 %v1414, %v1447
        %v1464 = vadd.f32 %v1415, %v1448
        %v1465 = vadd.f32 %v1416, %v1449
        %v1466 = vadd.f32 %v1417, %v1450
        %v1467 = vadd.f32 %v1418, %v1451
        %v1468 = vadd.f32 %v1419, %v1452
        %v1469 = vadd.f32 %v1420, %v1453
        %v1470 = vadd.f32 %v1421, %v1454
        %v1471 = vadd.f32 %v1422, %v1455
        %v1472 = vadd.f32 %v1423, %v1456
        %v1473 = vadd.f32 %v1424, %v1457
        %v1474 = vadd.f32 %v1425, %v1458
        %v1475 = vadd.f32 %v1426, %v1459
        %v1476 = vld [vmem:[%s1377 + $0x2] sm:$0xff]
        %v1477 = vld [vmem:[%s1377 + $0xa] sm:$0xff]
        %v1478 = vld [vmem:[%s1377 + $0x1a] sm:$0xff]
        %v1479 = vld [vmem:[%s1377 + $0x22] sm:$0xff]
        %v1480 = vld [vmem:[%s1377 + $0x32] sm:$0xff]
        %v1481 = vld [vmem:[%s1377 + $0x3a] sm:$0xff]
        %v1482 = vld [vmem:[%s1377 + $0x4a] sm:$0xff]
        %v1483 = vld [vmem:[%s1377 + $0x52] sm:$0xff]
        %v1484 = vld [vmem:[%s1377 + $0x62] sm:$0xff]
        %v1485 = vld [vmem:[%s1377 + $0x6a] sm:$0xff]
        %v1486 = vld [vmem:[%s1377 + $0x7a] sm:$0xff]
        %v1487 = vld [vmem:[%s1377 + $0x82] sm:$0xff]
        %v1488 = vld [vmem:[%s1377 + $0x92] sm:$0xff]
        %v1489 = vld [vmem:[%s1377 + $0x9a] sm:$0xff]
        %v1490 = vld [vmem:[%s1377 + $0xaa] sm:$0xff]
        %v1491 = vld [vmem:[%s1377 + $0xb2] sm:$0xff]
        %v1492 = vperm.slane %v1211, 5
        %v1493 = vmul.f32 %v1476, %v1492
        %v1494 = vmul.f32 %v1477, %v1492
        %v1495 = vmul.f32 %v1478, %v1492
        %v1496 = vmul.f32 %v1479, %v1492
        %v1497 = vmul.f32 %v1480, %v1492
        %v1498 = vmul.f32 %v1481, %v1492
        %v1499 = vmul.f32 %v1482, %v1492
        %v1500 = vmul.f32 %v1483, %v1492
        %v1501 = vmul.f32 %v1484, %v1492
        %v1502 = vmul.f32 %v1485, %v1492
        %v1503 = vmul.f32 %v1486, %v1492
        %v1504 = vmul.f32 %v1487, %v1492
        %v1505 = vmul.f32 %v1488, %v1492
        %v1506 = vmul.f32 %v1489, %v1492
        %v1507 = vmul.f32 %v1490, %v1492
        %v1508 = vmul.f32 %v1491, %v1492
        %v1509 = vadd.f32 %v1460, %v1493
        %v1510 = vadd.f32 %v1461, %v1494
        %v1511 = vadd.f32 %v1462, %v1495
        %v1512 = vadd.f32 %v1463, %v1496
        %v1513 = vadd.f32 %v1464, %v1497
        %v1514 = vadd.f32 %v1465, %v1498
        %v1515 = vadd.f32 %v1466, %v1499
        %v1516 = vadd.f32 %v1467, %v1500
        %v1517 = vadd.f32 %v1468, %v1501
        %v1518 = vadd.f32 %v1469, %v1502
        %v1519 = vadd.f32 %v1470, %v1503
        %v1520 = vadd.f32 %v1471, %v1504
        %v1521 = vadd.f32 %v1472, %v1505
        %v1522 = vadd.f32 %v1473, %v1506
        %v1523 = vadd.f32 %v1474, %v1507
        %v1524 = vadd.f32 %v1475, %v1508
        %s1525 = scalar_lea.vmem [#allocation2], 48
        %v1526 = vld [vmem:[%s1525] sm:$0xff]
        %v1527 = vld [vmem:[%s1525 + $0x8] sm:$0xff]
        %v1528 = vld [vmem:[%s1525 + $0x18] sm:$0xff]
        %v1529 = vld [vmem:[%s1525 + $0x20] sm:$0xff]
        %v1530 = vld [vmem:[%s1525 + $0x30] sm:$0xff]
        %v1531 = vld [vmem:[%s1525 + $0x38] sm:$0xff]
        %v1532 = vld [vmem:[%s1525 + $0x48] sm:$0xff]
        %v1533 = vld [vmem:[%s1525 + $0x50] sm:$0xff]
        %v1534 = vld [vmem:[%s1525 + $0x60] sm:$0xff]
        %v1535 = vld [vmem:[%s1525 + $0x68] sm:$0xff]
        %v1536 = vld [vmem:[%s1525 + $0x78] sm:$0xff]
        %v1537 = vld [vmem:[%s1525 + $0x80] sm:$0xff]
        %v1538 = vld [vmem:[%s1525 + $0x90] sm:$0xff]
        %v1539 = vld [vmem:[%s1525 + $0x98] sm:$0xff]
        %v1540 = vld [vmem:[%s1525 + $0xa8] sm:$0xff]
        %v1541 = vld [vmem:[%s1525 + $0xb0] sm:$0xff]
        %v1542 = vperm.slane %v1211, 6
        %v1543 = vmul.f32 %v1526, %v1542
        %v1544 = vmul.f32 %v1527, %v1542
        %v1545 = vmul.f32 %v1528, %v1542
        %v1546 = vmul.f32 %v1529, %v1542
        %v1547 = vmul.f32 %v1530, %v1542
        %v1548 = vmul.f32 %v1531, %v1542
        %v1549 = vmul.f32 %v1532, %v1542
        %v1550 = vmul.f32 %v1533, %v1542
        %v1551 = vmul.f32 %v1534, %v1542
        %v1552 = vmul.f32 %v1535, %v1542
        %v1553 = vmul.f32 %v1536, %v1542
        %v1554 = vmul.f32 %v1537, %v1542
        %v1555 = vmul.f32 %v1538, %v1542
        %v1556 = vmul.f32 %v1539, %v1542
        %v1557 = vmul.f32 %v1540, %v1542
        %v1558 = vmul.f32 %v1541, %v1542
        %v1559 = vadd.f32 %v1509, %v1543
        %v1560 = vadd.f32 %v1510, %v1544
        %v1561 = vadd.f32 %v1511, %v1545
        %v1562 = vadd.f32 %v1512, %v1546
        %v1563 = vadd.f32 %v1513, %v1547
        %v1564 = vadd.f32 %v1514, %v1548
        %v1565 = vadd.f32 %v1515, %v1549
        %v1566 = vadd.f32 %v1516, %v1550
        %v1567 = vadd.f32 %v1517, %v1551
        %v1568 = vadd.f32 %v1518, %v1552
        %v1569 = vadd.f32 %v1519, %v1553
        %v1570 = vadd.f32 %v1520, %v1554
        %v1571 = vadd.f32 %v1521, %v1555
        %v1572 = vadd.f32 %v1522, %v1556
        %v1573 = vadd.f32 %v1523, %v1557
        %v1574 = vadd.f32 %v1524, %v1558
        %v1575 = vld [vmem:[%s1525 + $0x1] sm:$0xff]
        %v1576 = vld [vmem:[%s1525 + $0x9] sm:$0xff]
        %v1577 = vld [vmem:[%s1525 + $0x19] sm:$0xff]
        %v1578 = vld [vmem:[%s1525 + $0x21] sm:$0xff]
        %v1579 = vld [vmem:[%s1525 + $0x31] sm:$0xff]
        %v1580 = vld [vmem:[%s1525 + $0x39] sm:$0xff]
        %v1581 = vld [vmem:[%s1525 + $0x49] sm:$0xff]
        %v1582 = vld [vmem:[%s1525 + $0x51] sm:$0xff]
        %v1583 = vld [vmem:[%s1525 + $0x61] sm:$0xff]
        %v1584 = vld [vmem:[%s1525 + $0x69] sm:$0xff]
        %v1585 = vld [vmem:[%s1525 + $0x79] sm:$0xff]
        %v1586 = vld [vmem:[%s1525 + $0x81] sm:$0xff]
        %v1587 = vld [vmem:[%s1525 + $0x91] sm:$0xff]
        %v1588 = vld [vmem:[%s1525 + $0x99] sm:$0xff]
        %v1589 = vld [vmem:[%s1525 + $0xa9] sm:$0xff]
        %v1590 = vld [vmem:[%s1525 + $0xb1] sm:$0xff]
        %v1591 = vperm.slane %v1211, 7
        %v1592 = vmul.f32 %v1575, %v1591
        %v1593 = vmul.f32 %v1576, %v1591
        %v1594 = vmul.f32 %v1577, %v1591
        %v1595 = vmul.f32 %v1578, %v1591
        %v1596 = vmul.f32 %v1579, %v1591
        %v1597 = vmul.f32 %v1580, %v1591
        %v1598 = vmul.f32 %v1581, %v1591
        %v1599 = vmul.f32 %v1582, %v1591
        %v1600 = vmul.f32 %v1583, %v1591
        %v1601 = vmul.f32 %v1584, %v1591
        %v1602 = vmul.f32 %v1585, %v1591
        %v1603 = vmul.f32 %v1586, %v1591
        %v1604 = vmul.f32 %v1587, %v1591
        %v1605 = vmul.f32 %v1588, %v1591
        %v1606 = vmul.f32 %v1589, %v1591
        %v1607 = vmul.f32 %v1590, %v1591
        %v1608 = vadd.f32 %v1559, %v1592
        %v1609 = vadd.f32 %v1560, %v1593
        %v1610 = vadd.f32 %v1561, %v1594
        %v1611 = vadd.f32 %v1562, %v1595
        %v1612 = vadd.f32 %v1563, %v1596
        %v1613 = vadd.f32 %v1564, %v1597
        %v1614 = vadd.f32 %v1565, %v1598
        %v1615 = vadd.f32 %v1566, %v1599
        %v1616 = vadd.f32 %v1567, %v1600
        %v1617 = vadd.f32 %v1568, %v1601
        %v1618 = vadd.f32 %v1569, %v1602
        %v1619 = vadd.f32 %v1570, %v1603
        %v1620 = vadd.f32 %v1571, %v1604
        %v1621 = vadd.f32 %v1572, %v1605
        %v1622 = vadd.f32 %v1573, %v1606
        %v1623 = vadd.f32 %v1574, %v1607
        %v1624 = vld [vmem:[%s1525 + $0x2] sm:$0xff]
        %v1625 = vld [vmem:[%s1525 + $0xa] sm:$0xff]
        %v1626 = vld [vmem:[%s1525 + $0x1a] sm:$0xff]
        %v1627 = vld [vmem:[%s1525 + $0x22] sm:$0xff]
        %v1628 = vld [vmem:[%s1525 + $0x32] sm:$0xff]
        %v1629 = vld [vmem:[%s1525 + $0x3a] sm:$0xff]
        %v1630 = vld [vmem:[%s1525 + $0x4a] sm:$0xff]
        %v1631 = vld [vmem:[%s1525 + $0x52] sm:$0xff]
        %v1632 = vld [vmem:[%s1525 + $0x62] sm:$0xff]
        %v1633 = vld [vmem:[%s1525 + $0x6a] sm:$0xff]
        %v1634 = vld [vmem:[%s1525 + $0x7a] sm:$0xff]
        %v1635 = vld [vmem:[%s1525 + $0x82] sm:$0xff]
        %v1636 = vld [vmem:[%s1525 + $0x92] sm:$0xff]
        %v1637 = vld [vmem:[%s1525 + $0x9a] sm:$0xff]
        %v1638 = vld [vmem:[%s1525 + $0xaa] sm:$0xff]
        %v1639 = vld [vmem:[%s1525 + $0xb2] sm:$0xff]
        %v1640 = vperm.slane %v1212, 0
        %v1641 = vmul.f32 %v1624, %v1640
        %v1642 = vmul.f32 %v1625, %v1640
        %v1643 = vmul.f32 %v1626, %v1640
        %v1644 = vmul.f32 %v1627, %v1640
        %v1645 = vmul.f32 %v1628, %v1640
        %v1646 = vmul.f32 %v1629, %v1640
        %v1647 = vmul.f32 %v1630, %v1640
        %v1648 = vmul.f32 %v1631, %v1640
        %v1649 = vmul.f32 %v1632, %v1640
        %v1650 = vmul.f32 %v1633, %v1640
        %v1651 = vmul.f32 %v1634, %v1640
        %v1652 = vmul.f32 %v1635, %v1640
        %v1653 = vmul.f32 %v1636, %v1640
        %v1654 = vmul.f32 %v1637, %v1640
        %v1655 = vmul.f32 %v1638, %v1640
        %v1656 = vmul.f32 %v1639, %v1640
        %v1657 = vadd.f32 %v1608, %v1641
        %v1658 = vadd.f32 %v1609, %v1642
        %v1659 = vadd.f32 %v1610, %v1643
        %v1660 = vadd.f32 %v1611, %v1644
        %v1661 = vadd.f32 %v1612, %v1645
        %v1662 = vadd.f32 %v1613, %v1646
        %v1663 = vadd.f32 %v1614, %v1647
        %v1664 = vadd.f32 %v1615, %v1648
        %v1665 = vadd.f32 %v1616, %v1649
        %v1666 = vadd.f32 %v1617, %v1650
        %v1667 = vadd.f32 %v1618, %v1651
        %v1668 = vadd.f32 %v1619, %v1652
        %v1669 = vadd.f32 %v1620, %v1653
        %v1670 = vadd.f32 %v1621, %v1654
        %v1671 = vadd.f32 %v1622, %v1655
        %v1672 = vadd.f32 %v1623, %v1656
        %v1674 = vperm.slane %v1213, 0
        %v1676 = vadd.f32 %v1657, %v1674
        %v1677 = vadd.f32 %v1658, %v1674
        %v1678 = vadd.f32 %v1659, %v1674
        %v1679 = vadd.f32 %v1660, %v1674
        %v1680 = vadd.f32 %v1661, %v1674
        %v1681 = vadd.f32 %v1662, %v1674
        %v1682 = vadd.f32 %v1663, %v1674
        %v1683 = vadd.f32 %v1664, %v1674
        %v1684 = vadd.f32 %v1665, %v1674
        %v1685 = vadd.f32 %v1666, %v1674
        %v1686 = vadd.f32 %v1667, %v1674
        %v1687 = vadd.f32 %v1668, %v1674
        %v1688 = vadd.f32 %v1669, %v1674
        %v1689 = vadd.f32 %v1670, %v1674
        %v1690 = vadd.f32 %v1671, %v1674
        %v1691 = vadd.f32 %v1672, %v1674
        %v1692 = vmax.f32 %v1676, 0.0
        %v1693 = vmax.f32 %v1677, 0.0
        %v1694 = vmax.f32 %v1678, 0.0
        %v1695 = vmax.f32 %v1679, 0.0
        %v1696 = vmax.f32 %v1680, 0.0
        %v1697 = vmax.f32 %v1681, 0.0
        %v1698 = vmax.f32 %v1682, 0.0
        %v1699 = vmax.f32 %v1683, 0.0
        %v1700 = vmax.f32 %v1684, 0.0
        %v1701 = vmax.f32 %v1685, 0.0
        %v1702 = vmax.f32 %v1686, 0.0
        %v1703 = vmax.f32 %v1687, 0.0
        %v1704 = vmax.f32 %v1688, 0.0
        %v1705 = vmax.f32 %v1689, 0.0
        %v1706 = vmax.f32 %v1690, 0.0
        %v1707 = vmax.f32 %v1691, 0.0
        %v1708 = vmin.f32 %v1692, 6.0
        %v1709 = vmin.f32 %v1693, 6.0
        %v1710 = vmin.f32 %v1694, 6.0
        %v1711 = vmin.f32 %v1695, 6.0
        %v1712 = vmin.f32 %v1696, 6.0
        %v1713 = vmin.f32 %v1697, 6.0
        %v1714 = vmin.f32 %v1698, 6.0
        %v1715 = vmin.f32 %v1699, 6.0
        %v1716 = vmin.f32 %v1700, 6.0
        %v1717 = vmin.f32 %v1701, 6.0
        %v1718 = vmin.f32 %v1702, 6.0
        %v1719 = vmin.f32 %v1703, 6.0
        %v1720 = vmin.f32 %v1704, 6.0
        %v1721 = vmin.f32 %v1705, 6.0
        %v1722 = vmin.f32 %v1706, 6.0
        %v1723 = vmin.f32 %v1707, 6.0
        %1724 = vmatpush.msra.mxu0 %v1229
        %1725 = vmatpush.msra.mxu0 %v1228
        %1726 = vmatpush.msra.mxu0 %v1227
        %1727 = vmatpush.msra.mxu0 %v1226
        %1728 = vmatpush.msra.mxu0 %v1225
        %1729 = vmatpush.msra.mxu0 %v1224
        %1730 = vmatpush.msra.mxu0 %v1223
        %1731 = vmatpush.msra.mxu0 %v1222
        %1732 = vmatpush.msra.mxu0 %v1221
        %1733 = vmatpush.msra.mxu0 %v1220
        %1734 = vmatpush.msra.mxu0 %v1219
        %1735 = vmatpush.msra.mxu0 %v1218
        %1736 = vmatpush.msra.mxu0 %v1217
        %1737 = vmatpush.msra.mxu0 %v1216
        %1738 = vmatpush.msra.mxu0 %v1215
        %1739 = vmatpush.msra.mxu0 %v1214
        %1740 = vmatmul.f32.gmra.mxu0 %v1708
        %v1741 = vpop.f32.mrf.mxu0
        %v1742 = vadd.f32 0.0, %v1741
        %1743 = vmatmul.f32.gmra.mxu0 %v1709
        %v1744 = vpop.f32.mrf.mxu0
        %v1745 = vadd.f32 0.0, %v1744
        %1746 = vmatmul.f32.gmra.mxu0 %v1710
        %v1747 = vpop.f32.mrf.mxu0
        %v1748 = vadd.f32 0.0, %v1747
        %1749 = vmatmul.f32.gmra.mxu0 %v1711
        %v1750 = vpop.f32.mrf.mxu0
        %v1751 = vadd.f32 0.0, %v1750
        %1752 = vmatmul.f32.gmra.mxu0 %v1712
        %v1753 = vpop.f32.mrf.mxu0
        %v1754 = vadd.f32 0.0, %v1753
        %1755 = vmatmul.f32.gmra.mxu0 %v1713
        %v1756 = vpop.f32.mrf.mxu0
        %v1757 = vadd.f32 0.0, %v1756
        %1758 = vmatmul.f32.gmra.mxu0 %v1714
        %v1759 = vpop.f32.mrf.mxu0
        %v1760 = vadd.f32 0.0, %v1759
        %1761 = vmatmul.f32.gmra.mxu0 %v1715
        %v1762 = vpop.f32.mrf.mxu0
        %v1763 = vadd.f32 0.0, %v1762
        %1764 = vmatmul.f32.gmra.mxu0 %v1716
        %v1765 = vpop.f32.mrf.mxu0
        %v1766 = vadd.f32 0.0, %v1765
        %1767 = vmatmul.f32.gmra.mxu0 %v1717
        %v1768 = vpop.f32.mrf.mxu0
        %v1769 = vadd.f32 0.0, %v1768
        %1770 = vmatmul.f32.gmra.mxu0 %v1718
        %v1771 = vpop.f32.mrf.mxu0
        %v1772 = vadd.f32 0.0, %v1771
        %1773 = vmatmul.f32.gmra.mxu0 %v1719
        %v1774 = vpop.f32.mrf.mxu0
        %v1775 = vadd.f32 0.0, %v1774
        %1776 = vmatmul.f32.gmra.mxu0 %v1720
        %v1777 = vpop.f32.mrf.mxu0
        %v1778 = vadd.f32 0.0, %v1777
        %1779 = vmatmul.f32.gmra.mxu0 %v1721
        %v1780 = vpop.f32.mrf.mxu0
        %v1781 = vadd.f32 0.0, %v1780
        %1782 = vmatmul.f32.gmra.mxu0 %v1722
        %v1783 = vpop.f32.mrf.mxu0
        %v1784 = vadd.f32 0.0, %v1783
        %1785 = vmatmul.f32.gmra.mxu0 %v1723
        %v1786 = vpop.f32.mrf.mxu0
        %v1787 = vadd.f32 0.0, %v1786
        %1788 = vdwg.mxu0
        %1789 = vst [vmem:[#allocation3] sm:$0xff] %v1742
        %1790 = vst [vmem:[#allocation3 + $0x8] sm:$0xff] %v1745
        %1791 = vst [vmem:[#allocation3 + $0x10] sm:$0xff] %v1748
        %1792 = vst [vmem:[#allocation3 + $0x18] sm:$0xff] %v1751
        %1793 = vst [vmem:[#allocation3 + $0x20] sm:$0xff] %v1754
        %1794 = vst [vmem:[#allocation3 + $0x28] sm:$0xff] %v1757
        %1795 = vst [vmem:[#allocation3 + $0x30] sm:$0xff] %v1760
        %1796 = vst [vmem:[#allocation3 + $0x38] sm:$0xff] %v1763
        %1797 = vst [vmem:[#allocation3 + $0x40] sm:$0xff] %v1766
        %1798 = vst [vmem:[#allocation3 + $0x48] sm:$0xff] %v1769
        %1799 = vst [vmem:[#allocation3 + $0x50] sm:$0xff] %v1772
        %1800 = vst [vmem:[#allocation3 + $0x58] sm:$0xff] %v1775
        %1801 = vst [vmem:[#allocation3 + $0x60] sm:$0xff] %v1778
        %1802 = vst [vmem:[#allocation3 + $0x68] sm:$0xff] %v1781
        %1803 = vst [vmem:[#allocation3 + $0x70] sm:$0xff] %v1784
        %1804 = vst [vmem:[#allocation3 + $0x78] sm:$0xff] %v1787
        %s1805 = scalar_lea.vmem [#allocation2], 192
        %v1806 = vld [vmem:[%s1805] sm:$0xff]
        %v1807 = vld [vmem:[%s1805 + $0x8] sm:$0xff]
        %v1808 = vld [vmem:[%s1805 + $0x18] sm:$0xff]
        %v1809 = vld [vmem:[%s1805 + $0x20] sm:$0xff]
        %v1810 = vld [vmem:[%s1805 + $0x30] sm:$0xff]
        %v1811 = vld [vmem:[%s1805 + $0x38] sm:$0xff]
        %v1812 = vld [vmem:[%s1805 + $0x48] sm:$0xff]
        %v1813 = vld [vmem:[%s1805 + $0x50] sm:$0xff]
        %v1814 = vld [vmem:[%s1805 + $0x60] sm:$0xff]
        %v1815 = vld [vmem:[%s1805 + $0x68] sm:$0xff]
        %v1816 = vld [vmem:[%s1805 + $0x78] sm:$0xff]
        %v1817 = vld [vmem:[%s1805 + $0x80] sm:$0xff]
        %v1818 = vld [vmem:[%s1805 + $0x90] sm:$0xff]
        %v1819 = vld [vmem:[%s1805 + $0x98] sm:$0xff]
        %v1820 = vld [vmem:[%s1805 + $0xa8] sm:$0xff]
        %v1821 = vld [vmem:[%s1805 + $0xb0] sm:$0xff]
        %v1822 = vmul.f32 %v1806, %v1246
        %v1823 = vmul.f32 %v1807, %v1246
        %v1824 = vmul.f32 %v1808, %v1246
        %v1825 = vmul.f32 %v1809, %v1246
        %v1826 = vmul.f32 %v1810, %v1246
        %v1827 = vmul.f32 %v1811, %v1246
        %v1828 = vmul.f32 %v1812, %v1246
        %v1829 = vmul.f32 %v1813, %v1246
        %v1830 = vmul.f32 %v1814, %v1246
        %v1831 = vmul.f32 %v1815, %v1246
        %v1832 = vmul.f32 %v1816, %v1246
        %v1833 = vmul.f32 %v1817, %v1246
        %v1834 = vmul.f32 %v1818, %v1246
        %v1835 = vmul.f32 %v1819, %v1246
        %v1836 = vmul.f32 %v1820, %v1246
        %v1837 = vmul.f32 %v1821, %v1246
        %v1838 = vadd.f32 %v1822, 0.0
        %v1839 = vadd.f32 %v1823, 0.0
        %v1840 = vadd.f32 %v1824, 0.0
        %v1841 = vadd.f32 %v1825, 0.0
        %v1842 = vadd.f32 %v1826, 0.0
        %v1843 = vadd.f32 %v1827, 0.0
        %v1844 = vadd.f32 %v1828, 0.0
        %v1845 = vadd.f32 %v1829, 0.0
        %v1846 = vadd.f32 %v1830, 0.0
        %v1847 = vadd.f32 %v1831, 0.0
        %v1848 = vadd.f32 %v1832, 0.0
        %v1849 = vadd.f32 %v1833, 0.0
        %v1850 = vadd.f32 %v1834, 0.0
        %v1851 = vadd.f32 %v1835, 0.0
        %v1852 = vadd.f32 %v1836, 0.0
        %v1853 = vadd.f32 %v1837, 0.0
        %v1854 = vld [vmem:[%s1805 + $0x1] sm:$0xff]
        %v1855 = vld [vmem:[%s1805 + $0x9] sm:$0xff]
        %v1856 = vld [vmem:[%s1805 + $0x19] sm:$0xff]
        %v1857 = vld [vmem:[%s1805 + $0x21] sm:$0xff]
        %v1858 = vld [vmem:[%s1805 + $0x31] sm:$0xff]
        %v1859 = vld [vmem:[%s1805 + $0x39] sm:$0xff]
        %v1860 = vld [vmem:[%s1805 + $0x49] sm:$0xff]
        %v1861 = vld [vmem:[%s1805 + $0x51] sm:$0xff]
        %v1862 = vld [vmem:[%s1805 + $0x61] sm:$0xff]
        %v1863 = vld [vmem:[%s1805 + $0x69] sm:$0xff]
        %v1864 = vld [vmem:[%s1805 + $0x79] sm:$0xff]
        %v1865 = vld [vmem:[%s1805 + $0x81] sm:$0xff]
        %v1866 = vld [vmem:[%s1805 + $0x91] sm:$0xff]
        %v1867 = vld [vmem:[%s1805 + $0x99] sm:$0xff]
        %v1868 = vld [vmem:[%s1805 + $0xa9] sm:$0xff]
        %v1869 = vld [vmem:[%s1805 + $0xb1] sm:$0xff]
        %v1870 = vmul.f32 %v1854, %v1295
        %v1871 = vmul.f32 %v1855, %v1295
        %v1872 = vmul.f32 %v1856, %v1295
        %v1873 = vmul.f32 %v1857, %v1295
        %v1874 = vmul.f32 %v1858, %v1295
        %v1875 = vmul.f32 %v1859, %v1295
        %v1876 = vmul.f32 %v1860, %v1295
        %v1877 = vmul.f32 %v1861, %v1295
        %v1878 = vmul.f32 %v1862, %v1295
        %v1879 = vmul.f32 %v1863, %v1295
        %v1880 = vmul.f32 %v1864, %v1295
        %v1881 = vmul.f32 %v1865, %v1295
        %v1882 = vmul.f32 %v1866, %v1295
        %v1883 = vmul.f32 %v1867, %v1295
        %v1884 = vmul.f32 %v1868, %v1295
        %v1885 = vmul.f32 %v1869, %v1295
        %v1886 = vadd.f32 %v1838, %v1870
        %v1887 = vadd.f32 %v1839, %v1871
        %v1888 = vadd.f32 %v1840, %v1872
        %v1889 = vadd.f32 %v1841, %v1873
        %v1890 = vadd.f32 %v1842, %v1874
        %v1891 = vadd.f32 %v1843, %v1875
        %v1892 = vadd.f32 %v1844, %v1876
        %v1893 = vadd.f32 %v1845, %v1877
        %v1894 = vadd.f32 %v1846, %v1878
        %v1895 = vadd.f32 %v1847, %v1879
        %v1896 = vadd.f32 %v1848, %v1880
        %v1897 = vadd.f32 %v1849, %v1881
        %v1898 = vadd.f32 %v1850, %v1882
        %v1899 = vadd.f32 %v1851, %v1883
        %v1900 = vadd.f32 %v1852, %v1884
        %v1901 = vadd.f32 %v1853, %v1885
        %v1902 = vld [vmem:[%s1805 + $0x2] sm:$0xff]
        %v1903 = vld [vmem:[%s1805 + $0xa] sm:$0xff]
        %v1904 = vld [vmem:[%s1805 + $0x1a] sm:$0xff]
        %v1905 = vld [vmem:[%s1805 + $0x22] sm:$0xff]
        %v1906 = vld [vmem:[%s1805 + $0x32] sm:$0xff]
        %v1907 = vld [vmem:[%s1805 + $0x3a] sm:$0xff]
        %v1908 = vld [vmem:[%s1805 + $0x4a] sm:$0xff]
        %v1909 = vld [vmem:[%s1805 + $0x52] sm:$0xff]
        %v1910 = vld [vmem:[%s1805 + $0x62] sm:$0xff]
        %v1911 = vld [vmem:[%s1805 + $0x6a] sm:$0xff]
        %v1912 = vld [vmem:[%s1805 + $0x7a] sm:$0xff]
        %v1913 = vld [vmem:[%s1805 + $0x82] sm:$0xff]
        %v1914 = vld [vmem:[%s1805 + $0x92] sm:$0xff]
        %v1915 = vld [vmem:[%s1805 + $0x9a] sm:$0xff]
        %v1916 = vld [vmem:[%s1805 + $0xaa] sm:$0xff]
        %v1917 = vld [vmem:[%s1805 + $0xb2] sm:$0xff]
        %v1918 = vmul.f32 %v1902, %v1344
        %v1919 = vmul.f32 %v1903, %v1344
        %v1920 = vmul.f32 %v1904, %v1344
        %v1921 = vmul.f32 %v1905, %v1344
        %v1922 = vmul.f32 %v1906, %v1344
        %v1923 = vmul.f32 %v1907, %v1344
        %v1924 = vmul.f32 %v1908, %v1344
        %v1925 = vmul.f32 %v1909, %v1344
        %v1926 = vmul.f32 %v1910, %v1344
        %v1927 = vmul.f32 %v1911, %v1344
        %v1928 = vmul.f32 %v1912, %v1344
        %v1929 = vmul.f32 %v1913, %v1344
        %v1930 = vmul.f32 %v1914, %v1344
        %v1931 = vmul.f32 %v1915, %v1344
        %v1932 = vmul.f32 %v1916, %v1344
        %v1933 = vmul.f32 %v1917, %v1344
        %v1934 = vadd.f32 %v1886, %v1918
        %v1935 = vadd.f32 %v1887, %v1919
        %v1936 = vadd.f32 %v1888, %v1920
        %v1937 = vadd.f32 %v1889, %v1921
        %v1938 = vadd.f32 %v1890, %v1922
        %v1939 = vadd.f32 %v1891, %v1923
        %v1940 = vadd.f32 %v1892, %v1924
        %v1941 = vadd.f32 %v1893, %v1925
        %v1942 = vadd.f32 %v1894, %v1926
        %v1943 = vadd.f32 %v1895, %v1927
        %v1944 = vadd.f32 %v1896, %v1928
        %v1945 = vadd.f32 %v1897, %v1929
        %v1946 = vadd.f32 %v1898, %v1930
        %v1947 = vadd.f32 %v1899, %v1931
        %v1948 = vadd.f32 %v1900, %v1932
        %v1949 = vadd.f32 %v1901, %v1933
        %s1950 = scalar_lea.vmem [#allocation2], 216
        %v1951 = vld [vmem:[%s1950] sm:$0xff]
        %v1952 = vld [vmem:[%s1950 + $0x8] sm:$0xff]
        %v1953 = vld [vmem:[%s1950 + $0x18] sm:$0xff]
        %v1954 = vld [vmem:[%s1950 + $0x20] sm:$0xff]
        %v1955 = vld [vmem:[%s1950 + $0x30] sm:$0xff]
        %v1956 = vld [vmem:[%s1950 + $0x38] sm:$0xff]
        %v1957 = vld [vmem:[%s1950 + $0x48] sm:$0xff]
        %v1958 = vld [vmem:[%s1950 + $0x50] sm:$0xff]
        %v1959 = vld [vmem:[%s1950 + $0x60] sm:$0xff]
        %v1960 = vld [vmem:[%s1950 + $0x68] sm:$0xff]
        %v1961 = vld [vmem:[%s1950 + $0x78] sm:$0xff]
        %v1962 = vld [vmem:[%s1950 + $0x80] sm:$0xff]
        %v1963 = vld [vmem:[%s1950 + $0x90] sm:$0xff]
        %v1964 = vld [vmem:[%s1950 + $0x98] sm:$0xff]
        %v1965 = vld [vmem:[%s1950 + $0xa8] sm:$0xff]
        %v1966 = vld [vmem:[%s1950 + $0xb0] sm:$0xff]
        %v1967 = vmul.f32 %v1951, %v1394
        %v1968 = vmul.f32 %v1952, %v1394
        %v1969 = vmul.f32 %v1953, %v1394
        %v1970 = vmul.f32 %v1954, %v1394
        %v1971 = vmul.f32 %v1955, %v1394
        %v1972 = vmul.f32 %v1956, %v1394
        %v1973 = vmul.f32 %v1957, %v1394
        %v1974 = vmul.f32 %v1958, %v1394
        %v1975 = vmul.f32 %v1959, %v1394
        %v1976 = vmul.f32 %v1960, %v1394
        %v1977 = vmul.f32 %v1961, %v1394
        %v1978 = vmul.f32 %v1962, %v1394
        %v1979 = vmul.f32 %v1963, %v1394
        %v1980 = vmul.f32 %v1964, %v1394
        %v1981 = vmul.f32 %v1965, %v1394
        %v1982 = vmul.f32 %v1966, %v1394
        %v1983 = vadd.f32 %v1934, %v1967
        %v1984 = vadd.f32 %v1935, %v1968
        %v1985 = vadd.f32 %v1936, %v1969
        %v1986 = vadd.f32 %v1937, %v1970
        %v1987 = vadd.f32 %v1938, %v1971
        %v1988 = vadd.f32 %v1939, %v1972
        %v1989 = vadd.f32 %v1940, %v1973
        %v1990 = vadd.f32 %v1941, %v1974
        %v1991 = vadd.f32 %v1942, %v1975
        %v1992 = vadd.f32 %v1943, %v1976
        %v1993 = vadd.f32 %v1944, %v1977
        %v1994 = vadd.f32 %v1945, %v1978
        %v1995 = vadd.f32 %v1946, %v1979
        %v1996 = vadd.f32 %v1947, %v1980
        %v1997 = vadd.f32 %v1948, %v1981
        %v1998 = vadd.f32 %v1949, %v1982
        %v1999 = vld [vmem:[%s1950 + $0x1] sm:$0xff]
        %v2000 = vld [vmem:[%s1950 + $0x9] sm:$0xff]
        %v2001 = vld [vmem:[%s1950 + $0x19] sm:$0xff]
        %v2002 = vld [vmem:[%s1950 + $0x21] sm:$0xff]
        %v2003 = vld [vmem:[%s1950 + $0x31] sm:$0xff]
        %v2004 = vld [vmem:[%s1950 + $0x39] sm:$0xff]
        %v2005 = vld [vmem:[%s1950 + $0x49] sm:$0xff]
        %v2006 = vld [vmem:[%s1950 + $0x51] sm:$0xff]
        %v2007 = vld [vmem:[%s1950 + $0x61] sm:$0xff]
        %v2008 = vld [vmem:[%s1950 + $0x69] sm:$0xff]
        %v2009 = vld [vmem:[%s1950 + $0x79] sm:$0xff]
        %v2010 = vld [vmem:[%s1950 + $0x81] sm:$0xff]
        %v2011 = vld [vmem:[%s1950 + $0x91] sm:$0xff]
        %v2012 = vld [vmem:[%s1950 + $0x99] sm:$0xff]
        %v2013 = vld [vmem:[%s1950 + $0xa9] sm:$0xff]
        %v2014 = vld [vmem:[%s1950 + $0xb1] sm:$0xff]
        %v2015 = vmul.f32 %v1999, %v1443
        %v2016 = vmul.f32 %v2000, %v1443
        %v2017 = vmul.f32 %v2001, %v1443
        %v2018 = vmul.f32 %v2002, %v1443
        %v2019 = vmul.f32 %v2003, %v1443
        %v2020 = vmul.f32 %v2004, %v1443
        %v2021 = vmul.f32 %v2005, %v1443
        %v2022 = vmul.f32 %v2006, %v1443
        %v2023 = vmul.f32 %v2007, %v1443
        %v2024 = vmul.f32 %v2008, %v1443
        %v2025 = vmul.f32 %v2009, %v1443
        %v2026 = vmul.f32 %v2010, %v1443
        %v2027 = vmul.f32 %v2011, %v1443
        %v2028 = vmul.f32 %v2012, %v1443
        %v2029 = vmul.f32 %v2013, %v1443
        %v2030 = vmul.f32 %v2014, %v1443
        %v2031 = vadd.f32 %v1983, %v2015
        %v2032 = vadd.f32 %v1984, %v2016
        %v2033 = vadd.f32 %v1985, %v2017
        %v2034 = vadd.f32 %v1986, %v2018
        %v2035 = vadd.f32 %v1987, %v2019
        %v2036 = vadd.f32 %v1988, %v2020
        %v2037 = vadd.f32 %v1989, %v2021
        %v2038 = vadd.f32 %v1990, %v2022
        %v2039 = vadd.f32 %v1991, %v2023
        %v2040 = vadd.f32 %v1992, %v2024
        %v2041 = vadd.f32 %v1993, %v2025
        %v2042 = vadd.f32 %v1994, %v2026
        %v2043 = vadd.f32 %v1995, %v2027
        %v2044 = vadd.f32 %v1996, %v2028
        %v2045 = vadd.f32 %v1997, %v2029
        %v2046 = vadd.f32 %v1998, %v2030
        %v2047 = vld [vmem:[%s1950 + $0x2] sm:$0xff]
        %v2048 = vld [vmem:[%s1950 + $0xa] sm:$0xff]
        %v2049 = vld [vmem:[%s1950 + $0x1a] sm:$0xff]
        %v2050 = vld [vmem:[%s1950 + $0x22] sm:$0xff]
        %v2051 = vld [vmem:[%s1950 + $0x32] sm:$0xff]
        %v2052 = vld [vmem:[%s1950 + $0x3a] sm:$0xff]
        %v2053 = vld [vmem:[%s1950 + $0x4a] sm:$0xff]
        %v2054 = vld [vmem:[%s1950 + $0x52] sm:$0xff]
        %v2055 = vld [vmem:[%s1950 + $0x62] sm:$0xff]
        %v2056 = vld [vmem:[%s1950 + $0x6a] sm:$0xff]
        %v2057 = vld [vmem:[%s1950 + $0x7a] sm:$0xff]
        %v2058 = vld [vmem:[%s1950 + $0x82] sm:$0xff]
        %v2059 = vld [vmem:[%s1950 + $0x92] sm:$0xff]
        %v2060 = vld [vmem:[%s1950 + $0x9a] sm:$0xff]
        %v2061 = vld [vmem:[%s1950 + $0xaa] sm:$0xff]
        %v2062 = vld [vmem:[%s1950 + $0xb2] sm:$0xff]
        %v2063 = vmul.f32 %v2047, %v1492
        %v2064 = vmul.f32 %v2048, %v1492
        %v2065 = vmul.f32 %v2049, %v1492
        %v2066 = vmul.f32 %v2050, %v1492
        %v2067 = vmul.f32 %v2051, %v1492
        %v2068 = vmul.f32 %v2052, %v1492
        %v2069 = vmul.f32 %v2053, %v1492
        %v2070 = vmul.f32 %v2054, %v1492
        %v2071 = vmul.f32 %v2055, %v1492
        %v2072 = vmul.f32 %v2056, %v1492
        %v2073 = vmul.f32 %v2057, %v1492
        %v2074 = vmul.f32 %v2058, %v1492
        %v2075 = vmul.f32 %v2059, %v1492
        %v2076 = vmul.f32 %v2060, %v1492
        %v2077 = vmul.f32 %v2061, %v1492
        %v2078 = vmul.f32 %v2062, %v1492
        %v2079 = vadd.f32 %v2031, %v2063
        %v2080 = vadd.f32 %v2032, %v2064
        %v2081 = vadd.f32 %v2033, %v2065
        %v2082 = vadd.f32 %v2034, %v2066
        %v2083 = vadd.f32 %v2035, %v2067
        %v2084 = vadd.f32 %v2036, %v2068
        %v2085 = vadd.f32 %v2037, %v2069
        %v2086 = vadd.f32 %v2038, %v2070
        %v2087 = vadd.f32 %v2039, %v2071
        %v2088 = vadd.f32 %v2040, %v2072
        %v2089 = vadd.f32 %v2041, %v2073
        %v2090 = vadd.f32 %v2042, %v2074
        %v2091 = vadd.f32 %v2043, %v2075
        %v2092 = vadd.f32 %v2044, %v2076
        %v2093 = vadd.f32 %v2045, %v2077
        %v2094 = vadd.f32 %v2046, %v2078
        %s2095 = scalar_lea.vmem [#allocation2], 240
        %v2096 = vld [vmem:[%s2095] sm:$0xff]
        %v2097 = vld [vmem:[%s2095 + $0x8] sm:$0xff]
        %v2098 = vld [vmem:[%s2095 + $0x18] sm:$0xff]
        %v2099 = vld [vmem:[%s2095 + $0x20] sm:$0xff]
        %v2100 = vld [vmem:[%s2095 + $0x30] sm:$0xff]
        %v2101 = vld [vmem:[%s2095 + $0x38] sm:$0xff]
        %v2102 = vld [vmem:[%s2095 + $0x48] sm:$0xff]
        %v2103 = vld [vmem:[%s2095 + $0x50] sm:$0xff]
        %v2104 = vld [vmem:[%s2095 + $0x60] sm:$0xff]
        %v2105 = vld [vmem:[%s2095 + $0x68] sm:$0xff]
        %v2106 = vld [vmem:[%s2095 + $0x78] sm:$0xff]
        %v2107 = vld [vmem:[%s2095 + $0x80] sm:$0xff]
        %v2108 = vld [vmem:[%s2095 + $0x90] sm:$0xff]
        %v2109 = vld [vmem:[%s2095 + $0x98] sm:$0xff]
        %v2110 = vld [vmem:[%s2095 + $0xa8] sm:$0xff]
        %v2111 = vld [vmem:[%s2095 + $0xb0] sm:$0xff]
        %v2112 = vmul.f32 %v2096, %v1542
        %v2113 = vmul.f32 %v2097, %v1542
        %v2114 = vmul.f32 %v2098, %v1542
        %v2115 = vmul.f32 %v2099, %v1542
        %v2116 = vmul.f32 %v2100, %v1542
        %v2117 = vmul.f32 %v2101, %v1542
        %v2118 = vmul.f32 %v2102, %v1542
        %v2119 = vmul.f32 %v2103, %v1542
        %v2120 = vmul.f32 %v2104, %v1542
        %v2121 = vmul.f32 %v2105, %v1542
        %v2122 = vmul.f32 %v2106, %v1542
        %v2123 = vmul.f32 %v2107, %v1542
        %v2124 = vmul.f32 %v2108, %v1542
        %v2125 = vmul.f32 %v2109, %v1542
        %v2126 = vmul.f32 %v2110, %v1542
        %v2127 = vmul.f32 %v2111, %v1542
        %v2128 = vadd.f32 %v2079, %v2112
        %v2129 = vadd.f32 %v2080, %v2113
        %v2130 = vadd.f32 %v2081, %v2114
        %v2131 = vadd.f32 %v2082, %v2115
        %v2132 = vadd.f32 %v2083, %v2116
        %v2133 = vadd.f32 %v2084, %v2117
        %v2134 = vadd.f32 %v2085, %v2118
        %v2135 = vadd.f32 %v2086, %v2119
        %v2136 = vadd.f32 %v2087, %v2120
        %v2137 = vadd.f32 %v2088, %v2121
        %v2138 = vadd.f32 %v2089, %v2122
        %v2139 = vadd.f32 %v2090, %v2123
        %v2140 = vadd.f32 %v2091, %v2124
        %v2141 = vadd.f32 %v2092, %v2125
        %v2142 = vadd.f32 %v2093, %v2126
        %v2143 = vadd.f32 %v2094, %v2127
        %v2144 = vld [vmem:[%s2095 + $0x1] sm:$0xff]
        %v2145 = vld [vmem:[%s2095 + $0x9] sm:$0xff]
        %v2146 = vld [vmem:[%s2095 + $0x19] sm:$0xff]
        %v2147 = vld [vmem:[%s2095 + $0x21] sm:$0xff]
        %v2148 = vld [vmem:[%s2095 + $0x31] sm:$0xff]
        %v2149 = vld [vmem:[%s2095 + $0x39] sm:$0xff]
        %v2150 = vld [vmem:[%s2095 + $0x49] sm:$0xff]
        %v2151 = vld [vmem:[%s2095 + $0x51] sm:$0xff]
        %v2152 = vld [vmem:[%s2095 + $0x61] sm:$0xff]
        %v2153 = vld [vmem:[%s2095 + $0x69] sm:$0xff]
        %v2154 = vld [vmem:[%s2095 + $0x79] sm:$0xff]
        %v2155 = vld [vmem:[%s2095 + $0x81] sm:$0xff]
        %v2156 = vld [vmem:[%s2095 + $0x91] sm:$0xff]
        %v2157 = vld [vmem:[%s2095 + $0x99] sm:$0xff]
        %v2158 = vld [vmem:[%s2095 + $0xa9] sm:$0xff]
        %v2159 = vld [vmem:[%s2095 + $0xb1] sm:$0xff]
        %v2160 = vmul.f32 %v2144, %v1591
        %v2161 = vmul.f32 %v2145, %v1591
        %v2162 = vmul.f32 %v2146, %v1591
        %v2163 = vmul.f32 %v2147, %v1591
        %v2164 = vmul.f32 %v2148, %v1591
        %v2165 = vmul.f32 %v2149, %v1591
        %v2166 = vmul.f32 %v2150, %v1591
        %v2167 = vmul.f32 %v2151, %v1591
        %v2168 = vmul.f32 %v2152, %v1591
        %v2169 = vmul.f32 %v2153, %v1591
        %v2170 = vmul.f32 %v2154, %v1591
        %v2171 = vmul.f32 %v2155, %v1591
        %v2172 = vmul.f32 %v2156, %v1591
        %v2173 = vmul.f32 %v2157, %v1591
        %v2174 = vmul.f32 %v2158, %v1591
        %v2175 = vmul.f32 %v2159, %v1591
        %v2176 = vadd.f32 %v2128, %v2160
        %v2177 = vadd.f32 %v2129, %v2161
        %v2178 = vadd.f32 %v2130, %v2162
        %v2179 = vadd.f32 %v2131, %v2163
        %v2180 = vadd.f32 %v2132, %v2164
        %v2181 = vadd.f32 %v2133, %v2165
        %v2182 = vadd.f32 %v2134, %v2166
        %v2183 = vadd.f32 %v2135, %v2167
        %v2184 = vadd.f32 %v2136, %v2168
        %v2185 = vadd.f32 %v2137, %v2169
        %v2186 = vadd.f32 %v2138, %v2170
        %v2187 = vadd.f32 %v2139, %v2171
        %v2188 = vadd.f32 %v2140, %v2172
        %v2189 = vadd.f32 %v2141, %v2173
        %v2190 = vadd.f32 %v2142, %v2174
        %v2191 = vadd.f32 %v2143, %v2175
        %v2192 = vld [vmem:[%s2095 + $0x2] sm:$0xff]
        %v2193 = vld [vmem:[%s2095 + $0xa] sm:$0xff]
        %v2194 = vld [vmem:[%s2095 + $0x1a] sm:$0xff]
        %v2195 = vld [vmem:[%s2095 + $0x22] sm:$0xff]
        %v2196 = vld [vmem:[%s2095 + $0x32] sm:$0xff]
        %v2197 = vld [vmem:[%s2095 + $0x3a] sm:$0xff]
        %v2198 = vld [vmem:[%s2095 + $0x4a] sm:$0xff]
        %v2199 = vld [vmem:[%s2095 + $0x52] sm:$0xff]
        %v2200 = vld [vmem:[%s2095 + $0x62] sm:$0xff]
        %v2201 = vld [vmem:[%s2095 + $0x6a] sm:$0xff]
        %v2202 = vld [vmem:[%s2095 + $0x7a] sm:$0xff]
        %v2203 = vld [vmem:[%s2095 + $0x82] sm:$0xff]
        %v2204 = vld [vmem:[%s2095 + $0x92] sm:$0xff]
        %v2205 = vld [vmem:[%s2095 + $0x9a] sm:$0xff]
        %v2206 = vld [vmem:[%s2095 + $0xaa] sm:$0xff]
        %v2207 = vld [vmem:[%s2095 + $0xb2] sm:$0xff]
        %v2208 = vmul.f32 %v2192, %v1640
        %v2209 = vmul.f32 %v2193, %v1640
        %v2210 = vmul.f32 %v2194, %v1640
        %v2211 = vmul.f32 %v2195, %v1640
        %v2212 = vmul.f32 %v2196, %v1640
        %v2213 = vmul.f32 %v2197, %v1640
        %v2214 = vmul.f32 %v2198, %v1640
        %v2215 = vmul.f32 %v2199, %v1640
        %v2216 = vmul.f32 %v2200, %v1640
        %v2217 = vmul.f32 %v2201, %v1640
        %v2218 = vmul.f32 %v2202, %v1640
        %v2219 = vmul.f32 %v2203, %v1640
        %v2220 = vmul.f32 %v2204, %v1640
        %v2221 = vmul.f32 %v2205, %v1640
        %v2222 = vmul.f32 %v2206, %v1640
        %v2223 = vmul.f32 %v2207, %v1640
        %v2224 = vadd.f32 %v2176, %v2208
        %v2225 = vadd.f32 %v2177, %v2209
        %v2226 = vadd.f32 %v2178, %v2210
        %v2227 = vadd.f32 %v2179, %v2211
        %v2228 = vadd.f32 %v2180, %v2212
        %v2229 = vadd.f32 %v2181, %v2213
        %v2230 = vadd.f32 %v2182, %v2214
        %v2231 = vadd.f32 %v2183, %v2215
        %v2232 = vadd.f32 %v2184, %v2216
        %v2233 = vadd.f32 %v2185, %v2217
        %v2234 = vadd.f32 %v2186, %v2218
        %v2235 = vadd.f32 %v2187, %v2219
        %v2236 = vadd.f32 %v2188, %v2220
        %v2237 = vadd.f32 %v2189, %v2221
        %v2238 = vadd.f32 %v2190, %v2222
        %v2239 = vadd.f32 %v2191, %v2223
        %v2240 = vadd.f32 %v2224, %v1674
        %v2241 = vadd.f32 %v2225, %v1674
        %v2242 = vadd.f32 %v2226, %v1674
        %v2243 = vadd.f32 %v2227, %v1674
        %v2244 = vadd.f32 %v2228, %v1674
        %v2245 = vadd.f32 %v2229, %v1674
        %v2246 = vadd.f32 %v2230, %v1674
        %v2247 = vadd.f32 %v2231, %v1674
        %v2248 = vadd.f32 %v2232, %v1674
        %v2249 = vadd.f32 %v2233, %v1674
        %v2250 = vadd.f32 %v2234, %v1674
        %v2251 = vadd.f32 %v2235, %v1674
        %v2252 = vadd.f32 %v2236, %v1674
        %v2253 = vadd.f32 %v2237, %v1674
        %v2254 = vadd.f32 %v2238, %v1674
        %v2255 = vadd.f32 %v2239, %v1674
        %v2256 = vmax.f32 %v2240, 0.0
        %v2257 = vmax.f32 %v2241, 0.0
        %v2258 = vmax.f32 %v2242, 0.0
        %v2259 = vmax.f32 %v2243, 0.0
        %v2260 = vmax.f32 %v2244, 0.0
        %v2261 = vmax.f32 %v2245, 0.0
        %v2262 = vmax.f32 %v2246, 0.0
        %v2263 = vmax.f32 %v2247, 0.0
        %v2264 = vmax.f32 %v2248, 0.0
        %v2265 = vmax.f32 %v2249, 0.0
        %v2266 = vmax.f32 %v2250, 0.0
        %v2267 = vmax.f32 %v2251, 0.0
        %v2268 = vmax.f32 %v2252, 0.0
        %v2269 = vmax.f32 %v2253, 0.0
        %v2270 = vmax.f32 %v2254, 0.0
        %v2271 = vmax.f32 %v2255, 0.0
        %v2272 = vmin.f32 %v2256, 6.0
        %v2273 = vmin.f32 %v2257, 6.0
        %v2274 = vmin.f32 %v2258, 6.0
        %v2275 = vmin.f32 %v2259, 6.0
        %v2276 = vmin.f32 %v2260, 6.0
        %v2277 = vmin.f32 %v2261, 6.0
        %v2278 = vmin.f32 %v2262, 6.0
        %v2279 = vmin.f32 %v2263, 6.0
        %v2280 = vmin.f32 %v2264, 6.0
        %v2281 = vmin.f32 %v2265, 6.0
        %v2282 = vmin.f32 %v2266, 6.0
        %v2283 = vmin.f32 %v2267, 6.0
        %v2284 = vmin.f32 %v2268, 6.0
        %v2285 = vmin.f32 %v2269, 6.0
        %v2286 = vmin.f32 %v2270, 6.0
        %v2287 = vmin.f32 %v2271, 6.0
        %2288 = vmatpush.msra.mxu0 %v1229
        %2289 = vmatpush.msra.mxu0 %v1228
        %2290 = vmatpush.msra.mxu0 %v1227
        %2291 = vmatpush.msra.mxu0 %v1226
        %2292 = vmatpush.msra.mxu0 %v1225
        %2293 = vmatpush.msra.mxu0 %v1224
        %2294 = vmatpush.msra.mxu0 %v1223
        %2295 = vmatpush.msra.mxu0 %v1222
        %2296 = vmatpush.msra.mxu0 %v1221
        %2297 = vmatpush.msra.mxu0 %v1220
        %2298 = vmatpush.msra.mxu0 %v1219
        %2299 = vmatpush.msra.mxu0 %v1218
        %2300 = vmatpush.msra.mxu0 %v1217
        %2301 = vmatpush.msra.mxu0 %v1216
        %2302 = vmatpush.msra.mxu0 %v1215
        %2303 = vmatpush.msra.mxu0 %v1214
        %2304 = vmatmul.f32.gmra.mxu0 %v2272
        %v2305 = vpop.f32.mrf.mxu0
        %v2306 = vadd.f32 0.0, %v2305
        %2307 = vmatmul.f32.gmra.mxu0 %v2273
        %v2308 = vpop.f32.mrf.mxu0
        %v2309 = vadd.f32 0.0, %v2308
        %2310 = vmatmul.f32.gmra.mxu0 %v2274
        %v2311 = vpop.f32.mrf.mxu0
        %v2312 = vadd.f32 0.0, %v2311
        %2313 = vmatmul.f32.gmra.mxu0 %v2275
        %v2314 = vpop.f32.mrf.mxu0
        %v2315 = vadd.f32 0.0, %v2314
        %2316 = vmatmul.f32.gmra.mxu0 %v2276
        %v2317 = vpop.f32.mrf.mxu0
        %v2318 = vadd.f32 0.0, %v2317
        %2319 = vmatmul.f32.gmra.mxu0 %v2277
        %v2320 = vpop.f32.mrf.mxu0
        %v2321 = vadd.f32 0.0, %v2320
        %2322 = vmatmul.f32.gmra.mxu0 %v2278
        %v2323 = vpop.f32.mrf.mxu0
        %v2324 = vadd.f32 0.0, %v2323
        %2325 = vmatmul.f32.gmra.mxu0 %v2279
        %v2326 = vpop.f32.mrf.mxu0
        %v2327 = vadd.f32 0.0, %v2326
        %2328 = vmatmul.f32.gmra.mxu0 %v2280
        %v2329 = vpop.f32.mrf.mxu0
        %v2330 = vadd.f32 0.0, %v2329
        %2331 = vmatmul.f32.gmra.mxu0 %v2281
        %v2332 = vpop.f32.mrf.mxu0
        %v2333 = vadd.f32 0.0, %v2332
        %2334 = vmatmul.f32.gmra.mxu0 %v2282
        %v2335 = vpop.f32.mrf.mxu0
        %v2336 = vadd.f32 0.0, %v2335
        %2337 = vmatmul.f32.gmra.mxu0 %v2283
        %v2338 = vpop.f32.mrf.mxu0
        %v2339 = vadd.f32 0.0, %v2338
        %2340 = vmatmul.f32.gmra.mxu0 %v2284
        %v2341 = vpop.f32.mrf.mxu0
        %v2342 = vadd.f32 0.0, %v2341
        %2343 = vmatmul.f32.gmra.mxu0 %v2285
        %v2344 = vpop.f32.mrf.mxu0
        %v2345 = vadd.f32 0.0, %v2344
        %2346 = vmatmul.f32.gmra.mxu0 %v2286
        %v2347 = vpop.f32.mrf.mxu0
        %v2348 = vadd.f32 0.0, %v2347
        %2349 = vmatmul.f32.gmra.mxu0 %v2287
        %v2350 = vpop.f32.mrf.mxu0
        %v2351 = vadd.f32 0.0, %v2350
        %2352 = vdwg.mxu0
        %2353 = vst [vmem:[#allocation3 + $0x80] sm:$0xff] %v2306
        %2354 = vst [vmem:[#allocation3 + $0x88] sm:$0xff] %v2309
        %2355 = vst [vmem:[#allocation3 + $0x90] sm:$0xff] %v2312
        %2356 = vst [vmem:[#allocation3 + $0x98] sm:$0xff] %v2315
        %2357 = vst [vmem:[#allocation3 + $0xa0] sm:$0xff] %v2318
        %2358 = vst [vmem:[#allocation3 + $0xa8] sm:$0xff] %v2321
        %2359 = vst [vmem:[#allocation3 + $0xb0] sm:$0xff] %v2324
        %2360 = vst [vmem:[#allocation3 + $0xb8] sm:$0xff] %v2327
        %2361 = vst [vmem:[#allocation3 + $0xc0] sm:$0xff] %v2330
        %2362 = vst [vmem:[#allocation3 + $0xc8] sm:$0xff] %v2333
        %2363 = vst [vmem:[#allocation3 + $0xd0] sm:$0xff] %v2336
        %2364 = vst [vmem:[#allocation3 + $0xd8] sm:$0xff] %v2339
        %2365 = vst [vmem:[#allocation3 + $0xe0] sm:$0xff] %v2342
        %2366 = vst [vmem:[#allocation3 + $0xe8] sm:$0xff] %v2345
        %2367 = vst [vmem:[#allocation3 + $0xf0] sm:$0xff] %v2348
        %2368 = vst [vmem:[#allocation3 + $0xf8] sm:$0xff] %v2351
        %vm2369 = vcmask 1046528
        %v2370 = vrot.slane %v298, 1
        %v2371 = vrot.slane %v299, 1
        %v2372 = vsel %vm2369, %v2370, %v2371
        %v2373 = vrot.slane %v300, 1
        %v2374 = vsel %vm2369, %v2371, %v2373
        %v2375 = vrot.slane %v301, 1
        %v2376 = vrot.slane %v302, 1
        %v2377 = vsel %vm2369, %v2375, %v2376
        %v2378 = vrot.slane %v303, 1
        %v2379 = vsel %vm2369, %v2376, %v2378
        %v2380 = vrot.slane %v304, 1
        %v2381 = vrot.slane %v305, 1
        %v2382 = vsel %vm2369, %v2380, %v2381
        %v2383 = vrot.slane %v306, 1
        %v2384 = vsel %vm2369, %v2381, %v2383
        %v2385 = vrot.slane %v307, 1
        %v2386 = vrot.slane %v308, 1
        %v2387 = vsel %vm2369, %v2385, %v2386
        %v2388 = vrot.slane %v309, 1
        %v2389 = vsel %vm2369, %v2386, %v2388
        %v2390 = vrot.slane %v310, 1
        %v2391 = vrot.slane %v311, 1
        %v2392 = vsel %vm2369, %v2390, %v2391
        %v2393 = vrot.slane %v312, 1
        %v2394 = vsel %vm2369, %v2391, %v2393
        %v2395 = vrot.slane %v313, 1
        %v2396 = vrot.slane %v314, 1
        %v2397 = vsel %vm2369, %v2395, %v2396
        %v2398 = vrot.slane %v315, 1
        %v2399 = vsel %vm2369, %v2396, %v2398
        %v2400 = vrot.slane %v316, 1
        %v2401 = vrot.slane %v317, 1
        %v2402 = vsel %vm2369, %v2400, %v2401
        %v2403 = vrot.slane %v318, 1
        %v2404 = vsel %vm2369, %v2401, %v2403
        %v2405 = vrot.slane %v319, 1
        %v2406 = vrot.slane %v320, 1
        %v2407 = vsel %vm2369, %v2405, %v2406
        %v2408 = vrot.slane %v321, 1
        %v2409 = vsel %vm2369, %v2406, %v2408
        %v2410 = vrot.slane %v322, 1
        %v2411 = vrot.slane %v323, 1
        %v2412 = vsel %vm2369, %v2410, %v2411
        %v2413 = vrot.slane %v324, 1
        %v2414 = vsel %vm2369, %v2411, %v2413
        %v2415 = vrot.slane %v325, 1
        %v2416 = vrot.slane %v326, 1
        %v2417 = vsel %vm2369, %v2415, %v2416
        %v2418 = vrot.slane %v327, 1
        %v2419 = vsel %vm2369, %v2416, %v2418
        %v2420 = vrot.slane %v328, 1
        %v2421 = vrot.slane %v329, 1
        %v2422 = vsel %vm2369, %v2420, %v2421
        %v2423 = vrot.slane %v330, 1
        %v2424 = vsel %vm2369, %v2421, %v2423
        %v2425 = vrot.slane %v331, 1
        %v2426 = vrot.slane %v332, 1
        %v2427 = vsel %vm2369, %v2425, %v2426
        %v2428 = vrot.slane %v333, 1
        %v2429 = vsel %vm2369, %v2426, %v2428
        %v2430 = vrot.slane %v334, 1
        %v2431 = vrot.slane %v335, 1
        %v2432 = vsel %vm2369, %v2430, %v2431
        %v2433 = vrot.slane %v336, 1
        %v2434 = vsel %vm2369, %v2431, %v2433
        %v2435 = vrot.slane %v337, 1
        %v2436 = vrot.slane %v338, 1
        %v2437 = vsel %vm2369, %v2435, %v2436
        %v2438 = vrot.slane %v339, 1
        %v2439 = vsel %vm2369, %v2436, %v2438
        %v2440 = vrot.slane %v340, 1
        %v2441 = vrot.slane %v341, 1
        %v2442 = vsel %vm2369, %v2440, %v2441
        %v2443 = vrot.slane %v342, 1
        %v2444 = vsel %vm2369, %v2441, %v2443
        %v2445 = vrot.slane %v343, 1
        %v2446 = vrot.slane %v344, 1
        %v2447 = vsel %vm2369, %v2445, %v2446
        %v2448 = vrot.slane %v345, 1
        %v2449 = vsel %vm2369, %v2446, %v2448
        %v2482 = vld [vmem:[#allocation3] sm:$0xff]
        %v2483 = vld [vmem:[#allocation3 + $0x8] sm:$0xff]
        %v2484 = vld [vmem:[#allocation3 + $0x10] sm:$0xff]
        %v2485 = vld [vmem:[#allocation3 + $0x18] sm:$0xff]
        %v2486 = vld [vmem:[#allocation3 + $0x20] sm:$0xff]
        %v2487 = vld [vmem:[#allocation3 + $0x28] sm:$0xff]
        %v2488 = vld [vmem:[#allocation3 + $0x30] sm:$0xff]
        %v2489 = vld [vmem:[#allocation3 + $0x38] sm:$0xff]
        %v2490 = vld [vmem:[#allocation3 + $0x40] sm:$0xff]
        %v2491 = vld [vmem:[#allocation3 + $0x48] sm:$0xff]
        %v2492 = vld [vmem:[#allocation3 + $0x50] sm:$0xff]
        %v2493 = vld [vmem:[#allocation3 + $0x58] sm:$0xff]
        %v2494 = vld [vmem:[#allocation3 + $0x60] sm:$0xff]
        %v2495 = vld [vmem:[#allocation3 + $0x68] sm:$0xff]
        %v2496 = vld [vmem:[#allocation3 + $0x70] sm:$0xff]
        %v2497 = vld [vmem:[#allocation3 + $0x78] sm:$0xff]
        %v2498 = vld [vmem:[#allocation3 + $0x80] sm:$0xff]
        %v2499 = vld [vmem:[#allocation3 + $0x88] sm:$0xff]
        %v2500 = vld [vmem:[#allocation3 + $0x90] sm:$0xff]
        %v2501 = vld [vmem:[#allocation3 + $0x98] sm:$0xff]
        %v2502 = vld [vmem:[#allocation3 + $0xa0] sm:$0xff]
        %v2503 = vld [vmem:[#allocation3 + $0xa8] sm:$0xff]
        %v2504 = vld [vmem:[#allocation3 + $0xb0] sm:$0xff]
        %v2505 = vld [vmem:[#allocation3 + $0xb8] sm:$0xff]
        %v2506 = vld [vmem:[#allocation3 + $0xc0] sm:$0xff]
        %v2507 = vld [vmem:[#allocation3 + $0xc8] sm:$0xff]
        %v2508 = vld [vmem:[#allocation3 + $0xd0] sm:$0xff]
        %v2509 = vld [vmem:[#allocation3 + $0xd8] sm:$0xff]
        %v2510 = vld [vmem:[#allocation3 + $0xe0] sm:$0xff]
        %v2511 = vld [vmem:[#allocation3 + $0xe8] sm:$0xff]
        %v2512 = vld [vmem:[#allocation3 + $0xf0] sm:$0xff]
        %v2513 = vld [vmem:[#allocation3 + $0xf8] sm:$0xff]
        %v2514 = vadd.f32 %v2482, %v2372
        %v2515 = vadd.f32 %v2483, %v2374
        %v2516 = vadd.f32 %v2484, %v2377
        %v2517 = vadd.f32 %v2485, %v2379
        %v2518 = vadd.f32 %v2486, %v2382
        %v2519 = vadd.f32 %v2487, %v2384
        %v2520 = vadd.f32 %v2488, %v2387
        %v2521 = vadd.f32 %v2489, %v2389
        %v2522 = vadd.f32 %v2490, %v2392
        %v2523 = vadd.f32 %v2491, %v2394
        %v2524 = vadd.f32 %v2492, %v2397
        %v2525 = vadd.f32 %v2493, %v2399
        %v2526 = vadd.f32 %v2494, %v2402
        %v2527 = vadd.f32 %v2495, %v2404
        %v2528 = vadd.f32 %v2496, %v2407
        %v2529 = vadd.f32 %v2497, %v2409
        %v2530 = vadd.f32 %v2498, %v2412
        %v2531 = vadd.f32 %v2499, %v2414
        %v2532 = vadd.f32 %v2500, %v2417
        %v2533 = vadd.f32 %v2501, %v2419
        %v2534 = vadd.f32 %v2502, %v2422
        %v2535 = vadd.f32 %v2503, %v2424
        %v2536 = vadd.f32 %v2504, %v2427
        %v2537 = vadd.f32 %v2505, %v2429
        %v2538 = vadd.f32 %v2506, %v2432
        %v2539 = vadd.f32 %v2507, %v2434
        %v2540 = vadd.f32 %v2508, %v2437
        %v2541 = vadd.f32 %v2509, %v2439
        %v2542 = vadd.f32 %v2510, %v2442
        %v2543 = vadd.f32 %v2511, %v2444
        %v2544 = vadd.f32 %v2512, %v2447
        %v2545 = vadd.f32 %v2513, %v2449
        %2546 = vst.msk [vmem:[#allocation3] sm:$0xff] %vm545, %v2514
        %2547 = vst.msk [vmem:[#allocation3 + $0x8] sm:$0xff] %vm545, %v2515
        %2548 = vst.msk [vmem:[#allocation3 + $0x10] sm:$0xff] %vm545, %v2516
        %2549 = vst.msk [vmem:[#allocation3 + $0x18] sm:$0xff] %vm545, %v2517
        %2550 = vst.msk [vmem:[#allocation3 + $0x20] sm:$0xff] %vm545, %v2518
        %2551 = vst.msk [vmem:[#allocation3 + $0x28] sm:$0xff] %vm545, %v2519
        %2552 = vst.msk [vmem:[#allocation3 + $0x30] sm:$0xff] %vm545, %v2520
        %2553 = vst.msk [vmem:[#allocation3 + $0x38] sm:$0xff] %vm545, %v2521
        %2554 = vst.msk [vmem:[#allocation3 + $0x40] sm:$0xff] %vm545, %v2522
        %2555 = vst.msk [vmem:[#allocation3 + $0x48] sm:$0xff] %vm545, %v2523
        %2556 = vst.msk [vmem:[#allocation3 + $0x50] sm:$0xff] %vm545, %v2524
        %2557 = vst.msk [vmem:[#allocation3 + $0x58] sm:$0xff] %vm545, %v2525
        %2558 = vst.msk [vmem:[#allocation3 + $0x60] sm:$0xff] %vm545, %v2526
        %2559 = vst.msk [vmem:[#allocation3 + $0x68] sm:$0xff] %vm545, %v2527
        %2560 = vst.msk [vmem:[#allocation3 + $0x70] sm:$0xff] %vm545, %v2528
        %2561 = vst.msk [vmem:[#allocation3 + $0x78] sm:$0xff] %vm545, %v2529
        %2562 = vst.msk [vmem:[#allocation3 + $0x80] sm:$0xff] %vm545, %v2530
        %2563 = vst.msk [vmem:[#allocation3 + $0x88] sm:$0xff] %vm545, %v2531
        %2564 = vst.msk [vmem:[#allocation3 + $0x90] sm:$0xff] %vm545, %v2532
        %2565 = vst.msk [vmem:[#allocation3 + $0x98] sm:$0xff] %vm545, %v2533
        %2566 = vst.msk [vmem:[#allocation3 + $0xa0] sm:$0xff] %vm545, %v2534
        %2567 = vst.msk [vmem:[#allocation3 + $0xa8] sm:$0xff] %vm545, %v2535
        %2568 = vst.msk [vmem:[#allocation3 + $0xb0] sm:$0xff] %vm545, %v2536
        %2569 = vst.msk [vmem:[#allocation3 + $0xb8] sm:$0xff] %vm545, %v2537
        %2570 = vst.msk [vmem:[#allocation3 + $0xc0] sm:$0xff] %vm545, %v2538
        %2571 = vst.msk [vmem:[#allocation3 + $0xc8] sm:$0xff] %vm545, %v2539
        %2572 = vst.msk [vmem:[#allocation3 + $0xd0] sm:$0xff] %vm545, %v2540
        %2573 = vst.msk [vmem:[#allocation3 + $0xd8] sm:$0xff] %vm545, %v2541
        %2574 = vst.msk [vmem:[#allocation3 + $0xe0] sm:$0xff] %vm545, %v2542
        %2575 = vst.msk [vmem:[#allocation3 + $0xe8] sm:$0xff] %vm545, %v2543
        %2576 = vst.msk [vmem:[#allocation3 + $0xf0] sm:$0xff] %vm545, %v2544
        %2577 = vst.msk [vmem:[#allocation3 + $0xf8] sm:$0xff] %vm545, %v2545
        %v2578 = vld [vmem:[#allocation3] sm:$0xff]
        %v2579 = vld [vmem:[#allocation3 + $0x8] sm:$0xff]
        %v2580 = vld [vmem:[#allocation3 + $0x10] sm:$0xff]
        %v2581 = vld [vmem:[#allocation3 + $0x18] sm:$0xff]
        %v2582 = vld [vmem:[#allocation3 + $0x20] sm:$0xff]
        %v2583 = vld [vmem:[#allocation3 + $0x28] sm:$0xff]
        %v2584 = vld [vmem:[#allocation3 + $0x30] sm:$0xff]
        %v2585 = vld [vmem:[#allocation3 + $0x38] sm:$0xff]
        %v2586 = vld [vmem:[#allocation3 + $0x40] sm:$0xff]
        %v2587 = vld [vmem:[#allocation3 + $0x48] sm:$0xff]
        %v2588 = vld [vmem:[#allocation3 + $0x50] sm:$0xff]
        %v2589 = vld [vmem:[#allocation3 + $0x58] sm:$0xff]
        %v2590 = vld [vmem:[#allocation3 + $0x60] sm:$0xff]
        %v2591 = vld [vmem:[#allocation3 + $0x68] sm:$0xff]
        %v2592 = vld [vmem:[#allocation3 + $0x70] sm:$0xff]
        %v2593 = vld [vmem:[#allocation3 + $0x78] sm:$0xff]
        %v2594 = vld [vmem:[#allocation3 + $0x80] sm:$0xff]
        %v2595 = vld [vmem:[#allocation3 + $0x88] sm:$0xff]
        %v2596 = vld [vmem:[#allocation3 + $0x90] sm:$0xff]
        %v2597 = vld [vmem:[#allocation3 + $0x98] sm:$0xff]
        %v2598 = vld [vmem:[#allocation3 + $0xa0] sm:$0xff]
        %v2599 = vld [vmem:[#allocation3 + $0xa8] sm:$0xff]
        %v2600 = vld [vmem:[#allocation3 + $0xb0] sm:$0xff]
        %v2601 = vld [vmem:[#allocation3 + $0xb8] sm:$0xff]
        %v2602 = vld [vmem:[#allocation3 + $0xc0] sm:$0xff]
        %v2603 = vld [vmem:[#allocation3 + $0xc8] sm:$0xff]
        %v2604 = vld [vmem:[#allocation3 + $0xd0] sm:$0xff]
        %v2605 = vld [vmem:[#allocation3 + $0xd8] sm:$0xff]
        %v2606 = vld [vmem:[#allocation3 + $0xe0] sm:$0xff]
        %v2607 = vld [vmem:[#allocation3 + $0xe8] sm:$0xff]
        %v2608 = vld [vmem:[#allocation3 + $0xf0] sm:$0xff]
        %v2609 = vld [vmem:[#allocation3 + $0xf8] sm:$0xff]
        %v2610 = vld [vmem:[%s6] sm:$0x1]
        %v2612 = vperm.slane %v2610, 0
        %v2614 = vadd.f32 %v2578, %v2612
        %v2615 = vadd.f32 %v2579, %v2612
        %v2616 = vadd.f32 %v2580, %v2612
        %v2617 = vadd.f32 %v2581, %v2612
        %v2618 = vadd.f32 %v2582, %v2612
        %v2619 = vadd.f32 %v2583, %v2612
        %v2620 = vadd.f32 %v2584, %v2612
        %v2621 = vadd.f32 %v2585, %v2612
        %v2622 = vadd.f32 %v2586, %v2612
        %v2623 = vadd.f32 %v2587, %v2612
        %v2624 = vadd.f32 %v2588, %v2612
        %v2625 = vadd.f32 %v2589, %v2612
        %v2626 = vadd.f32 %v2590, %v2612
        %v2627 = vadd.f32 %v2591, %v2612
        %v2628 = vadd.f32 %v2592, %v2612
        %v2629 = vadd.f32 %v2593, %v2612
        %v2630 = vadd.f32 %v2594, %v2612
        %v2631 = vadd.f32 %v2595, %v2612
        %v2632 = vadd.f32 %v2596, %v2612
        %v2633 = vadd.f32 %v2597, %v2612
        %v2634 = vadd.f32 %v2598, %v2612
        %v2635 = vadd.f32 %v2599, %v2612
        %v2636 = vadd.f32 %v2600, %v2612
        %v2637 = vadd.f32 %v2601, %v2612
        %v2638 = vadd.f32 %v2602, %v2612
        %v2639 = vadd.f32 %v2603, %v2612
        %v2640 = vadd.f32 %v2604, %v2612
        %v2641 = vadd.f32 %v2605, %v2612
        %v2642 = vadd.f32 %v2606, %v2612
        %v2643 = vadd.f32 %v2607, %v2612
        %v2644 = vadd.f32 %v2608, %v2612
        %v2645 = vadd.f32 %v2609, %v2612
        %2646 = vst [vmem:[%s285] sm:$0xff] %v2614
        %2647 = vst [vmem:[%s285 + $0x8] sm:$0xff] %v2615
        %2648 = vst [vmem:[%s285 + $0x10] sm:$0xff] %v2616
        %2649 = vst [vmem:[%s285 + $0x18] sm:$0xff] %v2617
        %2650 = vst [vmem:[%s285 + $0x20] sm:$0xff] %v2618
        %2651 = vst [vmem:[%s285 + $0x28] sm:$0xff] %v2619
        %2652 = vst [vmem:[%s285 + $0x30] sm:$0xff] %v2620
        %2653 = vst [vmem:[%s285 + $0x38] sm:$0xff] %v2621
        %2654 = vst [vmem:[%s285 + $0x40] sm:$0xff] %v2622
        %2655 = vst [vmem:[%s285 + $0x48] sm:$0xff] %v2623
        %2656 = vst [vmem:[%s285 + $0x50] sm:$0xff] %v2624
        %2657 = vst [vmem:[%s285 + $0x58] sm:$0xff] %v2625
        %2658 = vst [vmem:[%s285 + $0x60] sm:$0xff] %v2626
        %2659 = vst [vmem:[%s285 + $0x68] sm:$0xff] %v2627
        %2660 = vst [vmem:[%s285 + $0x70] sm:$0xff] %v2628
        %2661 = vst [vmem:[%s285 + $0x78] sm:$0xff] %v2629
        %2662 = vst [vmem:[%s285 + $0x80] sm:$0xff] %v2630
        %2663 = vst [vmem:[%s285 + $0x88] sm:$0xff] %v2631
        %2664 = vst [vmem:[%s285 + $0x90] sm:$0xff] %v2632
        %2665 = vst [vmem:[%s285 + $0x98] sm:$0xff] %v2633
        %2666 = vst [vmem:[%s285 + $0xa0] sm:$0xff] %v2634
        %2667 = vst [vmem:[%s285 + $0xa8] sm:$0xff] %v2635
        %2668 = vst [vmem:[%s285 + $0xb0] sm:$0xff] %v2636
        %2669 = vst [vmem:[%s285 + $0xb8] sm:$0xff] %v2637
        %2670 = vst [vmem:[%s285 + $0xc0] sm:$0xff] %v2638
        %2671 = vst [vmem:[%s285 + $0xc8] sm:$0xff] %v2639
        %2672 = vst [vmem:[%s285 + $0xd0] sm:$0xff] %v2640
        %2673 = vst [vmem:[%s285 + $0xd8] sm:$0xff] %v2641
        %2674 = vst [vmem:[%s285 + $0xe0] sm:$0xff] %v2642
        %2675 = vst [vmem:[%s285 + $0xe8] sm:$0xff] %v2643
        %2676 = vst [vmem:[%s285 + $0xf0] sm:$0xff] %v2644
        %2677 = vst [vmem:[%s285 + $0xf8] sm:$0xff] %v2645
        %s2678 = sand.u32 %s195, 1
        %s2679 = scalar_lea.sflag [#allocation5], %s2678
        %s2680 = sand.u32 %s195, 1
        %s2681 = smul.addr %s2680, 256
        %s2682 = scalar_lea.vmem [#allocation4], %s2681
        // Predicated region
        $region49: #{tpu_custom_call.1} parent=47 // pred_check
          %p2683 = pneg %p205
        $region50: #{tpu_custom_call.1} parent=47 // pred_check_branch
          %2685 = sbr.rel (%p2683) target = $region52
        $region51: #{tpu_custom_call.1} parent=47 // pred_region
          %s2686 = smul.u32 16, %s26
          %2688 = vsyncadd %s2679, 0
          %s2689 = smul.addr %s2686, 2
          %s2690 = smul.addr %s25, 32
          %s2691 = sadd.s32 %s2689, %s2690
          %s2692 = smul.addr %s2691, 8
          %s2693 = scalar_lea.hbm %s7, %s2692
          %s2694 = sshll.u32 %s2682, 4
          %s2695 = int_to_ptr.vmem [resolvable:$true] %s2694
          %s2696 = sshll.u32 %s2693, 4
          %s2697 = int_to_ptr.hbm [resolvable:$true] %s2696
          %2702 = dma.vmem_to_hbm [thread:$0]  %s2695, 4096, %s2697, %s2679, 128, 128, 8
        $region52: #{tpu_custom_call.1} parent=47 // pred_fallthru
          _
      $region48: #{tpu_custom_call.1} parent=5 // pred_fallthru
        _
      %p2703 = scmp.le.s32.totalorder 2, %s16
      // Predicated region
      $region53: #{tpu_custom_call.1} parent=5 // pred_check
        %p2704 = pneg %p2703
      $region54: #{tpu_custom_call.1} parent=5 // pred_check_branch
        %2706 = sbr.rel (%p2704) target = $region56
      $region55: #{tpu_custom_call.1} parent=5 // pred_region
        %s2707 = ssub.s32 %s16, 2
        // Predicated region
        $region57: #{tpu_custom_call.1} parent=55 // pred_check
          %p2708 = pneg %p211
        $region58: #{tpu_custom_call.1} parent=55 // pred_check_branch
          %2710 = sbr.rel (%p2708) target = $region60
        $region59: #{tpu_custom_call.1} parent=55 // pred_region
          %s2711 = sand.u32 %s196, 1
          %s2712 = scalar_lea.sflag [#allocation5], %s2711
          %s2713 = sand.u32 %s196, 1
          %s2714 = smul.addr %s2713, 256
          %s2715 = scalar_lea.vmem [#allocation4], %s2714
          %2717 = dma.done %s2712, 4096
        $region60: #{tpu_custom_call.1} parent=55 // pred_fallthru
          _
      $region56: #{tpu_custom_call.1} parent=5 // pred_fallthru
        _
    $region6: #{tpu_custom_call.1} parent=1 // loop_footer
      %s20 = sadd.s32 1, %s16
    $region7: #{tpu_custom_call.1} parent=1 // loop_footer_branch
      %15 = sbr.rel target = $region3
    $region8: #{tpu_custom_call.1} parent=1 // loop_exit
      _
    %2718 = vsyncpa [#allocation5], 1
    %s2719 = scalar_lea.sflag [#allocation5], 1
    %2720 = vsyncpa %s2719, 1

</llo_original>
